<compile_context>
chip_gen: v6e
topology: v6e:2x2x1
jax: 0.10.0
libtpu: 0.0.40
codegen_flags: <defaults>
</compile_context>

<pallas_src>
import jax
import jax.numpy as jnp
from jax.experimental import pallas as pl
from jax.experimental.pallas import tpu as pltpu

IN_DIM = 2048 + 2560   # fixed by the module definition (4608)
LN_EPS = 1e-5          # nn.LayerNorm default


def _round_up(n, m):
    return (n + m - 1) // m * m


def _layernorm(h, gamma, beta):
    # Cross-lane mean/var go to the XLU, rsqrt to the EUP -> essentially free
    # next to the MXU work; keep as-is (f32 math on the f32 dot output).
    mean = jnp.mean(h, axis=-1, keepdims=True)
    centered = h - mean
    var = jnp.mean(centered * centered, axis=-1, keepdims=True)
    inv = jax.lax.rsqrt(var + LN_EPS)
    return centered * inv * gamma + beta


def layernormnet3_kernel(x_ref,
                         w1_ref, b1_ref, g1_ref, be1_ref,
                         w2_ref, b2_ref, g2_ref, be2_ref,
                         w3_ref, b3_ref,
                         o_ref):
    x = x_ref[...]                                   # (bm, IN_DIM) bf16

    # fc1 + ln1 + (dropout=identity) + relu  -- f32 accumulation on the MXU.
    h = jnp.dot(x, w1_ref[...], preferred_element_type=jnp.float32) + b1_ref[...]
    h = _layernorm(h, g1_ref[...], be1_ref[...])
    # TODO(synk): dropout implemented as identity (eval mode); training-mode
    # dropout would use pltpu.prng_random_bits with 1/(1-p) scaling.
    h = jnp.maximum(h, 0.0)

    # fc2 + ln2 + (dropout=identity) + relu  -- cast back to bf16 for the MXU.
    h = h.astype(w2_ref.dtype)
    h = jnp.dot(h, w2_ref[...], preferred_element_type=jnp.float32) + b2_ref[...]
    h = _layernorm(h, g2_ref[...], be2_ref[...])
    h = jnp.maximum(h, 0.0)

    # fc3 (output lane-padded to a multiple of 128 by the wrapper).
    h = h.astype(w3_ref.dtype)
    out = jnp.dot(h, w3_ref[...], preferred_element_type=jnp.float32) + b3_ref[...]
    o_ref[...] = out.astype(o_ref.dtype)


def layernormnet3_forward(x, params, *, block_m=256,
                          compute_dtype=jnp.bfloat16, out_dtype=jnp.float32):
    B, D = x.shape
    assert D == IN_DIM
    assert block_m % 128 == 0 and block_m > 0
    H = params["w1"].shape[1]
    O = params["w3"].shape[1]

    # --- batch tiling: pad B up instead of asserting divisibility ----------
    bm = min(block_m, _round_up(B, 128))       # 128-row granularity (MXU rows)
    B_pad = _round_up(B, bm)
    x_p = x
    if B_pad != B:
        x_p = jnp.pad(x_p, ((0, B_pad - B), (0, 0)))
    x_p = x_p.astype(compute_dtype)

    # --- lane-dense fc3 output: pad O up to a multiple of 128 --------------
    O_pad = _round_up(O, 128)

    # Weights in bf16 (MXU fast path, half the HBM traffic); biases / LN
    # params stay f32 (tiny, and LN math is f32).
    w1 = params["w1"].astype(compute_dtype)
    w2 = params["w2"].astype(compute_dtype)
    w3 = params["w3"].astype(compute_dtype)
    b1 = params["b1"].astype(jnp.float32)
    g1 = params["g1"].astype(jnp.float32)
    be1 = params["be1"].astype(jnp.float32)
    b2 = params["b2"].astype(jnp.float32)
    g2 = params["g2"].astype(jnp.float32)
    be2 = params["be2"].astype(jnp.float32)
    b3 = params["b3"].astype(jnp.float32)
    if O_pad != O:
        w3 = jnp.pad(w3, ((0, 0), (0, O_pad - O)))
        b3 = jnp.pad(b3, ((0, 0), (0, O_pad - O)))

    grid = (B_pad // bm,)

    def row_map(i):
        return (i, 0)

    def rep_map(i):
        return (0, 0)

    # NOTE: the weight/bias/LN-param specs have a constant index_map, so their
    # tiles are only re-fetched when the block index changes.  On very large
    # hidden dims their second (double) buffer could additionally be dropped
    # with pipeline_mode=pl.Buffered(1); left at the default here for
    # portability across JAX versions.
    in_specs = [
        pl.BlockSpec((bm, IN_DIM), row_map),          # x
        pl.BlockSpec((IN_DIM, H), rep_map),           # w1
        pl.BlockSpec((1, H), rep_map),                # b1
        pl.BlockSpec((1, H), rep_map),                # gamma1
        pl.BlockSpec((1, H), rep_map),                # beta1
        pl.BlockSpec((H, H), rep_map),                # w2
        pl.BlockSpec((1, H), rep_map),                # b2
        pl.BlockSpec((1, H), rep_map),                # gamma2
        pl.BlockSpec((1, H), rep_map),                # beta2
        pl.BlockSpec((H, O_pad), rep_map),            # w3 (lane-padded)
        pl.BlockSpec((1, O_pad), rep_map),            # b3 (lane-padded)
    ]
    out_spec = pl.BlockSpec((bm, O_pad), row_map)

    # --- VMEM budget: raise the scoped limit, but clamp so it is safe on
    # v5e (16 MiB default scoped) and on v7x (64 MiB physical). -------------
    cbytes = jnp.dtype(compute_dtype).itemsize
    vmem_est = (
        2 * bm * IN_DIM * cbytes                       # x, double-buffered
        + 2 * bm * O_pad * 4                           # out, double-buffered
        + 2 * (IN_DIM * H + H * H + H * O_pad) * cbytes  # weights
        + 2 * 7 * max(H, O_pad) * 4                    # bias / LN vectors
        + 4 * bm * H * 4                               # f32 intermediates
    )
    vmem_limit = int(min(60 * 1024 * 1024,
                         max(32 * 1024 * 1024, int(vmem_est * 1.5))))

    flops = 2 * B_pad * (IN_DIM * H + H * H + H * O_pad) + 12 * B_pad * H
    bytes_accessed = (
        B_pad * IN_DIM * cbytes
        + (IN_DIM * H + H * H + H * O_pad) * cbytes
        + 7 * max(H, O_pad) * 4
        + B_pad * O_pad * jnp.dtype(out_dtype).itemsize
    )
    cost = pl.CostEstimate(flops=int(flops),
                           transcendentals=int(2 * B_pad),
                           bytes_accessed=int(bytes_accessed))

    out_padded = pl.pallas_call(
        layernormnet3_kernel,
        out_shape=jax.ShapeDtypeStruct((B_pad, O_pad), out_dtype),
        grid_spec=pltpu.PrefetchScalarGridSpec(
            num_scalar_prefetch=0,
            grid=grid,
            in_specs=in_specs,
            out_specs=out_spec,
        ),
        compiler_params=pltpu.CompilerParams(
            dimension_semantics=("parallel",),
            vmem_limit_bytes=vmem_limit,
        ),
        cost_estimate=cost,
    )(x_p, w1, b1, g1, be1, w2, b2, g2, be2, w3, b3)

    return out_padded[:B, :O]


def init_params(key, hidden_dim, out_dim,
                weight_dtype=jnp.bfloat16, vec_dtype=jnp.float32):
    """Deterministic synthetic parameters (shapes match the PyTorch module)."""
    ks = jax.random.split(key, 6)
    s1 = 1.0 / float(IN_DIM) ** 0.5
    s2 = 1.0 / float(hidden_dim) ** 0.5

    def u(k, shape, s, dt):
        return jax.random.uniform(k, shape, jnp.float32, -s, s).astype(dt)

    return {
        "w1": u(ks[0], (IN_DIM, hidden_dim), s1, weight_dtype),
        "b1": u(ks[1], (1, hidden_dim), s1, vec_dtype),
        "g1": jnp.ones((1, hidden_dim), vec_dtype),
        "be1": jnp.zeros((1, hidden_dim), vec_dtype),
        "w2": u(ks[2], (hidden_dim, hidden_dim), s2, weight_dtype),
        "b2": u(ks[3], (1, hidden_dim), s2, vec_dtype),
        "g2": jnp.ones((1, hidden_dim), vec_dtype),
        "be2": jnp.zeros((1, hidden_dim), vec_dtype),
        "w3": u(ks[4], (hidden_dim, out_dim), s2, weight_dtype),
        "b3": u(ks[5], (1, out_dim), s2, vec_dtype),
    }


def reference_forward(x, p):
    """Pure-JAX reference mirroring the kernel's dtype flow (bf16 matmuls,
    f32 accumulation, f32 LayerNorm)."""
    def ln(h, g, b):
        m = jnp.mean(h, axis=-1, keepdims=True)
        v = jnp.mean(jnp.square(h - m), axis=-1, keepdims=True)
        return (h - m) * jax.lax.rsqrt(v + LN_EPS) * g + b

    h = jnp.dot(x.astype(p["w1"].dtype), p["w1"],
                preferred_element_type=jnp.float32) + p["b1"].astype(jnp.float32)
    h = jnp.maximum(ln(h, p["g1"], p["be1"]), 0.0).astype(p["w2"].dtype)
    h = jnp.dot(h, p["w2"], preferred_element_type=jnp.float32) + p["b2"].astype(jnp.float32)
    h = jnp.maximum(ln(h, p["g2"], p["be2"]), 0.0).astype(p["w3"].dtype)
    return jnp.dot(h, p["w3"], preferred_element_type=jnp.float32) + p["b3"].astype(jnp.float32)


if __name__ == "__main__":
    key = jax.random.PRNGKey(0)
    k_x, k_p = jax.random.split(key)

    batch = 200          # not a multiple of block_m -> exercises the padding path
    hidden_dim = 128
    out_dim = 64

    x = jax.random.normal(k_x, (batch, IN_DIM), jnp.float32).astype(jnp.bfloat16)
    params = init_params(k_p, hidden_dim, out_dim)

    # block_m=128 -> padded batch 256 -> 2 parallel grid steps (both v7x TCs busy).
    out = layernormnet3_forward(x, params, block_m=128)
    out = jax.block_until_ready(out)

    ref = reference_forward(x, params)
    assert out.shape == (batch, out_dim)
    max_err = float(jnp.max(jnp.abs(out - ref)))
    assert jnp.allclose(out, ref, rtol=2e-2, atol=2e-2), (
        f"mismatch vs reference (max abs err {max_err})")

    print("KERNEL_OK")
</pallas_src>

<mosaic_0001>
module attributes {stable_mosaic.version = 11 : i64} {
  func.func @layernormnet3_kernel(%arg0: i32, %arg1: memref<128x4608xbf16, #tpu.memory_space<vmem>>, %arg2: memref<4608x128xbf16, #tpu.memory_space<vmem>>, %arg3: memref<1x128xf32, #tpu.memory_space<vmem>>, %arg4: memref<1x128xf32, #tpu.memory_space<vmem>>, %arg5: memref<1x128xf32, #tpu.memory_space<vmem>>, %arg6: memref<128x128xbf16, #tpu.memory_space<vmem>>, %arg7: memref<1x128xf32, #tpu.memory_space<vmem>>, %arg8: memref<1x128xf32, #tpu.memory_space<vmem>>, %arg9: memref<1x128xf32, #tpu.memory_space<vmem>>, %arg10: memref<128x128xbf16, #tpu.memory_space<vmem>>, %arg11: memref<1x128xf32, #tpu.memory_space<vmem>>, %arg12: memref<128x128xf32, #tpu.memory_space<vmem>>) attributes {dimension_semantics = [#tpu.dimension_semantics<parallel>], iteration_bounds = array<i64: 2>, scalar_prefetch = 0 : i64, scratch_operands = 0 : i64, tpu.core_type = #tpu.core_type<tc>, window_params = [{transform_indices = @transform_0, window_bounds = array<i64: 128, 4608>}, {pipeline_mode = #tpu.pipeline_mode<synchronous>, transform_indices = @transform_1, window_bounds = array<i64: 4608, 128>}, {pipeline_mode = #tpu.pipeline_mode<synchronous>, transform_indices = @transform_2, window_bounds = array<i64: 1, 128>}, {pipeline_mode = #tpu.pipeline_mode<synchronous>, transform_indices = @transform_3, window_bounds = array<i64: 1, 128>}, {pipeline_mode = #tpu.pipeline_mode<synchronous>, transform_indices = @transform_4, window_bounds = array<i64: 1, 128>}, {pipeline_mode = #tpu.pipeline_mode<synchronous>, transform_indices = @transform_5, window_bounds = array<i64: 128, 128>}, {pipeline_mode = #tpu.pipeline_mode<synchronous>, transform_indices = @transform_6, window_bounds = array<i64: 1, 128>}, {pipeline_mode = #tpu.pipeline_mode<synchronous>, transform_indices = @transform_7, window_bounds = array<i64: 1, 128>}, {pipeline_mode = #tpu.pipeline_mode<synchronous>, transform_indices = @transform_8, window_bounds = array<i64: 1, 128>}, {pipeline_mode = #tpu.pipeline_mode<synchronous>, transform_indices = @transform_9, window_bounds = array<i64: 128, 128>}, {pipeline_mode = #tpu.pipeline_mode<synchronous>, transform_indices = @transform_10, window_bounds = array<i64: 1, 128>}, {transform_indices = @transform_11, window_bounds = array<i64: 128, 128>}]} {
    %c0 = arith.constant 0 : index
    %c0_0 = arith.constant 0 : index
    %0 = vector.load %arg1[%c0, %c0_0] : memref<128x4608xbf16, #tpu.memory_space<vmem>>, vector<128x4608xbf16>
    %c0_1 = arith.constant 0 : index
    %c0_2 = arith.constant 0 : index
    %1 = vector.load %arg2[%c0_1, %c0_2] : memref<4608x128xbf16, #tpu.memory_space<vmem>>, vector<4608x128xbf16>
    %cst = arith.constant dense<0.000000e+00> : vector<128x128xf32>
    %2 = tpu.matmul %0, %1, %cst {dimension_numbers = #tpu.dot_dimension_numbers<[1], [0], [0], [1], [0, 0, 1, 1], [], []>} : vector<128x4608xbf16>, vector<4608x128xbf16>, vector<128x128xf32> -> vector<128x128xf32>
    %c0_3 = arith.constant 0 : index
    %c0_4 = arith.constant 0 : index
    %3 = vector.load %arg3[%c0_3, %c0_4] : memref<1x128xf32, #tpu.memory_space<vmem>>, vector<1x128xf32>
    %4 = vector.broadcast %3 : vector<1x128xf32> to vector<128x128xf32>
    %5 = arith.addf %2, %4 : vector<128x128xf32>
    %c0_5 = arith.constant 0 : index
    %c0_6 = arith.constant 0 : index
    %6 = vector.load %arg4[%c0_5, %c0_6] : memref<1x128xf32, #tpu.memory_space<vmem>>, vector<1x128xf32>
    %c0_7 = arith.constant 0 : index
    %c0_8 = arith.constant 0 : index
    %7 = vector.load %arg5[%c0_7, %c0_8] : memref<1x128xf32, #tpu.memory_space<vmem>>, vector<1x128xf32>
    %cst_9 = arith.constant dense<0.000000e+00> : vector<128xf32>
    %8 = vector.multi_reduction <add>, %5, %cst_9 [1] : vector<128x128xf32> to vector<128xf32>
    %9 = vector.shape_cast %8 : vector<128xf32> to vector<128x1xf32>
    %cst_10 = arith.constant 1.280000e+02 : f32
    %10 = vector.broadcast %cst_10 : f32 to vector<128x1xf32>
    %11 = arith.divf %9, %10 : vector<128x1xf32>
    %12 = vector.broadcast %11 : vector<128x1xf32> to vector<128x128xf32>
    %13 = arith.subf %5, %12 : vector<128x128xf32>
    %14 = arith.mulf %13, %13 : vector<128x128xf32>
    %cst_11 = arith.constant dense<0.000000e+00> : vector<128xf32>
    %15 = vector.multi_reduction <add>, %14, %cst_11 [1] : vector<128x128xf32> to vector<128xf32>
    %16 = vector.shape_cast %15 : vector<128xf32> to vector<128x1xf32>
    %cst_12 = arith.constant 1.280000e+02 : f32
    %17 = vector.broadcast %cst_12 : f32 to vector<128x1xf32>
    %18 = arith.divf %16, %17 : vector<128x1xf32>
    %cst_13 = arith.constant 9.99999974E-6 : f32
    %19 = vector.broadcast %cst_13 : f32 to vector<128x1xf32>
    %20 = arith.addf %18, %19 : vector<128x1xf32>
    %21 = math.rsqrt %20 : vector<128x1xf32>
    %22 = vector.broadcast %21 : vector<128x1xf32> to vector<128x128xf32>
    %23 = arith.mulf %13, %22 : vector<128x128xf32>
    %24 = vector.broadcast %6 : vector<1x128xf32> to vector<128x128xf32>
    %25 = arith.mulf %23, %24 : vector<128x128xf32>
    %26 = vector.broadcast %7 : vector<1x128xf32> to vector<128x128xf32>
    %27 = arith.addf %25, %26 : vector<128x128xf32>
    %cst_14 = arith.constant 0.000000e+00 : f32
    %28 = vector.broadcast %cst_14 : f32 to vector<128x128xf32>
    %29 = arith.maximumf %27, %28 : vector<128x128xf32>
    %30 = arith.truncf %29 : vector<128x128xf32> to vector<128x128xbf16>
    %c0_15 = arith.constant 0 : index
    %c0_16 = arith.constant 0 : index
    %31 = vector.load %arg6[%c0_15, %c0_16] : memref<128x128xbf16, #tpu.memory_space<vmem>>, vector<128x128xbf16>
    %cst_17 = arith.constant dense<0.000000e+00> : vector<128x128xf32>
    %32 = tpu.matmul %30, %31, %cst_17 {dimension_numbers = #tpu.dot_dimension_numbers<[1], [0], [0], [1], [0, 0, 1, 1], [], []>} : vector<128x128xbf16>, vector<128x128xbf16>, vector<128x128xf32> -> vector<128x128xf32>
    %c0_18 = arith.constant 0 : index
    %c0_19 = arith.constant 0 : index
    %33 = vector.load %arg7[%c0_18, %c0_19] : memref<1x128xf32, #tpu.memory_space<vmem>>, vector<1x128xf32>
    %34 = vector.broadcast %33 : vector<1x128xf32> to vector<128x128xf32>
    %35 = arith.addf %32, %34 : vector<128x128xf32>
    %c0_20 = arith.constant 0 : index
    %c0_21 = arith.constant 0 : index
    %36 = vector.load %arg8[%c0_20, %c0_21] : memref<1x128xf32, #tpu.memory_space<vmem>>, vector<1x128xf32>
    %c0_22 = arith.constant 0 : index
    %c0_23 = arith.constant 0 : index
    %37 = vector.load %arg9[%c0_22, %c0_23] : memref<1x128xf32, #tpu.memory_space<vmem>>, vector<1x128xf32>
    %cst_24 = arith.constant dense<0.000000e+00> : vector<128xf32>
    %38 = vector.multi_reduction <add>, %35, %cst_24 [1] : vector<128x128xf32> to vector<128xf32>
    %39 = vector.shape_cast %38 : vector<128xf32> to vector<128x1xf32>
    %cst_25 = arith.constant 1.280000e+02 : f32
    %40 = vector.broadcast %cst_25 : f32 to vector<128x1xf32>
    %41 = arith.divf %39, %40 : vector<128x1xf32>
    %42 = vector.broadcast %41 : vector<128x1xf32> to vector<128x128xf32>
    %43 = arith.subf %35, %42 : vector<128x128xf32>
    %44 = arith.mulf %43, %43 : vector<128x128xf32>
    %cst_26 = arith.constant dense<0.000000e+00> : vector<128xf32>
    %45 = vector.multi_reduction <add>, %44, %cst_26 [1] : vector<128x128xf32> to vector<128xf32>
    %46 = vector.shape_cast %45 : vector<128xf32> to vector<128x1xf32>
    %cst_27 = arith.constant 1.280000e+02 : f32
    %47 = vector.broadcast %cst_27 : f32 to vector<128x1xf32>
    %48 = arith.divf %46, %47 : vector<128x1xf32>
    %cst_28 = arith.constant 9.99999974E-6 : f32
    %49 = vector.broadcast %cst_28 : f32 to vector<128x1xf32>
    %50 = arith.addf %48, %49 : vector<128x1xf32>
    %51 = math.rsqrt %50 : vector<128x1xf32>
    %52 = vector.broadcast %51 : vector<128x1xf32> to vector<128x128xf32>
    %53 = arith.mulf %43, %52 : vector<128x128xf32>
    %54 = vector.broadcast %36 : vector<1x128xf32> to vector<128x128xf32>
    %55 = arith.mulf %53, %54 : vector<128x128xf32>
    %56 = vector.broadcast %37 : vector<1x128xf32> to vector<128x128xf32>
    %57 = arith.addf %55, %56 : vector<128x128xf32>
    %cst_29 = arith.constant 0.000000e+00 : f32
    %58 = vector.broadcast %cst_29 : f32 to vector<128x128xf32>
    %59 = arith.maximumf %57, %58 : vector<128x128xf32>
    %60 = arith.truncf %59 : vector<128x128xf32> to vector<128x128xbf16>
    %c0_30 = arith.constant 0 : index
    %c0_31 = arith.constant 0 : index
    %61 = vector.load %arg10[%c0_30, %c0_31] : memref<128x128xbf16, #tpu.memory_space<vmem>>, vector<128x128xbf16>
    %cst_32 = arith.constant dense<0.000000e+00> : vector<128x128xf32>
    %62 = tpu.matmul %60, %61, %cst_32 {dimension_numbers = #tpu.dot_dimension_numbers<[1], [0], [0], [1], [0, 0, 1, 1], [], []>} : vector<128x128xbf16>, vector<128x128xbf16>, vector<128x128xf32> -> vector<128x128xf32>
    %c0_33 = arith.constant 0 : index
    %c0_34 = arith.constant 0 : index
    %63 = vector.load %arg11[%c0_33, %c0_34] : memref<1x128xf32, #tpu.memory_space<vmem>>, vector<1x128xf32>
    %64 = vector.broadcast %63 : vector<1x128xf32> to vector<128x128xf32>
    %65 = arith.addf %62, %64 : vector<128x128xf32>
    %c0_35 = arith.constant 0 : index
    %c0_36 = arith.constant 0 : index
    %66 = vector.load %arg12[%c0_35, %c0_36] : memref<128x128xf32, #tpu.memory_space<vmem>>, vector<128x128xf32>
    tpu.vector_store %arg12[%c0_35, %c0_36], %65 {strides = array<i32>} : memref<128x128xf32, #tpu.memory_space<vmem>>, vector<128x128xf32>,
    return
  }
  func.func @transform_0(%arg0: i32) -> (i32, i32) {
    %c0_i32 = arith.constant 0 : i32
    %c0_i32_0 = arith.constant 0 : i32
    return %arg0, %c0_i32 : i32, i32
  }
  func.func @transform_1(%arg0: i32) -> (i32, i32) {
    %c0_i32 = arith.constant 0 : i32
    %c0_i32_0 = arith.constant 0 : i32
    %c0_i32_1 = arith.constant 0 : i32
    return %c0_i32, %c0_i32_0 : i32, i32
  }
  func.func @transform_2(%arg0: i32) -> (i32, i32) {
    %c0_i32 = arith.constant 0 : i32
    %c0_i32_0 = arith.constant 0 : i32
    %c0_i32_1 = arith.constant 0 : i32
    return %c0_i32, %c0_i32_0 : i32, i32
  }
  func.func @transform_3(%arg0: i32) -> (i32, i32) {
    %c0_i32 = arith.constant 0 : i32
    %c0_i32_0 = arith.constant 0 : i32
    %c0_i32_1 = arith.constant 0 : i32
    return %c0_i32, %c0_i32_0 : i32, i32
  }
  func.func @transform_4(%arg0: i32) -> (i32, i32) {
    %c0_i32 = arith.constant 0 : i32
    %c0_i32_0 = arith.constant 0 : i32
    %c0_i32_1 = arith.constant 0 : i32
    return %c0_i32, %c0_i32_0 : i32, i32
  }
  func.func @transform_5(%arg0: i32) -> (i32, i32) {
    %c0_i32 = arith.constant 0 : i32
    %c0_i32_0 = arith.constant 0 : i32
    %c0_i32_1 = arith.constant 0 : i32
    return %c0_i32, %c0_i32_0 : i32, i32
  }
  func.func @transform_6(%arg0: i32) -> (i32, i32) {
    %c0_i32 = arith.constant 0 : i32
    %c0_i32_0 = arith.constant 0 : i32
    %c0_i32_1 = arith.constant 0 : i32
    return %c0_i32, %c0_i32_0 : i32, i32
  }
  func.func @transform_7(%arg0: i32) -> (i32, i32) {
    %c0_i32 = arith.constant 0 : i32
    %c0_i32_0 = arith.constant 0 : i32
    %c0_i32_1 = arith.constant 0 : i32
    return %c0_i32, %c0_i32_0 : i32, i32
  }
  func.func @transform_8(%arg0: i32) -> (i32, i32) {
    %c0_i32 = arith.constant 0 : i32
    %c0_i32_0 = arith.constant 0 : i32
    %c0_i32_1 = arith.constant 0 : i32
    return %c0_i32, %c0_i32_0 : i32, i32
  }
  func.func @transform_9(%arg0: i32) -> (i32, i32) {
    %c0_i32 = arith.constant 0 : i32
    %c0_i32_0 = arith.constant 0 : i32
    %c0_i32_1 = arith.constant 0 : i32
    return %c0_i32, %c0_i32_0 : i32, i32
  }
  func.func @transform_10(%arg0: i32) -> (i32, i32) {
    %c0_i32 = arith.constant 0 : i32
    %c0_i32_0 = arith.constant 0 : i32
    %c0_i32_1 = arith.constant 0 : i32
    return %c0_i32, %c0_i32_0 : i32, i32
  }
  func.func @transform_11(%arg0: i32) -> (i32, i32) {
    %c0_i32 = arith.constant 0 : i32
    %c0_i32_0 = arith.constant 0 : i32
    return %arg0, %c0_i32 : i32, i32
  }
}

</mosaic_0001>

<llo_original>
// kernel: tpu_custom_call.1
$region0: #{tpu_custom_call.1}
  #allocation0 [shape = 'u32[]', space=smem, size = 0x4, offset = 0x4, fixed_abs, tag = 'smem constant byte address 0x4 - core index']
  #allocation1 [shape = 'u32[144,128]{1,0:T(1,128)}', space=vmem, size = 0x12000, scoped, tag = 'internal scratch']
  %s0 = inlined_call_operand.hbm [shape: bf16[256,4608], index: 0, kind: input, shape index: {}]
  %s1 = inlined_call_operand.hbm [shape: bf16[4608,128], index: 1, kind: input, shape index: {}]
  %s2 = inlined_call_operand.hbm [shape: f32[1,128], index: 2, kind: input, shape index: {}]
  %s3 = inlined_call_operand.hbm [shape: f32[1,128], index: 3, kind: input, shape index: {}]
  %s4 = inlined_call_operand.hbm [shape: f32[1,128], index: 4, kind: input, shape index: {}]
  %s5 = inlined_call_operand.hbm [shape: bf16[128,128], index: 5, kind: input, shape index: {}]
  %s6 = inlined_call_operand.hbm [shape: f32[1,128], index: 6, kind: input, shape index: {}]
  %s7 = inlined_call_operand.hbm [shape: f32[1,128], index: 7, kind: input, shape index: {}]
  %s8 = inlined_call_operand.hbm [shape: f32[1,128], index: 8, kind: input, shape index: {}]
  %s9 = inlined_call_operand.hbm [shape: bf16[128,128], index: 9, kind: input, shape index: {}]
  %s10 = inlined_call_operand.hbm [shape: f32[1,128], index: 10, kind: input, shape index: {}]
  %s11 = inlined_call_operand.hbm [shape: f32[256,128], index: 11, kind: output, shape index: {}]
  %s12 = sld [smem:[#allocation0]]
  $region121: #{tpu_custom_call.1} parent=0
    _
  %s14 = ssub.s32 1, %s12
  %s15 = scalar_select 0, %s14, %s12
  $region1: #{tpu_custom_call.1} parent=0
    #allocation2 [shape = 'u8[2359296]{0}', space=vmem, size = 0x240000, scoped, tag = 'input window, operand 0']
    #allocation3 [shape = 's32[2]{0}', space=sflag, size = 0x8, scoped, tag = 'scoped memory for tpu_custom_call.1']
    #allocation4 [shape = 's32[2]{0}', space=sflag, size = 0x8, scoped, tag = 'scoped memory for tpu_custom_call.1']
    #allocation5 [shape = 'u8[1179648]{0}', space=vmem, size = 0x120000, scoped, tag = 'input window, operand 1, single buffered']
    #allocation6 [shape = 's32[1]{0}', space=sflag, size = 0x4, scoped, tag = 'scoped memory for tpu_custom_call.1']
    #allocation7 [shape = 'u8[512]{0}', space=vmem, size = 0x400, scoped, tag = 'input window, operand 2, single buffered']
    #allocation8 [shape = 'u8[512]{0}', space=vmem, size = 0x400, scoped, tag = 'input window, operand 3, single buffered']
    #allocation9 [shape = 's32[1]{0}', space=sflag, size = 0x4, scoped, tag = 'scoped memory for tpu_custom_call.1']
    #allocation10 [shape = 'u8[512]{0}', space=vmem, size = 0x400, scoped, tag = 'input window, operand 4, single buffered']
    #allocation11 [shape = 'u8[32768]{0}', space=vmem, size = 0x8000, scoped, tag = 'input window, operand 5, single buffered']
    #allocation12 [shape = 's32[1]{0}', space=sflag, size = 0x4, scoped, tag = 'scoped memory for tpu_custom_call.1']
    #allocation13 [shape = 'u8[512]{0}', space=vmem, size = 0x400, scoped, tag = 'input window, operand 6, single buffered']
    #allocation14 [shape = 'u8[512]{0}', space=vmem, size = 0x400, scoped, tag = 'input window, operand 7, single buffered']
    #allocation15 [shape = 's32[1]{0}', space=sflag, size = 0x4, scoped, tag = 'scoped memory for tpu_custom_call.1']
    #allocation16 [shape = 'u8[512]{0}', space=vmem, size = 0x400, scoped, tag = 'input window, operand 8, single buffered']
    #allocation17 [shape = 'u8[32768]{0}', space=vmem, size = 0x8000, scoped, tag = 'input window, operand 9, single buffered']
    #allocation18 [shape = 's32[1]{0}', space=sflag, size = 0x4, scoped, tag = 'scoped memory for tpu_custom_call.1']
    #allocation19 [shape = 'u8[512]{0}', space=vmem, size = 0x400, scoped, tag = 'input window, operand 10, single buffered']
    #allocation20 [shape = 'u8[131072]{0}', space=vmem, size = 0x20000, scoped, tag = 'output window, operand 0']
    %16 = vsyncpa [#allocation3], 0
    %s17 = scalar_lea.sflag [#allocation3], 1
    %18 = vsyncpa %s17, 0
    %19 = vsyncpa [#allocation6], 0
    %20 = vsyncpa [#allocation9], 0
    %21 = vsyncpa [#allocation12], 0
    %22 = vsyncpa [#allocation15], 0
    %23 = vsyncpa [#allocation18], 0
    %24 = vsyncpa [#allocation4], 0
    %s25 = scalar_lea.sflag [#allocation4], 1
    %26 = vsyncpa %s25, 0
    loop: start=0, step=1, limit=4
    $region2: #{tpu_custom_call.1} parent=1 // loop_pre_header
      _
    $region3: #{tpu_custom_call.1} parent=1 // loop_header
      %s28 = sphi 0, %s32
      %p29 = scmp.ge.s32.totalorder %s28, 4
      %s38 = sphi 0, %s40
      %s41 = sphi 0, %s38
      %s42 = sphi 0, %s41
      %s58 = sphi 0, %s42
      %s62 = sphi 0, %s62
      %s64 = sphi 0, %s62
      %s65 = sphi 0, %s64
      %s79 = sphi 0, %s65
      %s83 = sphi 0, %s83
      %s85 = sphi 0, %s83
      %s86 = sphi 0, %s85
      %s100 = sphi 0, %s86
      %s104 = sphi 0, %s104
      %s106 = sphi 0, %s104
      %s107 = sphi 0, %s106
      %s121 = sphi 0, %s107
      %s125 = sphi 0, %s125
      %s127 = sphi 0, %s125
      %s128 = sphi 0, %s127
      %s142 = sphi 0, %s128
      %s146 = sphi 0, %s146
      %s148 = sphi 0, %s146
      %s149 = sphi 0, %s148
      %s163 = sphi 0, %s149
      %s167 = sphi 0, %s167
      %s169 = sphi 0, %s167
      %s170 = sphi 0, %s169
      %s184 = sphi 0, %s170
      %s188 = sphi 0, %s188
      %s190 = sphi 0, %s188
      %s191 = sphi 0, %s190
      %s205 = sphi 0, %s191
      %s209 = sphi 0, %s209
      %s211 = sphi 0, %s209
      %s212 = sphi 0, %s211
      %s226 = sphi 0, %s212
      %s230 = sphi 0, %s230
      %s232 = sphi 0, %s230
      %s233 = sphi 0, %s232
      %s247 = sphi 0, %s233
      %s251 = sphi 0, %s251
      %s253 = sphi 0, %s251
      %s254 = sphi 0, %s253
      %s268 = sphi 0, %s254
      %s274 = sphi 0, %s276
      %s277 = sphi 0, %s274
      %s278 = sphi 0, %s277
      %s294 = sphi 0, %s278
    $region4: #{tpu_custom_call.1} parent=1 // loop_header_branch
      %31 = sbr.rel (%p29) target = $region8
    $region5: #{tpu_custom_call.1} parent=1 // loop_body
      %s33 = ssub.s32 %s28, 1
      %s34 = ssub.s32 %s28, 2
      %s35 = sadd.s32 %s28, 1
      %s36 = ssub.s32 %s28, %s35
      %p37 = scmp.eq.s32.totalorder %s36, 0
      %s39 = sadd.s32 %s38, 1
      %s40 = scalar_select %p37, %s38, %s39
      %p43 = pneg %p37
      %p44 = scmp.eq.s32.totalorder %s28, 1
      %p45 = por %p43, %p44
      %p46 = scmp.ne.s32.totalorder %s38, %s41
      %p47 = scmp.eq.s32.totalorder %s28, 0
      %p48 = por %p46, %p47
      %p49 = scmp.ne.s32.totalorder %s38, %s41
      %p50 = scmp.eq.s32.totalorder %s33, 1
      %p51 = por %p49, %p50
      %p52 = scmp.ne.s32.totalorder %s41, %s42
      %p53 = scmp.eq.s32.totalorder %s33, 0
      %p54 = por %p52, %p53
      %p55 = scmp.ne.s32.totalorder %s41, %s42
      %p56 = scmp.eq.s32.totalorder %s34, 1
      %p57 = por %p55, %p56
      %p59 = scmp.ne.s32.totalorder %s42, %s58
      %p60 = scmp.eq.s32.totalorder %s34, 0
      %p61 = por %p59, %p60
      %s63 = sadd.s32 %s62, 1
      %p66 = scmp.eq.s32.totalorder %s28, 1
      %p67 = scmp.ne.s32.totalorder %s62, %s64
      %p68 = scmp.eq.s32.totalorder %s28, 0
      %p69 = por %p67, %p68
      %p70 = scmp.ne.s32.totalorder %s62, %s64
      %p71 = scmp.eq.s32.totalorder %s33, 1
      %p72 = por %p70, %p71
      %p73 = scmp.ne.s32.totalorder %s64, %s65
      %p74 = scmp.eq.s32.totalorder %s33, 0
      %p75 = por %p73, %p74
      %p76 = scmp.ne.s32.totalorder %s64, %s65
      %p77 = scmp.eq.s32.totalorder %s34, 1
      %p78 = por %p76, %p77
      %p80 = scmp.ne.s32.totalorder %s65, %s79
      %p81 = scmp.eq.s32.totalorder %s34, 0
      %p82 = por %p80, %p81
      %s84 = sadd.s32 %s83, 1
      %p87 = scmp.eq.s32.totalorder %s28, 1
      %p88 = scmp.ne.s32.totalorder %s83, %s85
      %p89 = scmp.eq.s32.totalorder %s28, 0
      %p90 = por %p88, %p89
      %p91 = scmp.ne.s32.totalorder %s83, %s85
      %p92 = scmp.eq.s32.totalorder %s33, 1
      %p93 = por %p91, %p92
      %p94 = scmp.ne.s32.totalorder %s85, %s86
      %p95 = scmp.eq.s32.totalorder %s33, 0
      %p96 = por %p94, %p95
      %p97 = scmp.ne.s32.totalorder %s85, %s86
      %p98 = scmp.eq.s32.totalorder %s34, 1
      %p99 = por %p97, %p98
      %p101 = scmp.ne.s32.totalorder %s86, %s100
      %p102 = scmp.eq.s32.totalorder %s34, 0
      %p103 = por %p101, %p102
      %s105 = sadd.s32 %s104, 1
      %p108 = scmp.eq.s32.totalorder %s28, 1
      %p109 = scmp.ne.s32.totalorder %s104, %s106
      %p110 = scmp.eq.s32.totalorder %s28, 0
      %p111 = por %p109, %p110
      %p112 = scmp.ne.s32.totalorder %s104, %s106
      %p113 = scmp.eq.s32.totalorder %s33, 1
      %p114 = por %p112, %p113
      %p115 = scmp.ne.s32.totalorder %s106, %s107
      %p116 = scmp.eq.s32.totalorder %s33, 0
      %p117 = por %p115, %p116
      %p118 = scmp.ne.s32.totalorder %s106, %s107
      %p119 = scmp.eq.s32.totalorder %s34, 1
      %p120 = por %p118, %p119
      %p122 = scmp.ne.s32.totalorder %s107, %s121
      %p123 = scmp.eq.s32.totalorder %s34, 0
      %p124 = por %p122, %p123
      %s126 = sadd.s32 %s125, 1
      %p129 = scmp.eq.s32.totalorder %s28, 1
      %p130 = scmp.ne.s32.totalorder %s125, %s127
      %p131 = scmp.eq.s32.totalorder %s28, 0
      %p132 = por %p130, %p131
      %p133 = scmp.ne.s32.totalorder %s125, %s127
      %p134 = scmp.eq.s32.totalorder %s33, 1
      %p135 = por %p133, %p134
      %p136 = scmp.ne.s32.totalorder %s127, %s128
      %p137 = scmp.eq.s32.totalorder %s33, 0
      %p138 = por %p136, %p137
      %p139 = scmp.ne.s32.totalorder %s127, %s128
      %p140 = scmp.eq.s32.totalorder %s34, 1
      %p141 = por %p139, %p140
      %p143 = scmp.ne.s32.totalorder %s128, %s142
      %p144 = scmp.eq.s32.totalorder %s34, 0
      %p145 = por %p143, %p144
      %s147 = sadd.s32 %s146, 1
      %p150 = scmp.eq.s32.totalorder %s28, 1
      %p151 = scmp.ne.s32.totalorder %s146, %s148
      %p152 = scmp.eq.s32.totalorder %s28, 0
      %p153 = por %p151, %p152
      %p154 = scmp.ne.s32.totalorder %s146, %s148
      %p155 = scmp.eq.s32.totalorder %s33, 1
      %p156 = por %p154, %p155
      %p157 = scmp.ne.s32.totalorder %s148, %s149
      %p158 = scmp.eq.s32.totalorder %s33, 0
      %p159 = por %p157, %p158
      %p160 = scmp.ne.s32.totalorder %s148, %s149
      %p161 = scmp.eq.s32.totalorder %s34, 1
      %p162 = por %p160, %p161
      %p164 = scmp.ne.s32.totalorder %s149, %s163
      %p165 = scmp.eq.s32.totalorder %s34, 0
      %p166 = por %p164, %p165
      %s168 = sadd.s32 %s167, 1
      %p171 = scmp.eq.s32.totalorder %s28, 1
      %p172 = scmp.ne.s32.totalorder %s167, %s169
      %p173 = scmp.eq.s32.totalorder %s28, 0
      %p174 = por %p172, %p173
      %p175 = scmp.ne.s32.totalorder %s167, %s169
      %p176 = scmp.eq.s32.totalorder %s33, 1
      %p177 = por %p175, %p176
      %p178 = scmp.ne.s32.totalorder %s169, %s170
      %p179 = scmp.eq.s32.totalorder %s33, 0
      %p180 = por %p178, %p179
      %p181 = scmp.ne.s32.totalorder %s169, %s170
      %p182 = scmp.eq.s32.totalorder %s34, 1
      %p183 = por %p181, %p182
      %p185 = scmp.ne.s32.totalorder %s170, %s184
      %p186 = scmp.eq.s32.totalorder %s34, 0
      %p187 = por %p185, %p186
      %s189 = sadd.s32 %s188, 1
      %p192 = scmp.eq.s32.totalorder %s28, 1
      %p193 = scmp.ne.s32.totalorder %s188, %s190
      %p194 = scmp.eq.s32.totalorder %s28, 0
      %p195 = por %p193, %p194
      %p196 = scmp.ne.s32.totalorder %s188, %s190
      %p197 = scmp.eq.s32.totalorder %s33, 1
      %p198 = por %p196, %p197
      %p199 = scmp.ne.s32.totalorder %s190, %s191
      %p200 = scmp.eq.s32.totalorder %s33, 0
      %p201 = por %p199, %p200
      %p202 = scmp.ne.s32.totalorder %s190, %s191
      %p203 = scmp.eq.s32.totalorder %s34, 1
      %p204 = por %p202, %p203
      %p206 = scmp.ne.s32.totalorder %s191, %s205
      %p207 = scmp.eq.s32.totalorder %s34, 0
      %p208 = por %p206, %p207
      %s210 = sadd.s32 %s209, 1
      %p213 = scmp.eq.s32.totalorder %s28, 1
      %p214 = scmp.ne.s32.totalorder %s209, %s211
      %p215 = scmp.eq.s32.totalorder %s28, 0
      %p216 = por %p214, %p215
      %p217 = scmp.ne.s32.totalorder %s209, %s211
      %p218 = scmp.eq.s32.totalorder %s33, 1
      %p219 = por %p217, %p218
      %p220 = scmp.ne.s32.totalorder %s211, %s212
      %p221 = scmp.eq.s32.totalorder %s33, 0
      %p222 = por %p220, %p221
      %p223 = scmp.ne.s32.totalorder %s211, %s212
      %p224 = scmp.eq.s32.totalorder %s34, 1
      %p225 = por %p223, %p224
      %p227 = scmp.ne.s32.totalorder %s212, %s226
      %p228 = scmp.eq.s32.totalorder %s34, 0
      %p229 = por %p227, %p228
      %s231 = sadd.s32 %s230, 1
      %p234 = scmp.eq.s32.totalorder %s28, 1
      %p235 = scmp.ne.s32.totalorder %s230, %s232
      %p236 = scmp.eq.s32.totalorder %s28, 0
      %p237 = por %p235, %p236
      %p238 = scmp.ne.s32.totalorder %s230, %s232
      %p239 = scmp.eq.s32.totalorder %s33, 1
      %p240 = por %p238, %p239
      %p241 = scmp.ne.s32.totalorder %s232, %s233
      %p242 = scmp.eq.s32.totalorder %s33, 0
      %p243 = por %p241, %p242
      %p244 = scmp.ne.s32.totalorder %s232, %s233
      %p245 = scmp.eq.s32.totalorder %s34, 1
      %p246 = por %p244, %p245
      %p248 = scmp.ne.s32.totalorder %s233, %s247
      %p249 = scmp.eq.s32.totalorder %s34, 0
      %p250 = por %p248, %p249
      %s252 = sadd.s32 %s251, 1
      %p255 = scmp.eq.s32.totalorder %s28, 1
      %p256 = scmp.ne.s32.totalorder %s251, %s253
      %p257 = scmp.eq.s32.totalorder %s28, 0
      %p258 = por %p256, %p257
      %p259 = scmp.ne.s32.totalorder %s251, %s253
      %p260 = scmp.eq.s32.totalorder %s33, 1
      %p261 = por %p259, %p260
      %p262 = scmp.ne.s32.totalorder %s253, %s254
      %p263 = scmp.eq.s32.totalorder %s33, 0
      %p264 = por %p262, %p263
      %p265 = scmp.ne.s32.totalorder %s253, %s254
      %p266 = scmp.eq.s32.totalorder %s34, 1
      %p267 = por %p265, %p266
      %p269 = scmp.ne.s32.totalorder %s254, %s268
      %p270 = scmp.eq.s32.totalorder %s34, 0
      %p271 = por %p269, %p270
      %s272 = ssub.s32 %s28, %s35
      %p273 = scmp.eq.s32.totalorder %s272, 0
      %s275 = sadd.s32 %s274, 1
      %s276 = scalar_select %p273, %s274, %s275
      %p279 = pneg %p273
      %p280 = scmp.eq.s32.totalorder %s28, 1
      %p281 = por %p279, %p280
      %p282 = scmp.ne.s32.totalorder %s274, %s277
      %p283 = scmp.eq.s32.totalorder %s28, 0
      %p284 = por %p282, %p283
      %p285 = scmp.ne.s32.totalorder %s274, %s277
      %p286 = scmp.eq.s32.totalorder %s33, 1
      %p287 = por %p285, %p286
      %p288 = scmp.ne.s32.totalorder %s277, %s278
      %p289 = scmp.eq.s32.totalorder %s33, 0
      %p290 = por %p288, %p289
      %p291 = scmp.ne.s32.totalorder %s277, %s278
      %p292 = scmp.eq.s32.totalorder %s34, 1
      %p293 = por %p291, %p292
      %p295 = scmp.ne.s32.totalorder %s278, %s294
      %p296 = scmp.eq.s32.totalorder %s34, 0
      %p297 = por %p295, %p296
      %p298 = scmp.le.s32.totalorder 1, %s28
      %p299 = scmp.lt.s32.totalorder %s28, 3
      %p300 = pnand %p298, %p299
      %p301 = pneg %p300
      // Predicated region
      $region9: #{tpu_custom_call.1} parent=5 // pred_check
        _
      $region10: #{tpu_custom_call.1} parent=5 // pred_check_branch
        %303 = sbr.rel (%p300) target = $region12
      $region11: #{tpu_custom_call.1} parent=5 // pred_region
        %s304 = ssub.s32 %s28, 1
        // Predicated region
        $region13: #{tpu_custom_call.1} parent=11 // pred_check
          %p305 = pneg %p75
        $region14: #{tpu_custom_call.1} parent=11 // pred_check_branch
          %307 = sbr.rel (%p305) target = $region16
        $region15: #{tpu_custom_call.1} parent=11 // pred_region
          %s309 = ssub.s32 36864, 36864
          %310 = vsyncadd [#allocation6], %s309
          %s311 = sshll.u32 [#allocation5], 4
          %s312 = int_to_ptr.vmem [resolvable:$true] %s311
          %317 = dma.hbm_to_vmem [thread:$0]  %s1, 36864, %s312, [#allocation6], 64, 64, 4
        $region16: #{tpu_custom_call.1} parent=11 // pred_fallthru
          _
        // Predicated region
        $region17: #{tpu_custom_call.1} parent=11 // pred_check
          %p318 = pneg %p96
        $region18: #{tpu_custom_call.1} parent=11 // pred_check_branch
          %320 = sbr.rel (%p318) target = $region20
        $region19: #{tpu_custom_call.1} parent=11 // pred_region
          %s322 = ssub.s32 16, 16
          %323 = vsyncadd [#allocation6], %s322
          %s325 = sshll.u32 [#allocation7], 4
          %s326 = int_to_ptr.vmem [resolvable:$true] %s325
          %328 = dma.hbm_to_vmem [thread:$0]  %s2, 16, %s326, [#allocation6]
        $region20: #{tpu_custom_call.1} parent=11 // pred_fallthru
          _
        // Predicated region
        $region21: #{tpu_custom_call.1} parent=11 // pred_check
          %p329 = pneg %p117
        $region22: #{tpu_custom_call.1} parent=11 // pred_check_branch
          %331 = sbr.rel (%p329) target = $region24
        $region23: #{tpu_custom_call.1} parent=11 // pred_region
          %s333 = ssub.s32 16, 16
          %334 = vsyncadd [#allocation9], %s333
          %s336 = sshll.u32 [#allocation8], 4
          %s337 = int_to_ptr.vmem [resolvable:$true] %s336
          %339 = dma.hbm_to_vmem [thread:$0]  %s3, 16, %s337, [#allocation9]
        $region24: #{tpu_custom_call.1} parent=11 // pred_fallthru
          _
        // Predicated region
        $region25: #{tpu_custom_call.1} parent=11 // pred_check
          %p340 = pneg %p138
        $region26: #{tpu_custom_call.1} parent=11 // pred_check_branch
          %342 = sbr.rel (%p340) target = $region28
        $region27: #{tpu_custom_call.1} parent=11 // pred_region
          %s344 = ssub.s32 16, 16
          %345 = vsyncadd [#allocation9], %s344
          %s347 = sshll.u32 [#allocation10], 4
          %s348 = int_to_ptr.vmem [resolvable:$true] %s347
          %350 = dma.hbm_to_vmem [thread:$0]  %s4, 16, %s348, [#allocation9]
        $region28: #{tpu_custom_call.1} parent=11 // pred_fallthru
          _
        // Predicated region
        $region29: #{tpu_custom_call.1} parent=11 // pred_check
          %p351 = pneg %p159
        $region30: #{tpu_custom_call.1} parent=11 // pred_check_branch
          %353 = sbr.rel (%p351) target = $region32
        $region31: #{tpu_custom_call.1} parent=11 // pred_region
          %s355 = ssub.s32 1024, 1024
          %356 = vsyncadd [#allocation12], %s355
          %s357 = sshll.u32 [#allocation11], 4
          %s358 = int_to_ptr.vmem [resolvable:$true] %s357
          %363 = dma.hbm_to_vmem [thread:$0]  %s5, 1024, %s358, [#allocation12], 64, 64, 4
        $region32: #{tpu_custom_call.1} parent=11 // pred_fallthru
          _
        // Predicated region
        $region33: #{tpu_custom_call.1} parent=11 // pred_check
          %p364 = pneg %p180
        $region34: #{tpu_custom_call.1} parent=11 // pred_check_branch
          %366 = sbr.rel (%p364) target = $region36
        $region35: #{tpu_custom_call.1} parent=11 // pred_region
          %s368 = ssub.s32 16, 16
          %369 = vsyncadd [#allocation12], %s368
          %s371 = sshll.u32 [#allocation13], 4
          %s372 = int_to_ptr.vmem [resolvable:$true] %s371
          %374 = dma.hbm_to_vmem [thread:$0]  %s6, 16, %s372, [#allocation12]
        $region36: #{tpu_custom_call.1} parent=11 // pred_fallthru
          _
        // Predicated region
        $region37: #{tpu_custom_call.1} parent=11 // pred_check
          %p375 = pneg %p201
        $region38: #{tpu_custom_call.1} parent=11 // pred_check_branch
          %377 = sbr.rel (%p375) target = $region40
        $region39: #{tpu_custom_call.1} parent=11 // pred_region
          %s379 = ssub.s32 16, 16
          %380 = vsyncadd [#allocation15], %s379
          %s382 = sshll.u32 [#allocation14], 4
          %s383 = int_to_ptr.vmem [resolvable:$true] %s382
          %385 = dma.hbm_to_vmem [thread:$0]  %s7, 16, %s383, [#allocation15]
        $region40: #{tpu_custom_call.1} parent=11 // pred_fallthru
          _
        // Predicated region
        $region41: #{tpu_custom_call.1} parent=11 // pred_check
          %p386 = pneg %p222
        $region42: #{tpu_custom_call.1} parent=11 // pred_check_branch
          %388 = sbr.rel (%p386) target = $region44
        $region43: #{tpu_custom_call.1} parent=11 // pred_region
          %s390 = ssub.s32 16, 16
          %391 = vsyncadd [#allocation15], %s390
          %s393 = sshll.u32 [#allocation16], 4
          %s394 = int_to_ptr.vmem [resolvable:$true] %s393
          %396 = dma.hbm_to_vmem [thread:$0]  %s8, 16, %s394, [#allocation15]
        $region44: #{tpu_custom_call.1} parent=11 // pred_fallthru
          _
        // Predicated region
        $region45: #{tpu_custom_call.1} parent=11 // pred_check
          %p397 = pneg %p243
        $region46: #{tpu_custom_call.1} parent=11 // pred_check_branch
          %399 = sbr.rel (%p397) target = $region48
        $region47: #{tpu_custom_call.1} parent=11 // pred_region
          %s401 = ssub.s32 1024, 1024
          %402 = vsyncadd [#allocation18], %s401
          %s403 = sshll.u32 [#allocation17], 4
          %s404 = int_to_ptr.vmem [resolvable:$true] %s403
          %409 = dma.hbm_to_vmem [thread:$0]  %s9, 1024, %s404, [#allocation18], 64, 64, 4
        $region48: #{tpu_custom_call.1} parent=11 // pred_fallthru
          _
        // Predicated region
        $region49: #{tpu_custom_call.1} parent=11 // pred_check
          %p410 = pneg %p264
        $region50: #{tpu_custom_call.1} parent=11 // pred_check_branch
          %412 = sbr.rel (%p410) target = $region52
        $region51: #{tpu_custom_call.1} parent=11 // pred_region
          %s414 = ssub.s32 16, 16
          %415 = vsyncadd [#allocation18], %s414
          %s417 = sshll.u32 [#allocation19], 4
          %s418 = int_to_ptr.vmem [resolvable:$true] %s417
          %420 = dma.hbm_to_vmem [thread:$0]  %s10, 16, %s418, [#allocation18]
        $region52: #{tpu_custom_call.1} parent=11 // pred_fallthru
          _
      $region12: #{tpu_custom_call.1} parent=5 // pred_fallthru
        _
      %p421 = scmp.lt.s32.totalorder %s28, 2
      // Predicated region
      $region53: #{tpu_custom_call.1} parent=5 // pred_check
        %p422 = pneg %p421
      $region54: #{tpu_custom_call.1} parent=5 // pred_check_branch
        %424 = sbr.rel (%p422) target = $region56
      $region55: #{tpu_custom_call.1} parent=5 // pred_region
        // Predicated region
        $region57: #{tpu_custom_call.1} parent=55 // pred_check
          %p425 = pneg %p48
        $region58: #{tpu_custom_call.1} parent=55 // pred_check_branch
          %427 = sbr.rel (%p425) target = $region60
        $region59: #{tpu_custom_call.1} parent=55 // pred_region
          %s428 = sand.u32 %s38, 1
          %s429 = scalar_lea.sflag [#allocation3], %s428
          %s430 = sand.u32 %s38, 1
          %s431 = smul.addr %s430, 2304
          %s432 = scalar_lea.vmem [#allocation2], %s431
          %s433 = smul.u32 16, %s28
          %s435 = ssub.s32 36864, 36864
          %436 = vsyncadd %s429, %s435
          %s437 = smul.addr %s433, 36
          %s438 = smul.addr %s437, 64
          %s439 = scalar_lea.hbm %s0, %s438
          %s440 = sshll.u32 %s432, 4
          %s441 = int_to_ptr.vmem [resolvable:$true] %s440
          %446 = dma.hbm_to_vmem [thread:$0]  %s439, 36864, %s441, %s429, 2304, 2304, 144
        $region60: #{tpu_custom_call.1} parent=55 // pred_fallthru
          _
      $region56: #{tpu_custom_call.1} parent=5 // pred_fallthru
        _
      %p447 = scmp.le.s32.totalorder 1, %s28
      %p448 = scmp.lt.s32.totalorder %s28, 3
      %p449 = pnand %p447, %p448
      %p450 = pneg %p449
      // Predicated region
      $region61: #{tpu_custom_call.1} parent=5 // pred_check
        _
      $region62: #{tpu_custom_call.1} parent=5 // pred_check_branch
        %452 = sbr.rel (%p449) target = $region64
      $region63: #{tpu_custom_call.1} parent=5 // pred_region
        %s453 = ssub.s32 %s28, 1
        %s454 = sand.u32 %s41, 1
        %s455 = scalar_lea.sflag [#allocation3], %s454
        %s456 = sand.u32 %s41, 1
        %s457 = smul.addr %s456, 2304
        %s458 = scalar_lea.vmem [#allocation2], %s457
        // Predicated region
        $region65: #{tpu_custom_call.1} parent=63 // pred_check
          %p459 = pneg %p54
        $region66: #{tpu_custom_call.1} parent=63 // pred_check_branch
          %461 = sbr.rel (%p459) target = $region68
        $region67: #{tpu_custom_call.1} parent=63 // pred_region
          %462 = dma.done %s455, 36864
        $region68: #{tpu_custom_call.1} parent=63 // pred_fallthru
          _
        // Predicated region
        $region69: #{tpu_custom_call.1} parent=63 // pred_check
          %p463 = pneg %p75
        $region70: #{tpu_custom_call.1} parent=63 // pred_check_branch
          %465 = sbr.rel (%p463) target = $region72
        $region71: #{tpu_custom_call.1} parent=63 // pred_region
          %466 = dma.done [#allocation6], 36864
        $region72: #{tpu_custom_call.1} parent=63 // pred_fallthru
          _
        // Predicated region
        $region73: #{tpu_custom_call.1} parent=63 // pred_check
          %p467 = pneg %p96
        $region74: #{tpu_custom_call.1} parent=63 // pred_check_branch
          %469 = sbr.rel (%p467) target = $region76
        $region75: #{tpu_custom_call.1} parent=63 // pred_region
          %470 = dma.done [#allocation6], 16
        $region76: #{tpu_custom_call.1} parent=63 // pred_fallthru
          _
        // Predicated region
        $region77: #{tpu_custom_call.1} parent=63 // pred_check
          %p471 = pneg %p117
        $region78: #{tpu_custom_call.1} parent=63 // pred_check_branch
          %473 = sbr.rel (%p471) target = $region80
        $region79: #{tpu_custom_call.1} parent=63 // pred_region
          %474 = dma.done [#allocation9], 16
        $region80: #{tpu_custom_call.1} parent=63 // pred_fallthru
          _
        // Predicated region
        $region81: #{tpu_custom_call.1} parent=63 // pred_check
          %p475 = pneg %p138
        $region82: #{tpu_custom_call.1} parent=63 // pred_check_branch
          %477 = sbr.rel (%p475) target = $region84
        $region83: #{tpu_custom_call.1} parent=63 // pred_region
          %478 = dma.done [#allocation9], 16
        $region84: #{tpu_custom_call.1} parent=63 // pred_fallthru
          _
        // Predicated region
        $region85: #{tpu_custom_call.1} parent=63 // pred_check
          %p479 = pneg %p159
        $region86: #{tpu_custom_call.1} parent=63 // pred_check_branch
          %481 = sbr.rel (%p479) target = $region88
        $region87: #{tpu_custom_call.1} parent=63 // pred_region
          %482 = dma.done [#allocation12], 1024
        $region88: #{tpu_custom_call.1} parent=63 // pred_fallthru
          _
        // Predicated region
        $region89: #{tpu_custom_call.1} parent=63 // pred_check
          %p483 = pneg %p180
        $region90: #{tpu_custom_call.1} parent=63 // pred_check_branch
          %485 = sbr.rel (%p483) target = $region92
        $region91: #{tpu_custom_call.1} parent=63 // pred_region
          %486 = dma.done [#allocation12], 16
        $region92: #{tpu_custom_call.1} parent=63 // pred_fallthru
          _
        // Predicated region
        $region93: #{tpu_custom_call.1} parent=63 // pred_check
          %p487 = pneg %p201
        $region94: #{tpu_custom_call.1} parent=63 // pred_check_branch
          %489 = sbr.rel (%p487) target = $region96
        $region95: #{tpu_custom_call.1} parent=63 // pred_region
          %490 = dma.done [#allocation15], 16
        $region96: #{tpu_custom_call.1} parent=63 // pred_fallthru
          _
        // Predicated region
        $region97: #{tpu_custom_call.1} parent=63 // pred_check
          %p491 = pneg %p222
        $region98: #{tpu_custom_call.1} parent=63 // pred_check_branch
          %493 = sbr.rel (%p491) target = $region100
        $region99: #{tpu_custom_call.1} parent=63 // pred_region
          %494 = dma.done [#allocation15], 16
        $region100: #{tpu_custom_call.1} parent=63 // pred_fallthru
          _
        // Predicated region
        $region101: #{tpu_custom_call.1} parent=63 // pred_check
          %p495 = pneg %p243
        $region102: #{tpu_custom_call.1} parent=63 // pred_check_branch
          %497 = sbr.rel (%p495) target = $region104
        $region103: #{tpu_custom_call.1} parent=63 // pred_region
          %498 = dma.done [#allocation18], 1024
        $region104: #{tpu_custom_call.1} parent=63 // pred_fallthru
          _
        // Predicated region
        $region105: #{tpu_custom_call.1} parent=63 // pred_check
          %p499 = pneg %p264
        $region106: #{tpu_custom_call.1} parent=63 // pred_check_branch
          %501 = sbr.rel (%p499) target = $region108
        $region107: #{tpu_custom_call.1} parent=63 // pred_region
          %502 = dma.done [#allocation18], 16
        $region108: #{tpu_custom_call.1} parent=63 // pred_fallthru
          _
        %s503 = sand.u32 %s41, 1
        %s504 = scalar_lea.sflag [#allocation3], %s503
        %s505 = sand.u32 %s41, 1
        %s506 = smul.addr %s505, 2304
        %s507 = scalar_lea.vmem [#allocation2], %s506
        %p508 = pneg %p54
        %p509 = pneg %p51
        %p510 = pneg %p75
        %p511 = pneg %p72
        %p512 = pneg %p96
        %p513 = pneg %p93
        %p514 = pneg %p117
        %p515 = pneg %p114
        %p516 = pneg %p138
        %p517 = pneg %p135
        %p518 = pneg %p159
        %p519 = pneg %p156
        %p520 = pneg %p180
        %p521 = pneg %p177
        %p522 = pneg %p201
        %p523 = pneg %p198
        %p524 = pneg %p222
        %p525 = pneg %p219
        %p526 = pneg %p243
        %p527 = pneg %p240
        %p528 = pneg %p264
        %p529 = pneg %p261
        %p530 = pneg %p290
        %p531 = pneg %p287
        %s532 = sand.u32 %s277, 1
        %s533 = scalar_lea.sflag [#allocation4], %s532
        %s534 = sand.u32 %s277, 1
        %s535 = smul.addr %s534, 128
        %s536 = scalar_lea.vmem [#allocation20], %s535
        %s537 = smul.u32 16, %s33
        %s538 = smul.u32 16, %s33
        %v540 = vld [vmem:[%s458] sm:$0xff]
        %v541 = vld [vmem:[%s458 + $0x8] sm:$0xff]
        %v542 = vld [vmem:[%s458 + $0x10] sm:$0xff]
        %v543 = vld [vmem:[%s458 + $0x18] sm:$0xff]
        %v544 = vld [vmem:[%s458 + $0x20] sm:$0xff]
        %v545 = vld [vmem:[%s458 + $0x28] sm:$0xff]
        %v546 = vld [vmem:[%s458 + $0x30] sm:$0xff]
        %v547 = vld [vmem:[%s458 + $0x38] sm:$0xff]
        %v548 = vld [vmem:[%s458 + $0x40] sm:$0xff]
        %v549 = vld [vmem:[%s458 + $0x48] sm:$0xff]
        %v550 = vld [vmem:[%s458 + $0x50] sm:$0xff]
        %v551 = vld [vmem:[%s458 + $0x58] sm:$0xff]
        %v552 = vld [vmem:[%s458 + $0x60] sm:$0xff]
        %v553 = vld [vmem:[%s458 + $0x68] sm:$0xff]
        %v554 = vld [vmem:[%s458 + $0x70] sm:$0xff]
        %v555 = vld [vmem:[%s458 + $0x78] sm:$0xff]
        %v556 = vld [vmem:[%s458 + $0x80] sm:$0xff]
        %v557 = vld [vmem:[%s458 + $0x88] sm:$0xff]
        %v558 = vld [vmem:[%s458 + $0x90] sm:$0xff]
        %v559 = vld [vmem:[%s458 + $0x98] sm:$0xff]
        %v560 = vld [vmem:[%s458 + $0xa0] sm:$0xff]
        %v561 = vld [vmem:[%s458 + $0xa8] sm:$0xff]
        %v562 = vld [vmem:[%s458 + $0xb0] sm:$0xff]
        %v563 = vld [vmem:[%s458 + $0xb8] sm:$0xff]
        %v564 = vld [vmem:[%s458 + $0xc0] sm:$0xff]
        %v565 = vld [vmem:[%s458 + $0xc8] sm:$0xff]
        %v566 = vld [vmem:[%s458 + $0xd0] sm:$0xff]
        %v567 = vld [vmem:[%s458 + $0xd8] sm:$0xff]
        %v568 = vld [vmem:[%s458 + $0xe0] sm:$0xff]
        %v569 = vld [vmem:[%s458 + $0xe8] sm:$0xff]
        %v570 = vld [vmem:[%s458 + $0xf0] sm:$0xff]
        %v571 = vld [vmem:[%s458 + $0xf8] sm:$0xff]
        %v572 = vld [vmem:[%s458 + $0x100] sm:$0xff]
        %v573 = vld [vmem:[%s458 + $0x108] sm:$0xff]
        %v574 = vld [vmem:[%s458 + $0x110] sm:$0xff]
        %v575 = vld [vmem:[%s458 + $0x118] sm:$0xff]
        %v576 = vld [vmem:[%s458 + $0x120] sm:$0xff]
        %v577 = vld [vmem:[%s458 + $0x128] sm:$0xff]
        %v578 = vld [vmem:[%s458 + $0x130] sm:$0xff]
        %v579 = vld [vmem:[%s458 + $0x138] sm:$0xff]
        %v580 = vld [vmem:[%s458 + $0x140] sm:$0xff]
        %v581 = vld [vmem:[%s458 + $0x148] sm:$0xff]
        %v582 = vld [vmem:[%s458 + $0x150] sm:$0xff]
        %v583 = vld [vmem:[%s458 + $0x158] sm:$0xff]
        %v584 = vld [vmem:[%s458 + $0x160] sm:$0xff]
        %v585 = vld [vmem:[%s458 + $0x168] sm:$0xff]
        %v586 = vld [vmem:[%s458 + $0x170] sm:$0xff]
        %v587 = vld [vmem:[%s458 + $0x178] sm:$0xff]
        %v588 = vld [vmem:[%s458 + $0x180] sm:$0xff]
        %v589 = vld [vmem:[%s458 + $0x188] sm:$0xff]
        %v590 = vld [vmem:[%s458 + $0x190] sm:$0xff]
        %v591 = vld [vmem:[%s458 + $0x198] sm:$0xff]
        %v592 = vld [vmem:[%s458 + $0x1a0] sm:$0xff]
        %v593 = vld [vmem:[%s458 + $0x1a8] sm:$0xff]
        %v594 = vld [vmem:[%s458 + $0x1b0] sm:$0xff]
        %v595 = vld [vmem:[%s458 + $0x1b8] sm:$0xff]
        %v596 = vld [vmem:[%s458 + $0x1c0] sm:$0xff]
        %v597 = vld [vmem:[%s458 + $0x1c8] sm:$0xff]
        %v598 = vld [vmem:[%s458 + $0x1d0] sm:$0xff]
        %v599 = vld [vmem:[%s458 + $0x1d8] sm:$0xff]
        %v600 = vld [vmem:[%s458 + $0x1e0] sm:$0xff]
        %v601 = vld [vmem:[%s458 + $0x1e8] sm:$0xff]
        %v602 = vld [vmem:[%s458 + $0x1f0] sm:$0xff]
        %v603 = vld [vmem:[%s458 + $0x1f8] sm:$0xff]
        %v604 = vld [vmem:[%s458 + $0x200] sm:$0xff]
        %v605 = vld [vmem:[%s458 + $0x208] sm:$0xff]
        %v606 = vld [vmem:[%s458 + $0x210] sm:$0xff]
        %v607 = vld [vmem:[%s458 + $0x218] sm:$0xff]
        %v608 = vld [vmem:[%s458 + $0x220] sm:$0xff]
        %v609 = vld [vmem:[%s458 + $0x228] sm:$0xff]
        %v610 = vld [vmem:[%s458 + $0x230] sm:$0xff]
        %v611 = vld [vmem:[%s458 + $0x238] sm:$0xff]
        %v612 = vld [vmem:[%s458 + $0x240] sm:$0xff]
        %v613 = vld [vmem:[%s458 + $0x248] sm:$0xff]
        %v614 = vld [vmem:[%s458 + $0x250] sm:$0xff]
        %v615 = vld [vmem:[%s458 + $0x258] sm:$0xff]
        %v616 = vld [vmem:[%s458 + $0x260] sm:$0xff]
        %v617 = vld [vmem:[%s458 + $0x268] sm:$0xff]
        %v618 = vld [vmem:[%s458 + $0x270] sm:$0xff]
        %v619 = vld [vmem:[%s458 + $0x278] sm:$0xff]
        %v620 = vld [vmem:[%s458 + $0x280] sm:$0xff]
        %v621 = vld [vmem:[%s458 + $0x288] sm:$0xff]
        %v622 = vld [vmem:[%s458 + $0x290] sm:$0xff]
        %v623 = vld [vmem:[%s458 + $0x298] sm:$0xff]
        %v624 = vld [vmem:[%s458 + $0x2a0] sm:$0xff]
        %v625 = vld [vmem:[%s458 + $0x2a8] sm:$0xff]
        %v626 = vld [vmem:[%s458 + $0x2b0] sm:$0xff]
        %v627 = vld [vmem:[%s458 + $0x2b8] sm:$0xff]
        %v628 = vld [vmem:[%s458 + $0x2c0] sm:$0xff]
        %v629 = vld [vmem:[%s458 + $0x2c8] sm:$0xff]
        %v630 = vld [vmem:[%s458 + $0x2d0] sm:$0xff]
        %v631 = vld [vmem:[%s458 + $0x2d8] sm:$0xff]
        %v632 = vld [vmem:[%s458 + $0x2e0] sm:$0xff]
        %v633 = vld [vmem:[%s458 + $0x2e8] sm:$0xff]
        %v634 = vld [vmem:[%s458 + $0x2f0] sm:$0xff]
        %v635 = vld [vmem:[%s458 + $0x2f8] sm:$0xff]
        %v636 = vld [vmem:[%s458 + $0x300] sm:$0xff]
        %v637 = vld [vmem:[%s458 + $0x308] sm:$0xff]
        %v638 = vld [vmem:[%s458 + $0x310] sm:$0xff]
        %v639 = vld [vmem:[%s458 + $0x318] sm:$0xff]
        %v640 = vld [vmem:[%s458 + $0x320] sm:$0xff]
        %v641 = vld [vmem:[%s458 + $0x328] sm:$0xff]
        %v642 = vld [vmem:[%s458 + $0x330] sm:$0xff]
        %v643 = vld [vmem:[%s458 + $0x338] sm:$0xff]
        %v644 = vld [vmem:[%s458 + $0x340] sm:$0xff]
        %v645 = vld [vmem:[%s458 + $0x348] sm:$0xff]
        %v646 = vld [vmem:[%s458 + $0x350] sm:$0xff]
        %v647 = vld [vmem:[%s458 + $0x358] sm:$0xff]
        %v648 = vld [vmem:[%s458 + $0x360] sm:$0xff]
        %v649 = vld [vmem:[%s458 + $0x368] sm:$0xff]
        %v650 = vld [vmem:[%s458 + $0x370] sm:$0xff]
        %v651 = vld [vmem:[%s458 + $0x378] sm:$0xff]
        %v652 = vld [vmem:[%s458 + $0x380] sm:$0xff]
        %v653 = vld [vmem:[%s458 + $0x388] sm:$0xff]
        %v654 = vld [vmem:[%s458 + $0x390] sm:$0xff]
        %v655 = vld [vmem:[%s458 + $0x398] sm:$0xff]
        %v656 = vld [vmem:[%s458 + $0x3a0] sm:$0xff]
        %v657 = vld [vmem:[%s458 + $0x3a8] sm:$0xff]
        %v658 = vld [vmem:[%s458 + $0x3b0] sm:$0xff]
        %v659 = vld [vmem:[%s458 + $0x3b8] sm:$0xff]
        %v660 = vld [vmem:[%s458 + $0x3c0] sm:$0xff]
        %v661 = vld [vmem:[%s458 + $0x3c8] sm:$0xff]
        %v662 = vld [vmem:[%s458 + $0x3d0] sm:$0xff]
        %v663 = vld [vmem:[%s458 + $0x3d8] sm:$0xff]
        %v664 = vld [vmem:[%s458 + $0x3e0] sm:$0xff]
        %v665 = vld [vmem:[%s458 + $0x3e8] sm:$0xff]
        %v666 = vld [vmem:[%s458 + $0x3f0] sm:$0xff]
        %v667 = vld [vmem:[%s458 + $0x3f8] sm:$0xff]
        %v668 = vld [vmem:[%s458 + $0x400] sm:$0xff]
        %v669 = vld [vmem:[%s458 + $0x408] sm:$0xff]
        %v670 = vld [vmem:[%s458 + $0x410] sm:$0xff]
        %v671 = vld [vmem:[%s458 + $0x418] sm:$0xff]
        %v672 = vld [vmem:[%s458 + $0x420] sm:$0xff]
        %v673 = vld [vmem:[%s458 + $0x428] sm:$0xff]
        %v674 = vld [vmem:[%s458 + $0x430] sm:$0xff]
        %v675 = vld [vmem:[%s458 + $0x438] sm:$0xff]
        %v676 = vld [vmem:[%s458 + $0x440] sm:$0xff]
        %v677 = vld [vmem:[%s458 + $0x448] sm:$0xff]
        %v678 = vld [vmem:[%s458 + $0x450] sm:$0xff]
        %v679 = vld [vmem:[%s458 + $0x458] sm:$0xff]
        %v680 = vld [vmem:[%s458 + $0x460] sm:$0xff]
        %v681 = vld [vmem:[%s458 + $0x468] sm:$0xff]
        %v682 = vld [vmem:[%s458 + $0x470] sm:$0xff]
        %v683 = vld [vmem:[%s458 + $0x478] sm:$0xff]
        %v684 = vld [vmem:[%s458 + $0x480] sm:$0xff]
        %v685 = vld [vmem:[%s458 + $0x488] sm:$0xff]
        %v686 = vld [vmem:[%s458 + $0x490] sm:$0xff]
        %v687 = vld [vmem:[%s458 + $0x498] sm:$0xff]
        %v688 = vld [vmem:[%s458 + $0x4a0] sm:$0xff]
        %v689 = vld [vmem:[%s458 + $0x4a8] sm:$0xff]
        %v690 = vld [vmem:[%s458 + $0x4b0] sm:$0xff]
        %v691 = vld [vmem:[%s458 + $0x4b8] sm:$0xff]
        %v692 = vld [vmem:[%s458 + $0x4c0] sm:$0xff]
        %v693 = vld [vmem:[%s458 + $0x4c8] sm:$0xff]
        %v694 = vld [vmem:[%s458 + $0x4d0] sm:$0xff]
        %v695 = vld [vmem:[%s458 + $0x4d8] sm:$0xff]
        %v696 = vld [vmem:[%s458 + $0x4e0] sm:$0xff]
        %v697 = vld [vmem:[%s458 + $0x4e8] sm:$0xff]
        %v698 = vld [vmem:[%s458 + $0x4f0] sm:$0xff]
        %v699 = vld [vmem:[%s458 + $0x4f8] sm:$0xff]
        %v700 = vld [vmem:[%s458 + $0x500] sm:$0xff]
        %v701 = vld [vmem:[%s458 + $0x508] sm:$0xff]
        %v702 = vld [vmem:[%s458 + $0x510] sm:$0xff]
        %v703 = vld [vmem:[%s458 + $0x518] sm:$0xff]
        %v704 = vld [vmem:[%s458 + $0x520] sm:$0xff]
        %v705 = vld [vmem:[%s458 + $0x528] sm:$0xff]
        %v706 = vld [vmem:[%s458 + $0x530] sm:$0xff]
        %v707 = vld [vmem:[%s458 + $0x538] sm:$0xff]
        %v708 = vld [vmem:[%s458 + $0x540] sm:$0xff]
        %v709 = vld [vmem:[%s458 + $0x548] sm:$0xff]
        %v710 = vld [vmem:[%s458 + $0x550] sm:$0xff]
        %v711 = vld [vmem:[%s458 + $0x558] sm:$0xff]
        %v712 = vld [vmem:[%s458 + $0x560] sm:$0xff]
        %v713 = vld [vmem:[%s458 + $0x568] sm:$0xff]
        %v714 = vld [vmem:[%s458 + $0x570] sm:$0xff]
        %v715 = vld [vmem:[%s458 + $0x578] sm:$0xff]
        %v716 = vld [vmem:[%s458 + $0x580] sm:$0xff]
        %v717 = vld [vmem:[%s458 + $0x588] sm:$0xff]
        %v718 = vld [vmem:[%s458 + $0x590] sm:$0xff]
        %v719 = vld [vmem:[%s458 + $0x598] sm:$0xff]
        %v720 = vld [vmem:[%s458 + $0x5a0] sm:$0xff]
        %v721 = vld [vmem:[%s458 + $0x5a8] sm:$0xff]
        %v722 = vld [vmem:[%s458 + $0x5b0] sm:$0xff]
        %v723 = vld [vmem:[%s458 + $0x5b8] sm:$0xff]
        %v724 = vld [vmem:[%s458 + $0x5c0] sm:$0xff]
        %v725 = vld [vmem:[%s458 + $0x5c8] sm:$0xff]
        %v726 = vld [vmem:[%s458 + $0x5d0] sm:$0xff]
        %v727 = vld [vmem:[%s458 + $0x5d8] sm:$0xff]
        %v728 = vld [vmem:[%s458 + $0x5e0] sm:$0xff]
        %v729 = vld [vmem:[%s458 + $0x5e8] sm:$0xff]
        %v730 = vld [vmem:[%s458 + $0x5f0] sm:$0xff]
        %v731 = vld [vmem:[%s458 + $0x5f8] sm:$0xff]
        %v732 = vld [vmem:[%s458 + $0x600] sm:$0xff]
        %v733 = vld [vmem:[%s458 + $0x608] sm:$0xff]
        %v734 = vld [vmem:[%s458 + $0x610] sm:$0xff]
        %v735 = vld [vmem:[%s458 + $0x618] sm:$0xff]
        %v736 = vld [vmem:[%s458 + $0x620] sm:$0xff]
        %v737 = vld [vmem:[%s458 + $0x628] sm:$0xff]
        %v738 = vld [vmem:[%s458 + $0x630] sm:$0xff]
        %v739 = vld [vmem:[%s458 + $0x638] sm:$0xff]
        %v740 = vld [vmem:[%s458 + $0x640] sm:$0xff]
        %v741 = vld [vmem:[%s458 + $0x648] sm:$0xff]
        %v742 = vld [vmem:[%s458 + $0x650] sm:$0xff]
        %v743 = vld [vmem:[%s458 + $0x658] sm:$0xff]
        %v744 = vld [vmem:[%s458 + $0x660] sm:$0xff]
        %v745 = vld [vmem:[%s458 + $0x668] sm:$0xff]
        %v746 = vld [vmem:[%s458 + $0x670] sm:$0xff]
        %v747 = vld [vmem:[%s458 + $0x678] sm:$0xff]
        %v748 = vld [vmem:[%s458 + $0x680] sm:$0xff]
        %v749 = vld [vmem:[%s458 + $0x688] sm:$0xff]
        %v750 = vld [vmem:[%s458 + $0x690] sm:$0xff]
        %v751 = vld [vmem:[%s458 + $0x698] sm:$0xff]
        %v752 = vld [vmem:[%s458 + $0x6a0] sm:$0xff]
        %v753 = vld [vmem:[%s458 + $0x6a8] sm:$0xff]
        %v754 = vld [vmem:[%s458 + $0x6b0] sm:$0xff]
        %v755 = vld [vmem:[%s458 + $0x6b8] sm:$0xff]
        %v756 = vld [vmem:[%s458 + $0x6c0] sm:$0xff]
        %v757 = vld [vmem:[%s458 + $0x6c8] sm:$0xff]
        %v758 = vld [vmem:[%s458 + $0x6d0] sm:$0xff]
        %v759 = vld [vmem:[%s458 + $0x6d8] sm:$0xff]
        %v760 = vld [vmem:[%s458 + $0x6e0] sm:$0xff]
        %v761 = vld [vmem:[%s458 + $0x6e8] sm:$0xff]
        %v762 = vld [vmem:[%s458 + $0x6f0] sm:$0xff]
        %v763 = vld [vmem:[%s458 + $0x6f8] sm:$0xff]
        %v764 = vld [vmem:[%s458 + $0x700] sm:$0xff]
        %v765 = vld [vmem:[%s458 + $0x708] sm:$0xff]
        %v766 = vld [vmem:[%s458 + $0x710] sm:$0xff]
        %v767 = vld [vmem:[%s458 + $0x718] sm:$0xff]
        %v768 = vld [vmem:[%s458 + $0x720] sm:$0xff]
        %v769 = vld [vmem:[%s458 + $0x728] sm:$0xff]
        %v770 = vld [vmem:[%s458 + $0x730] sm:$0xff]
        %v771 = vld [vmem:[%s458 + $0x738] sm:$0xff]
        %v772 = vld [vmem:[%s458 + $0x740] sm:$0xff]
        %v773 = vld [vmem:[%s458 + $0x748] sm:$0xff]
        %v774 = vld [vmem:[%s458 + $0x750] sm:$0xff]
        %v775 = vld [vmem:[%s458 + $0x758] sm:$0xff]
        %v776 = vld [vmem:[%s458 + $0x760] sm:$0xff]
        %v777 = vld [vmem:[%s458 + $0x768] sm:$0xff]
        %v778 = vld [vmem:[%s458 + $0x770] sm:$0xff]
        %v779 = vld [vmem:[%s458 + $0x778] sm:$0xff]
        %v780 = vld [vmem:[%s458 + $0x780] sm:$0xff]
        %v781 = vld [vmem:[%s458 + $0x788] sm:$0xff]
        %v782 = vld [vmem:[%s458 + $0x790] sm:$0xff]
        %v783 = vld [vmem:[%s458 + $0x798] sm:$0xff]
        %v784 = vld [vmem:[%s458 + $0x7a0] sm:$0xff]
        %v785 = vld [vmem:[%s458 + $0x7a8] sm:$0xff]
        %v786 = vld [vmem:[%s458 + $0x7b0] sm:$0xff]
        %v787 = vld [vmem:[%s458 + $0x7b8] sm:$0xff]
        %v788 = vld [vmem:[%s458 + $0x7c0] sm:$0xff]
        %v789 = vld [vmem:[%s458 + $0x7c8] sm:$0xff]
        %v790 = vld [vmem:[%s458 + $0x7d0] sm:$0xff]
        %v791 = vld [vmem:[%s458 + $0x7d8] sm:$0xff]
        %v792 = vld [vmem:[%s458 + $0x7e0] sm:$0xff]
        %v793 = vld [vmem:[%s458 + $0x7e8] sm:$0xff]
        %v794 = vld [vmem:[%s458 + $0x7f0] sm:$0xff]
        %v795 = vld [vmem:[%s458 + $0x7f8] sm:$0xff]
        %v796 = vld [vmem:[%s458 + $0x800] sm:$0xff]
        %v797 = vld [vmem:[%s458 + $0x808] sm:$0xff]
        %v798 = vld [vmem:[%s458 + $0x810] sm:$0xff]
        %v799 = vld [vmem:[%s458 + $0x818] sm:$0xff]
        %v800 = vld [vmem:[%s458 + $0x820] sm:$0xff]
        %v801 = vld [vmem:[%s458 + $0x828] sm:$0xff]
        %v802 = vld [vmem:[%s458 + $0x830] sm:$0xff]
        %v803 = vld [vmem:[%s458 + $0x838] sm:$0xff]
        %v804 = vld [vmem:[%s458 + $0x840] sm:$0xff]
        %v805 = vld [vmem:[%s458 + $0x848] sm:$0xff]
        %v806 = vld [vmem:[%s458 + $0x850] sm:$0xff]
        %v807 = vld [vmem:[%s458 + $0x858] sm:$0xff]
        %v808 = vld [vmem:[%s458 + $0x860] sm:$0xff]
        %v809 = vld [vmem:[%s458 + $0x868] sm:$0xff]
        %v810 = vld [vmem:[%s458 + $0x870] sm:$0xff]
        %v811 = vld [vmem:[%s458 + $0x878] sm:$0xff]
        %v812 = vld [vmem:[%s458 + $0x880] sm:$0xff]
        %v813 = vld [vmem:[%s458 + $0x888] sm:$0xff]
        %v814 = vld [vmem:[%s458 + $0x890] sm:$0xff]
        %v815 = vld [vmem:[%s458 + $0x898] sm:$0xff]
        %v816 = vld [vmem:[%s458 + $0x8a0] sm:$0xff]
        %v817 = vld [vmem:[%s458 + $0x8a8] sm:$0xff]
        %v818 = vld [vmem:[%s458 + $0x8b0] sm:$0xff]
        %v819 = vld [vmem:[%s458 + $0x8b8] sm:$0xff]
        %v820 = vld [vmem:[%s458 + $0x8c0] sm:$0xff]
        %v821 = vld [vmem:[%s458 + $0x8c8] sm:$0xff]
        %v822 = vld [vmem:[%s458 + $0x8d0] sm:$0xff]
        %v823 = vld [vmem:[%s458 + $0x8d8] sm:$0xff]
        %v824 = vld [vmem:[%s458 + $0x8e0] sm:$0xff]
        %v825 = vld [vmem:[%s458 + $0x8e8] sm:$0xff]
        %v826 = vld [vmem:[%s458 + $0x8f0] sm:$0xff]
        %v827 = vld [vmem:[%s458 + $0x8f8] sm:$0xff]
        %v828 = vld [vmem:[#allocation5] sm:$0xf]
        %v829 = vld [vmem:[#allocation5 + $0x4] sm:$0xf]
        %v830 = vld [vmem:[#allocation5 + $0x8] sm:$0xf]
        %v831 = vld [vmem:[#allocation5 + $0xc] sm:$0xf]
        %v832 = vld [vmem:[#allocation5 + $0x10] sm:$0xf]
        %v833 = vld [vmem:[#allocation5 + $0x14] sm:$0xf]
        %v834 = vld [vmem:[#allocation5 + $0x18] sm:$0xf]
        %v835 = vld [vmem:[#allocation5 + $0x1c] sm:$0xf]
        %v836 = vld [vmem:[#allocation5 + $0x20] sm:$0xf]
        %v837 = vld [vmem:[#allocation5 + $0x24] sm:$0xf]
        %v838 = vld [vmem:[#allocation5 + $0x28] sm:$0xf]
        %v839 = vld [vmem:[#allocation5 + $0x2c] sm:$0xf]
        %v840 = vld [vmem:[#allocation5 + $0x30] sm:$0xf]
        %v841 = vld [vmem:[#allocation5 + $0x34] sm:$0xf]
        %v842 = vld [vmem:[#allocation5 + $0x38] sm:$0xf]
        %v843 = vld [vmem:[#allocation5 + $0x3c] sm:$0xf]
        %v844 = vld [vmem:[#allocation5 + $0x40] sm:$0xf]
        %v845 = vld [vmem:[#allocation5 + $0x44] sm:$0xf]
        %v846 = vld [vmem:[#allocation5 + $0x48] sm:$0xf]
        %v847 = vld [vmem:[#allocation5 + $0x4c] sm:$0xf]
        %v848 = vld [vmem:[#allocation5 + $0x50] sm:$0xf]
        %v849 = vld [vmem:[#allocation5 + $0x54] sm:$0xf]
        %v850 = vld [vmem:[#allocation5 + $0x58] sm:$0xf]
        %v851 = vld [vmem:[#allocation5 + $0x5c] sm:$0xf]
        %v852 = vld [vmem:[#allocation5 + $0x60] sm:$0xf]
        %v853 = vld [vmem:[#allocation5 + $0x64] sm:$0xf]
        %v854 = vld [vmem:[#allocation5 + $0x68] sm:$0xf]
        %v855 = vld [vmem:[#allocation5 + $0x6c] sm:$0xf]
        %v856 = vld [vmem:[#allocation5 + $0x70] sm:$0xf]
        %v857 = vld [vmem:[#allocation5 + $0x74] sm:$0xf]
        %v858 = vld [vmem:[#allocation5 + $0x78] sm:$0xf]
        %v859 = vld [vmem:[#allocation5 + $0x7c] sm:$0xf]
        %v860 = vld [vmem:[#allocation5 + $0x80] sm:$0xf]
        %v861 = vld [vmem:[#allocation5 + $0x84] sm:$0xf]
        %v862 = vld [vmem:[#allocation5 + $0x88] sm:$0xf]
        %v863 = vld [vmem:[#allocation5 + $0x8c] sm:$0xf]
        %v864 = vld [vmem:[#allocation5 + $0x90] sm:$0xf]
        %v865 = vld [vmem:[#allocation5 + $0x94] sm:$0xf]
        %v866 = vld [vmem:[#allocation5 + $0x98] sm:$0xf]
        %v867 = vld [vmem:[#allocation5 + $0x9c] sm:$0xf]
        %v868 = vld [vmem:[#allocation5 + $0xa0] sm:$0xf]
        %v869 = vld [vmem:[#allocation5 + $0xa4] sm:$0xf]
        %v870 = vld [vmem:[#allocation5 + $0xa8] sm:$0xf]
        %v871 = vld [vmem:[#allocation5 + $0xac] sm:$0xf]
        %v872 = vld [vmem:[#allocation5 + $0xb0] sm:$0xf]
        %v873 = vld [vmem:[#allocation5 + $0xb4] sm:$0xf]
        %v874 = vld [vmem:[#allocation5 + $0xb8] sm:$0xf]
        %v875 = vld [vmem:[#allocation5 + $0xbc] sm:$0xf]
        %v876 = vld [vmem:[#allocation5 + $0xc0] sm:$0xf]
        %v877 = vld [vmem:[#allocation5 + $0xc4] sm:$0xf]
        %v878 = vld [vmem:[#allocation5 + $0xc8] sm:$0xf]
        %v879 = vld [vmem:[#allocation5 + $0xcc] sm:$0xf]
        %v880 = vld [vmem:[#allocation5 + $0xd0] sm:$0xf]
        %v881 = vld [vmem:[#allocation5 + $0xd4] sm:$0xf]
        %v882 = vld [vmem:[#allocation5 + $0xd8] sm:$0xf]
        %v883 = vld [vmem:[#allocation5 + $0xdc] sm:$0xf]
        %v884 = vld [vmem:[#allocation5 + $0xe0] sm:$0xf]
        %v885 = vld [vmem:[#allocation5 + $0xe4] sm:$0xf]
        %v886 = vld [vmem:[#allocation5 + $0xe8] sm:$0xf]
        %v887 = vld [vmem:[#allocation5 + $0xec] sm:$0xf]
        %v888 = vld [vmem:[#allocation5 + $0xf0] sm:$0xf]
        %v889 = vld [vmem:[#allocation5 + $0xf4] sm:$0xf]
        %v890 = vld [vmem:[#allocation5 + $0xf8] sm:$0xf]
        %v891 = vld [vmem:[#allocation5 + $0xfc] sm:$0xf]
        %v892 = vld [vmem:[#allocation5 + $0x100] sm:$0xf]
        %v893 = vld [vmem:[#allocation5 + $0x104] sm:$0xf]
        %v894 = vld [vmem:[#allocation5 + $0x108] sm:$0xf]
        %v895 = vld [vmem:[#allocation5 + $0x10c] sm:$0xf]
        %v896 = vld [vmem:[#allocation5 + $0x110] sm:$0xf]
        %v897 = vld [vmem:[#allocation5 + $0x114] sm:$0xf]
        %v898 = vld [vmem:[#allocation5 + $0x118] sm:$0xf]
        %v899 = vld [vmem:[#allocation5 + $0x11c] sm:$0xf]
        %v900 = vld [vmem:[#allocation5 + $0x120] sm:$0xf]
        %v901 = vld [vmem:[#allocation5 + $0x124] sm:$0xf]
        %v902 = vld [vmem:[#allocation5 + $0x128] sm:$0xf]
        %v903 = vld [vmem:[#allocation5 + $0x12c] sm:$0xf]
        %v904 = vld [vmem:[#allocation5 + $0x130] sm:$0xf]
        %v905 = vld [vmem:[#allocation5 + $0x134] sm:$0xf]
        %v906 = vld [vmem:[#allocation5 + $0x138] sm:$0xf]
        %v907 = vld [vmem:[#allocation5 + $0x13c] sm:$0xf]
        %v908 = vld [vmem:[#allocation5 + $0x140] sm:$0xf]
        %v909 = vld [vmem:[#allocation5 + $0x144] sm:$0xf]
        %v910 = vld [vmem:[#allocation5 + $0x148] sm:$0xf]
        %v911 = vld [vmem:[#allocation5 + $0x14c] sm:$0xf]
        %v912 = vld [vmem:[#allocation5 + $0x150] sm:$0xf]
        %v913 = vld [vmem:[#allocation5 + $0x154] sm:$0xf]
        %v914 = vld [vmem:[#allocation5 + $0x158] sm:$0xf]
        %v915 = vld [vmem:[#allocation5 + $0x15c] sm:$0xf]
        %v916 = vld [vmem:[#allocation5 + $0x160] sm:$0xf]
        %v917 = vld [vmem:[#allocation5 + $0x164] sm:$0xf]
        %v918 = vld [vmem:[#allocation5 + $0x168] sm:$0xf]
        %v919 = vld [vmem:[#allocation5 + $0x16c] sm:$0xf]
        %v920 = vld [vmem:[#allocation5 + $0x170] sm:$0xf]
        %v921 = vld [vmem:[#allocation5 + $0x174] sm:$0xf]
        %v922 = vld [vmem:[#allocation5 + $0x178] sm:$0xf]
        %v923 = vld [vmem:[#allocation5 + $0x17c] sm:$0xf]
        %v924 = vld [vmem:[#allocation5 + $0x180] sm:$0xf]
        %v925 = vld [vmem:[#allocation5 + $0x184] sm:$0xf]
        %v926 = vld [vmem:[#allocation5 + $0x188] sm:$0xf]
        %v927 = vld [vmem:[#allocation5 + $0x18c] sm:$0xf]
        %v928 = vld [vmem:[#allocation5 + $0x190] sm:$0xf]
        %v929 = vld [vmem:[#allocation5 + $0x194] sm:$0xf]
        %v930 = vld [vmem:[#allocation5 + $0x198] sm:$0xf]
        %v931 = vld [vmem:[#allocation5 + $0x19c] sm:$0xf]
        %v932 = vld [vmem:[#allocation5 + $0x1a0] sm:$0xf]
        %v933 = vld [vmem:[#allocation5 + $0x1a4] sm:$0xf]
        %v934 = vld [vmem:[#allocation5 + $0x1a8] sm:$0xf]
        %v935 = vld [vmem:[#allocation5 + $0x1ac] sm:$0xf]
        %v936 = vld [vmem:[#allocation5 + $0x1b0] sm:$0xf]
        %v937 = vld [vmem:[#allocation5 + $0x1b4] sm:$0xf]
        %v938 = vld [vmem:[#allocation5 + $0x1b8] sm:$0xf]
        %v939 = vld [vmem:[#allocation5 + $0x1bc] sm:$0xf]
        %v940 = vld [vmem:[#allocation5 + $0x1c0] sm:$0xf]
        %v941 = vld [vmem:[#allocation5 + $0x1c4] sm:$0xf]
        %v942 = vld [vmem:[#allocation5 + $0x1c8] sm:$0xf]
        %v943 = vld [vmem:[#allocation5 + $0x1cc] sm:$0xf]
        %v944 = vld [vmem:[#allocation5 + $0x1d0] sm:$0xf]
        %v945 = vld [vmem:[#allocation5 + $0x1d4] sm:$0xf]
        %v946 = vld [vmem:[#allocation5 + $0x1d8] sm:$0xf]
        %v947 = vld [vmem:[#allocation5 + $0x1dc] sm:$0xf]
        %v948 = vld [vmem:[#allocation5 + $0x1e0] sm:$0xf]
        %v949 = vld [vmem:[#allocation5 + $0x1e4] sm:$0xf]
        %v950 = vld [vmem:[#allocation5 + $0x1e8] sm:$0xf]
        %v951 = vld [vmem:[#allocation5 + $0x1ec] sm:$0xf]
        %v952 = vld [vmem:[#allocation5 + $0x1f0] sm:$0xf]
        %v953 = vld [vmem:[#allocation5 + $0x1f4] sm:$0xf]
        %v954 = vld [vmem:[#allocation5 + $0x1f8] sm:$0xf]
        %v955 = vld [vmem:[#allocation5 + $0x1fc] sm:$0xf]
        %v956 = vld [vmem:[#allocation5 + $0x200] sm:$0xf]
        %v957 = vld [vmem:[#allocation5 + $0x204] sm:$0xf]
        %v958 = vld [vmem:[#allocation5 + $0x208] sm:$0xf]
        %v959 = vld [vmem:[#allocation5 + $0x20c] sm:$0xf]
        %v960 = vld [vmem:[#allocation5 + $0x210] sm:$0xf]
        %v961 = vld [vmem:[#allocation5 + $0x214] sm:$0xf]
        %v962 = vld [vmem:[#allocation5 + $0x218] sm:$0xf]
        %v963 = vld [vmem:[#allocation5 + $0x21c] sm:$0xf]
        %v964 = vld [vmem:[#allocation5 + $0x220] sm:$0xf]
        %v965 = vld [vmem:[#allocation5 + $0x224] sm:$0xf]
        %v966 = vld [vmem:[#allocation5 + $0x228] sm:$0xf]
        %v967 = vld [vmem:[#allocation5 + $0x22c] sm:$0xf]
        %v968 = vld [vmem:[#allocation5 + $0x230] sm:$0xf]
        %v969 = vld [vmem:[#allocation5 + $0x234] sm:$0xf]
        %v970 = vld [vmem:[#allocation5 + $0x238] sm:$0xf]
        %v971 = vld [vmem:[#allocation5 + $0x23c] sm:$0xf]
        %v972 = vld [vmem:[#allocation5 + $0x240] sm:$0xf]
        %v973 = vld [vmem:[#allocation5 + $0x244] sm:$0xf]
        %v974 = vld [vmem:[#allocation5 + $0x248] sm:$0xf]
        %v975 = vld [vmem:[#allocation5 + $0x24c] sm:$0xf]
        %v976 = vld [vmem:[#allocation5 + $0x250] sm:$0xf]
        %v977 = vld [vmem:[#allocation5 + $0x254] sm:$0xf]
        %v978 = vld [vmem:[#allocation5 + $0x258] sm:$0xf]
        %v979 = vld [vmem:[#allocation5 + $0x25c] sm:$0xf]
        %v980 = vld [vmem:[#allocation5 + $0x260] sm:$0xf]
        %v981 = vld [vmem:[#allocation5 + $0x264] sm:$0xf]
        %v982 = vld [vmem:[#allocation5 + $0x268] sm:$0xf]
        %v983 = vld [vmem:[#allocation5 + $0x26c] sm:$0xf]
        %v984 = vld [vmem:[#allocation5 + $0x270] sm:$0xf]
        %v985 = vld [vmem:[#allocation5 + $0x274] sm:$0xf]
        %v986 = vld [vmem:[#allocation5 + $0x278] sm:$0xf]
        %v987 = vld [vmem:[#allocation5 + $0x27c] sm:$0xf]
        %v988 = vld [vmem:[#allocation5 + $0x280] sm:$0xf]
        %v989 = vld [vmem:[#allocation5 + $0x284] sm:$0xf]
        %v990 = vld [vmem:[#allocation5 + $0x288] sm:$0xf]
        %v991 = vld [vmem:[#allocation5 + $0x28c] sm:$0xf]
        %v992 = vld [vmem:[#allocation5 + $0x290] sm:$0xf]
        %v993 = vld [vmem:[#allocation5 + $0x294] sm:$0xf]
        %v994 = vld [vmem:[#allocation5 + $0x298] sm:$0xf]
        %v995 = vld [vmem:[#allocation5 + $0x29c] sm:$0xf]
        %v996 = vld [vmem:[#allocation5 + $0x2a0] sm:$0xf]
        %v997 = vld [vmem:[#allocation5 + $0x2a4] sm:$0xf]
        %v998 = vld [vmem:[#allocation5 + $0x2a8] sm:$0xf]
        %v999 = vld [vmem:[#allocation5 + $0x2ac] sm:$0xf]
        %v1000 = vld [vmem:[#allocation5 + $0x2b0] sm:$0xf]
        %v1001 = vld [vmem:[#allocation5 + $0x2b4] sm:$0xf]
        %v1002 = vld [vmem:[#allocation5 + $0x2b8] sm:$0xf]
        %v1003 = vld [vmem:[#allocation5 + $0x2bc] sm:$0xf]
        %v1004 = vld [vmem:[#allocation5 + $0x2c0] sm:$0xf]
        %v1005 = vld [vmem:[#allocation5 + $0x2c4] sm:$0xf]
        %v1006 = vld [vmem:[#allocation5 + $0x2c8] sm:$0xf]
        %v1007 = vld [vmem:[#allocation5 + $0x2cc] sm:$0xf]
        %v1008 = vld [vmem:[#allocation5 + $0x2d0] sm:$0xf]
        %v1009 = vld [vmem:[#allocation5 + $0x2d4] sm:$0xf]
        %v1010 = vld [vmem:[#allocation5 + $0x2d8] sm:$0xf]
        %v1011 = vld [vmem:[#allocation5 + $0x2dc] sm:$0xf]
        %v1012 = vld [vmem:[#allocation5 + $0x2e0] sm:$0xf]
        %v1013 = vld [vmem:[#allocation5 + $0x2e4] sm:$0xf]
        %v1014 = vld [vmem:[#allocation5 + $0x2e8] sm:$0xf]
        %v1015 = vld [vmem:[#allocation5 + $0x2ec] sm:$0xf]
        %v1016 = vld [vmem:[#allocation5 + $0x2f0] sm:$0xf]
        %v1017 = vld [vmem:[#allocation5 + $0x2f4] sm:$0xf]
        %v1018 = vld [vmem:[#allocation5 + $0x2f8] sm:$0xf]
        %v1019 = vld [vmem:[#allocation5 + $0x2fc] sm:$0xf]
        %v1020 = vld [vmem:[#allocation5 + $0x300] sm:$0xf]
        %v1021 = vld [vmem:[#allocation5 + $0x304] sm:$0xf]
        %v1022 = vld [vmem:[#allocation5 + $0x308] sm:$0xf]
        %v1023 = vld [vmem:[#allocation5 + $0x30c] sm:$0xf]
        %v1024 = vld [vmem:[#allocation5 + $0x310] sm:$0xf]
        %v1025 = vld [vmem:[#allocation5 + $0x314] sm:$0xf]
        %v1026 = vld [vmem:[#allocation5 + $0x318] sm:$0xf]
        %v1027 = vld [vmem:[#allocation5 + $0x31c] sm:$0xf]
        %v1028 = vld [vmem:[#allocation5 + $0x320] sm:$0xf]
        %v1029 = vld [vmem:[#allocation5 + $0x324] sm:$0xf]
        %v1030 = vld [vmem:[#allocation5 + $0x328] sm:$0xf]
        %v1031 = vld [vmem:[#allocation5 + $0x32c] sm:$0xf]
        %v1032 = vld [vmem:[#allocation5 + $0x330] sm:$0xf]
        %v1033 = vld [vmem:[#allocation5 + $0x334] sm:$0xf]
        %v1034 = vld [vmem:[#allocation5 + $0x338] sm:$0xf]
        %v1035 = vld [vmem:[#allocation5 + $0x33c] sm:$0xf]
        %v1036 = vld [vmem:[#allocation5 + $0x340] sm:$0xf]
        %v1037 = vld [vmem:[#allocation5 + $0x344] sm:$0xf]
        %v1038 = vld [vmem:[#allocation5 + $0x348] sm:$0xf]
        %v1039 = vld [vmem:[#allocation5 + $0x34c] sm:$0xf]
        %v1040 = vld [vmem:[#allocation5 + $0x350] sm:$0xf]
        %v1041 = vld [vmem:[#allocation5 + $0x354] sm:$0xf]
        %v1042 = vld [vmem:[#allocation5 + $0x358] sm:$0xf]
        %v1043 = vld [vmem:[#allocation5 + $0x35c] sm:$0xf]
        %v1044 = vld [vmem:[#allocation5 + $0x360] sm:$0xf]
        %v1045 = vld [vmem:[#allocation5 + $0x364] sm:$0xf]
        %v1046 = vld [vmem:[#allocation5 + $0x368] sm:$0xf]
        %v1047 = vld [vmem:[#allocation5 + $0x36c] sm:$0xf]
        %v1048 = vld [vmem:[#allocation5 + $0x370] sm:$0xf]
        %v1049 = vld [vmem:[#allocation5 + $0x374] sm:$0xf]
        %v1050 = vld [vmem:[#allocation5 + $0x378] sm:$0xf]
        %v1051 = vld [vmem:[#allocation5 + $0x37c] sm:$0xf]
        %v1052 = vld [vmem:[#allocation5 + $0x380] sm:$0xf]
        %v1053 = vld [vmem:[#allocation5 + $0x384] sm:$0xf]
        %v1054 = vld [vmem:[#allocation5 + $0x388] sm:$0xf]
        %v1055 = vld [vmem:[#allocation5 + $0x38c] sm:$0xf]
        %v1056 = vld [vmem:[#allocation5 + $0x390] sm:$0xf]
        %v1057 = vld [vmem:[#allocation5 + $0x394] sm:$0xf]
        %v1058 = vld [vmem:[#allocation5 + $0x398] sm:$0xf]
        %v1059 = vld [vmem:[#allocation5 + $0x39c] sm:$0xf]
        %v1060 = vld [vmem:[#allocation5 + $0x3a0] sm:$0xf]
        %v1061 = vld [vmem:[#allocation5 + $0x3a4] sm:$0xf]
        %v1062 = vld [vmem:[#allocation5 + $0x3a8] sm:$0xf]
        %v1063 = vld [vmem:[#allocation5 + $0x3ac] sm:$0xf]
        %v1064 = vld [vmem:[#allocation5 + $0x3b0] sm:$0xf]
        %v1065 = vld [vmem:[#allocation5 + $0x3b4] sm:$0xf]
        %v1066 = vld [vmem:[#allocation5 + $0x3b8] sm:$0xf]
        %v1067 = vld [vmem:[#allocation5 + $0x3bc] sm:$0xf]
        %v1068 = vld [vmem:[#allocation5 + $0x3c0] sm:$0xf]
        %v1069 = vld [vmem:[#allocation5 + $0x3c4] sm:$0xf]
        %v1070 = vld [vmem:[#allocation5 + $0x3c8] sm:$0xf]
        %v1071 = vld [vmem:[#allocation5 + $0x3cc] sm:$0xf]
        %v1072 = vld [vmem:[#allocation5 + $0x3d0] sm:$0xf]
        %v1073 = vld [vmem:[#allocation5 + $0x3d4] sm:$0xf]
        %v1074 = vld [vmem:[#allocation5 + $0x3d8] sm:$0xf]
        %v1075 = vld [vmem:[#allocation5 + $0x3dc] sm:$0xf]
        %v1076 = vld [vmem:[#allocation5 + $0x3e0] sm:$0xf]
        %v1077 = vld [vmem:[#allocation5 + $0x3e4] sm:$0xf]
        %v1078 = vld [vmem:[#allocation5 + $0x3e8] sm:$0xf]
        %v1079 = vld [vmem:[#allocation5 + $0x3ec] sm:$0xf]
        %v1080 = vld [vmem:[#allocation5 + $0x3f0] sm:$0xf]
        %v1081 = vld [vmem:[#allocation5 + $0x3f4] sm:$0xf]
        %v1082 = vld [vmem:[#allocation5 + $0x3f8] sm:$0xf]
        %v1083 = vld [vmem:[#allocation5 + $0x3fc] sm:$0xf]
        %v1084 = vld [vmem:[#allocation5 + $0x400] sm:$0xf]
        %v1085 = vld [vmem:[#allocation5 + $0x404] sm:$0xf]
        %v1086 = vld [vmem:[#allocation5 + $0x408] sm:$0xf]
        %v1087 = vld [vmem:[#allocation5 + $0x40c] sm:$0xf]
        %v1088 = vld [vmem:[#allocation5 + $0x410] sm:$0xf]
        %v1089 = vld [vmem:[#allocation5 + $0x414] sm:$0xf]
        %v1090 = vld [vmem:[#allocation5 + $0x418] sm:$0xf]
        %v1091 = vld [vmem:[#allocation5 + $0x41c] sm:$0xf]
        %v1092 = vld [vmem:[#allocation5 + $0x420] sm:$0xf]
        %v1093 = vld [vmem:[#allocation5 + $0x424] sm:$0xf]
        %v1094 = vld [vmem:[#allocation5 + $0x428] sm:$0xf]
        %v1095 = vld [vmem:[#allocation5 + $0x42c] sm:$0xf]
        %v1096 = vld [vmem:[#allocation5 + $0x430] sm:$0xf]
        %v1097 = vld [vmem:[#allocation5 + $0x434] sm:$0xf]
        %v1098 = vld [vmem:[#allocation5 + $0x438] sm:$0xf]
        %v1099 = vld [vmem:[#allocation5 + $0x43c] sm:$0xf]
        %v1100 = vld [vmem:[#allocation5 + $0x440] sm:$0xf]
        %v1101 = vld [vmem:[#allocation5 + $0x444] sm:$0xf]
        %v1102 = vld [vmem:[#allocation5 + $0x448] sm:$0xf]
        %v1103 = vld [vmem:[#allocation5 + $0x44c] sm:$0xf]
        %v1104 = vld [vmem:[#allocation5 + $0x450] sm:$0xf]
        %v1105 = vld [vmem:[#allocation5 + $0x454] sm:$0xf]
        %v1106 = vld [vmem:[#allocation5 + $0x458] sm:$0xf]
        %v1107 = vld [vmem:[#allocation5 + $0x45c] sm:$0xf]
        %v1108 = vld [vmem:[#allocation5 + $0x460] sm:$0xf]
        %v1109 = vld [vmem:[#allocation5 + $0x464] sm:$0xf]
        %v1110 = vld [vmem:[#allocation5 + $0x468] sm:$0xf]
        %v1111 = vld [vmem:[#allocation5 + $0x46c] sm:$0xf]
        %v1112 = vld [vmem:[#allocation5 + $0x470] sm:$0xf]
        %v1113 = vld [vmem:[#allocation5 + $0x474] sm:$0xf]
        %v1114 = vld [vmem:[#allocation5 + $0x478] sm:$0xf]
        %v1115 = vld [vmem:[#allocation5 + $0x47c] sm:$0xf]
        %v1116 = vld [vmem:[#allocation5 + $0x480] sm:$0xf]
        %v1117 = vld [vmem:[#allocation5 + $0x484] sm:$0xf]
        %v1118 = vld [vmem:[#allocation5 + $0x488] sm:$0xf]
        %v1119 = vld [vmem:[#allocation5 + $0x48c] sm:$0xf]
        %v1120 = vld [vmem:[#allocation5 + $0x490] sm:$0xf]
        %v1121 = vld [vmem:[#allocation5 + $0x494] sm:$0xf]
        %v1122 = vld [vmem:[#allocation5 + $0x498] sm:$0xf]
        %v1123 = vld [vmem:[#allocation5 + $0x49c] sm:$0xf]
        %v1124 = vld [vmem:[#allocation5 + $0x4a0] sm:$0xf]
        %v1125 = vld [vmem:[#allocation5 + $0x4a4] sm:$0xf]
        %v1126 = vld [vmem:[#allocation5 + $0x4a8] sm:$0xf]
        %v1127 = vld [vmem:[#allocation5 + $0x4ac] sm:$0xf]
        %v1128 = vld [vmem:[#allocation5 + $0x4b0] sm:$0xf]
        %v1129 = vld [vmem:[#allocation5 + $0x4b4] sm:$0xf]
        %v1130 = vld [vmem:[#allocation5 + $0x4b8] sm:$0xf]
        %v1131 = vld [vmem:[#allocation5 + $0x4bc] sm:$0xf]
        %v1132 = vld [vmem:[#allocation5 + $0x4c0] sm:$0xf]
        %v1133 = vld [vmem:[#allocation5 + $0x4c4] sm:$0xf]
        %v1134 = vld [vmem:[#allocation5 + $0x4c8] sm:$0xf]
        %v1135 = vld [vmem:[#allocation5 + $0x4cc] sm:$0xf]
        %v1136 = vld [vmem:[#allocation5 + $0x4d0] sm:$0xf]
        %v1137 = vld [vmem:[#allocation5 + $0x4d4] sm:$0xf]
        %v1138 = vld [vmem:[#allocation5 + $0x4d8] sm:$0xf]
        %v1139 = vld [vmem:[#allocation5 + $0x4dc] sm:$0xf]
        %v1140 = vld [vmem:[#allocation5 + $0x4e0] sm:$0xf]
        %v1141 = vld [vmem:[#allocation5 + $0x4e4] sm:$0xf]
        %v1142 = vld [vmem:[#allocation5 + $0x4e8] sm:$0xf]
        %v1143 = vld [vmem:[#allocation5 + $0x4ec] sm:$0xf]
        %v1144 = vld [vmem:[#allocation5 + $0x4f0] sm:$0xf]
        %v1145 = vld [vmem:[#allocation5 + $0x4f4] sm:$0xf]
        %v1146 = vld [vmem:[#allocation5 + $0x4f8] sm:$0xf]
        %v1147 = vld [vmem:[#allocation5 + $0x4fc] sm:$0xf]
        %v1148 = vld [vmem:[#allocation5 + $0x500] sm:$0xf]
        %v1149 = vld [vmem:[#allocation5 + $0x504] sm:$0xf]
        %v1150 = vld [vmem:[#allocation5 + $0x508] sm:$0xf]
        %v1151 = vld [vmem:[#allocation5 + $0x50c] sm:$0xf]
        %v1152 = vld [vmem:[#allocation5 + $0x510] sm:$0xf]
        %v1153 = vld [vmem:[#allocation5 + $0x514] sm:$0xf]
        %v1154 = vld [vmem:[#allocation5 + $0x518] sm:$0xf]
        %v1155 = vld [vmem:[#allocation5 + $0x51c] sm:$0xf]
        %v1156 = vld [vmem:[#allocation5 + $0x520] sm:$0xf]
        %v1157 = vld [vmem:[#allocation5 + $0x524] sm:$0xf]
        %v1158 = vld [vmem:[#allocation5 + $0x528] sm:$0xf]
        %v1159 = vld [vmem:[#allocation5 + $0x52c] sm:$0xf]
        %v1160 = vld [vmem:[#allocation5 + $0x530] sm:$0xf]
        %v1161 = vld [vmem:[#allocation5 + $0x534] sm:$0xf]
        %v1162 = vld [vmem:[#allocation5 + $0x538] sm:$0xf]
        %v1163 = vld [vmem:[#allocation5 + $0x53c] sm:$0xf]
        %v1164 = vld [vmem:[#allocation5 + $0x540] sm:$0xf]
        %v1165 = vld [vmem:[#allocation5 + $0x544] sm:$0xf]
        %v1166 = vld [vmem:[#allocation5 + $0x548] sm:$0xf]
        %v1167 = vld [vmem:[#allocation5 + $0x54c] sm:$0xf]
        %v1168 = vld [vmem:[#allocation5 + $0x550] sm:$0xf]
        %v1169 = vld [vmem:[#allocation5 + $0x554] sm:$0xf]
        %v1170 = vld [vmem:[#allocation5 + $0x558] sm:$0xf]
        %v1171 = vld [vmem:[#allocation5 + $0x55c] sm:$0xf]
        %v1172 = vld [vmem:[#allocation5 + $0x560] sm:$0xf]
        %v1173 = vld [vmem:[#allocation5 + $0x564] sm:$0xf]
        %v1174 = vld [vmem:[#allocation5 + $0x568] sm:$0xf]
        %v1175 = vld [vmem:[#allocation5 + $0x56c] sm:$0xf]
        %v1176 = vld [vmem:[#allocation5 + $0x570] sm:$0xf]
        %v1177 = vld [vmem:[#allocation5 + $0x574] sm:$0xf]
        %v1178 = vld [vmem:[#allocation5 + $0x578] sm:$0xf]
        %v1179 = vld [vmem:[#allocation5 + $0x57c] sm:$0xf]
        %v1180 = vld [vmem:[#allocation5 + $0x580] sm:$0xf]
        %v1181 = vld [vmem:[#allocation5 + $0x584] sm:$0xf]
        %v1182 = vld [vmem:[#allocation5 + $0x588] sm:$0xf]
        %v1183 = vld [vmem:[#allocation5 + $0x58c] sm:$0xf]
        %v1184 = vld [vmem:[#allocation5 + $0x590] sm:$0xf]
        %v1185 = vld [vmem:[#allocation5 + $0x594] sm:$0xf]
        %v1186 = vld [vmem:[#allocation5 + $0x598] sm:$0xf]
        %v1187 = vld [vmem:[#allocation5 + $0x59c] sm:$0xf]
        %v1188 = vld [vmem:[#allocation5 + $0x5a0] sm:$0xf]
        %v1189 = vld [vmem:[#allocation5 + $0x5a4] sm:$0xf]
        %v1190 = vld [vmem:[#allocation5 + $0x5a8] sm:$0xf]
        %v1191 = vld [vmem:[#allocation5 + $0x5ac] sm:$0xf]
        %v1192 = vld [vmem:[#allocation5 + $0x5b0] sm:$0xf]
        %v1193 = vld [vmem:[#allocation5 + $0x5b4] sm:$0xf]
        %v1194 = vld [vmem:[#allocation5 + $0x5b8] sm:$0xf]
        %v1195 = vld [vmem:[#allocation5 + $0x5bc] sm:$0xf]
        %v1196 = vld [vmem:[#allocation5 + $0x5c0] sm:$0xf]
        %v1197 = vld [vmem:[#allocation5 + $0x5c4] sm:$0xf]
        %v1198 = vld [vmem:[#allocation5 + $0x5c8] sm:$0xf]
        %v1199 = vld [vmem:[#allocation5 + $0x5cc] sm:$0xf]
        %v1200 = vld [vmem:[#allocation5 + $0x5d0] sm:$0xf]
        %v1201 = vld [vmem:[#allocation5 + $0x5d4] sm:$0xf]
        %v1202 = vld [vmem:[#allocation5 + $0x5d8] sm:$0xf]
        %v1203 = vld [vmem:[#allocation5 + $0x5dc] sm:$0xf]
        %v1204 = vld [vmem:[#allocation5 + $0x5e0] sm:$0xf]
        %v1205 = vld [vmem:[#allocation5 + $0x5e4] sm:$0xf]
        %v1206 = vld [vmem:[#allocation5 + $0x5e8] sm:$0xf]
        %v1207 = vld [vmem:[#allocation5 + $0x5ec] sm:$0xf]
        %v1208 = vld [vmem:[#allocation5 + $0x5f0] sm:$0xf]
        %v1209 = vld [vmem:[#allocation5 + $0x5f4] sm:$0xf]
        %v1210 = vld [vmem:[#allocation5 + $0x5f8] sm:$0xf]
        %v1211 = vld [vmem:[#allocation5 + $0x5fc] sm:$0xf]
        %v1212 = vld [vmem:[#allocation5 + $0x600] sm:$0xf]
        %v1213 = vld [vmem:[#allocation5 + $0x604] sm:$0xf]
        %v1214 = vld [vmem:[#allocation5 + $0x608] sm:$0xf]
        %v1215 = vld [vmem:[#allocation5 + $0x60c] sm:$0xf]
        %v1216 = vld [vmem:[#allocation5 + $0x610] sm:$0xf]
        %v1217 = vld [vmem:[#allocation5 + $0x614] sm:$0xf]
        %v1218 = vld [vmem:[#allocation5 + $0x618] sm:$0xf]
        %v1219 = vld [vmem:[#allocation5 + $0x61c] sm:$0xf]
        %v1220 = vld [vmem:[#allocation5 + $0x620] sm:$0xf]
        %v1221 = vld [vmem:[#allocation5 + $0x624] sm:$0xf]
        %v1222 = vld [vmem:[#allocation5 + $0x628] sm:$0xf]
        %v1223 = vld [vmem:[#allocation5 + $0x62c] sm:$0xf]
        %v1224 = vld [vmem:[#allocation5 + $0x630] sm:$0xf]
        %v1225 = vld [vmem:[#allocation5 + $0x634] sm:$0xf]
        %v1226 = vld [vmem:[#allocation5 + $0x638] sm:$0xf]
        %v1227 = vld [vmem:[#allocation5 + $0x63c] sm:$0xf]
        %v1228 = vld [vmem:[#allocation5 + $0x640] sm:$0xf]
        %v1229 = vld [vmem:[#allocation5 + $0x644] sm:$0xf]
        %v1230 = vld [vmem:[#allocation5 + $0x648] sm:$0xf]
        %v1231 = vld [vmem:[#allocation5 + $0x64c] sm:$0xf]
        %v1232 = vld [vmem:[#allocation5 + $0x650] sm:$0xf]
        %v1233 = vld [vmem:[#allocation5 + $0x654] sm:$0xf]
        %v1234 = vld [vmem:[#allocation5 + $0x658] sm:$0xf]
        %v1235 = vld [vmem:[#allocation5 + $0x65c] sm:$0xf]
        %v1236 = vld [vmem:[#allocation5 + $0x660] sm:$0xf]
        %v1237 = vld [vmem:[#allocation5 + $0x664] sm:$0xf]
        %v1238 = vld [vmem:[#allocation5 + $0x668] sm:$0xf]
        %v1239 = vld [vmem:[#allocation5 + $0x66c] sm:$0xf]
        %v1240 = vld [vmem:[#allocation5 + $0x670] sm:$0xf]
        %v1241 = vld [vmem:[#allocation5 + $0x674] sm:$0xf]
        %v1242 = vld [vmem:[#allocation5 + $0x678] sm:$0xf]
        %v1243 = vld [vmem:[#allocation5 + $0x67c] sm:$0xf]
        %v1244 = vld [vmem:[#allocation5 + $0x680] sm:$0xf]
        %v1245 = vld [vmem:[#allocation5 + $0x684] sm:$0xf]
        %v1246 = vld [vmem:[#allocation5 + $0x688] sm:$0xf]
        %v1247 = vld [vmem:[#allocation5 + $0x68c] sm:$0xf]
        %v1248 = vld [vmem:[#allocation5 + $0x690] sm:$0xf]
        %v1249 = vld [vmem:[#allocation5 + $0x694] sm:$0xf]
        %v1250 = vld [vmem:[#allocation5 + $0x698] sm:$0xf]
        %v1251 = vld [vmem:[#allocation5 + $0x69c] sm:$0xf]
        %v1252 = vld [vmem:[#allocation5 + $0x6a0] sm:$0xf]
        %v1253 = vld [vmem:[#allocation5 + $0x6a4] sm:$0xf]
        %v1254 = vld [vmem:[#allocation5 + $0x6a8] sm:$0xf]
        %v1255 = vld [vmem:[#allocation5 + $0x6ac] sm:$0xf]
        %v1256 = vld [vmem:[#allocation5 + $0x6b0] sm:$0xf]
        %v1257 = vld [vmem:[#allocation5 + $0x6b4] sm:$0xf]
        %v1258 = vld [vmem:[#allocation5 + $0x6b8] sm:$0xf]
        %v1259 = vld [vmem:[#allocation5 + $0x6bc] sm:$0xf]
        %v1260 = vld [vmem:[#allocation5 + $0x6c0] sm:$0xf]
        %v1261 = vld [vmem:[#allocation5 + $0x6c4] sm:$0xf]
        %v1262 = vld [vmem:[#allocation5 + $0x6c8] sm:$0xf]
        %v1263 = vld [vmem:[#allocation5 + $0x6cc] sm:$0xf]
        %v1264 = vld [vmem:[#allocation5 + $0x6d0] sm:$0xf]
        %v1265 = vld [vmem:[#allocation5 + $0x6d4] sm:$0xf]
        %v1266 = vld [vmem:[#allocation5 + $0x6d8] sm:$0xf]
        %v1267 = vld [vmem:[#allocation5 + $0x6dc] sm:$0xf]
        %v1268 = vld [vmem:[#allocation5 + $0x6e0] sm:$0xf]
        %v1269 = vld [vmem:[#allocation5 + $0x6e4] sm:$0xf]
        %v1270 = vld [vmem:[#allocation5 + $0x6e8] sm:$0xf]
        %v1271 = vld [vmem:[#allocation5 + $0x6ec] sm:$0xf]
        %v1272 = vld [vmem:[#allocation5 + $0x6f0] sm:$0xf]
        %v1273 = vld [vmem:[#allocation5 + $0x6f4] sm:$0xf]
        %v1274 = vld [vmem:[#allocation5 + $0x6f8] sm:$0xf]
        %v1275 = vld [vmem:[#allocation5 + $0x6fc] sm:$0xf]
        %v1276 = vld [vmem:[#allocation5 + $0x700] sm:$0xf]
        %v1277 = vld [vmem:[#allocation5 + $0x704] sm:$0xf]
        %v1278 = vld [vmem:[#allocation5 + $0x708] sm:$0xf]
        %v1279 = vld [vmem:[#allocation5 + $0x70c] sm:$0xf]
        %v1280 = vld [vmem:[#allocation5 + $0x710] sm:$0xf]
        %v1281 = vld [vmem:[#allocation5 + $0x714] sm:$0xf]
        %v1282 = vld [vmem:[#allocation5 + $0x718] sm:$0xf]
        %v1283 = vld [vmem:[#allocation5 + $0x71c] sm:$0xf]
        %v1284 = vld [vmem:[#allocation5 + $0x720] sm:$0xf]
        %v1285 = vld [vmem:[#allocation5 + $0x724] sm:$0xf]
        %v1286 = vld [vmem:[#allocation5 + $0x728] sm:$0xf]
        %v1287 = vld [vmem:[#allocation5 + $0x72c] sm:$0xf]
        %v1288 = vld [vmem:[#allocation5 + $0x730] sm:$0xf]
        %v1289 = vld [vmem:[#allocation5 + $0x734] sm:$0xf]
        %v1290 = vld [vmem:[#allocation5 + $0x738] sm:$0xf]
        %v1291 = vld [vmem:[#allocation5 + $0x73c] sm:$0xf]
        %v1292 = vld [vmem:[#allocation5 + $0x740] sm:$0xf]
        %v1293 = vld [vmem:[#allocation5 + $0x744] sm:$0xf]
        %v1294 = vld [vmem:[#allocation5 + $0x748] sm:$0xf]
        %v1295 = vld [vmem:[#allocation5 + $0x74c] sm:$0xf]
        %v1296 = vld [vmem:[#allocation5 + $0x750] sm:$0xf]
        %v1297 = vld [vmem:[#allocation5 + $0x754] sm:$0xf]
        %v1298 = vld [vmem:[#allocation5 + $0x758] sm:$0xf]
        %v1299 = vld [vmem:[#allocation5 + $0x75c] sm:$0xf]
        %v1300 = vld [vmem:[#allocation5 + $0x760] sm:$0xf]
        %v1301 = vld [vmem:[#allocation5 + $0x764] sm:$0xf]
        %v1302 = vld [vmem:[#allocation5 + $0x768] sm:$0xf]
        %v1303 = vld [vmem:[#allocation5 + $0x76c] sm:$0xf]
        %v1304 = vld [vmem:[#allocation5 + $0x770] sm:$0xf]
        %v1305 = vld [vmem:[#allocation5 + $0x774] sm:$0xf]
        %v1306 = vld [vmem:[#allocation5 + $0x778] sm:$0xf]
        %v1307 = vld [vmem:[#allocation5 + $0x77c] sm:$0xf]
        %v1308 = vld [vmem:[#allocation5 + $0x780] sm:$0xf]
        %v1309 = vld [vmem:[#allocation5 + $0x784] sm:$0xf]
        %v1310 = vld [vmem:[#allocation5 + $0x788] sm:$0xf]
        %v1311 = vld [vmem:[#allocation5 + $0x78c] sm:$0xf]
        %v1312 = vld [vmem:[#allocation5 + $0x790] sm:$0xf]
        %v1313 = vld [vmem:[#allocation5 + $0x794] sm:$0xf]
        %v1314 = vld [vmem:[#allocation5 + $0x798] sm:$0xf]
        %v1315 = vld [vmem:[#allocation5 + $0x79c] sm:$0xf]
        %v1316 = vld [vmem:[#allocation5 + $0x7a0] sm:$0xf]
        %v1317 = vld [vmem:[#allocation5 + $0x7a4] sm:$0xf]
        %v1318 = vld [vmem:[#allocation5 + $0x7a8] sm:$0xf]
        %v1319 = vld [vmem:[#allocation5 + $0x7ac] sm:$0xf]
        %v1320 = vld [vmem:[#allocation5 + $0x7b0] sm:$0xf]
        %v1321 = vld [vmem:[#allocation5 + $0x7b4] sm:$0xf]
        %v1322 = vld [vmem:[#allocation5 + $0x7b8] sm:$0xf]
        %v1323 = vld [vmem:[#allocation5 + $0x7bc] sm:$0xf]
        %v1324 = vld [vmem:[#allocation5 + $0x7c0] sm:$0xf]
        %v1325 = vld [vmem:[#allocation5 + $0x7c4] sm:$0xf]
        %v1326 = vld [vmem:[#allocation5 + $0x7c8] sm:$0xf]
        %v1327 = vld [vmem:[#allocation5 + $0x7cc] sm:$0xf]
        %v1328 = vld [vmem:[#allocation5 + $0x7d0] sm:$0xf]
        %v1329 = vld [vmem:[#allocation5 + $0x7d4] sm:$0xf]
        %v1330 = vld [vmem:[#allocation5 + $0x7d8] sm:$0xf]
        %v1331 = vld [vmem:[#allocation5 + $0x7dc] sm:$0xf]
        %v1332 = vld [vmem:[#allocation5 + $0x7e0] sm:$0xf]
        %v1333 = vld [vmem:[#allocation5 + $0x7e4] sm:$0xf]
        %v1334 = vld [vmem:[#allocation5 + $0x7e8] sm:$0xf]
        %v1335 = vld [vmem:[#allocation5 + $0x7ec] sm:$0xf]
        %v1336 = vld [vmem:[#allocation5 + $0x7f0] sm:$0xf]
        %v1337 = vld [vmem:[#allocation5 + $0x7f4] sm:$0xf]
        %v1338 = vld [vmem:[#allocation5 + $0x7f8] sm:$0xf]
        %v1339 = vld [vmem:[#allocation5 + $0x7fc] sm:$0xf]
        %v1340 = vld [vmem:[#allocation5 + $0x800] sm:$0xf]
        %v1341 = vld [vmem:[#allocation5 + $0x804] sm:$0xf]
        %v1342 = vld [vmem:[#allocation5 + $0x808] sm:$0xf]
        %v1343 = vld [vmem:[#allocation5 + $0x80c] sm:$0xf]
        %v1344 = vld [vmem:[#allocation5 + $0x810] sm:$0xf]
        %v1345 = vld [vmem:[#allocation5 + $0x814] sm:$0xf]
        %v1346 = vld [vmem:[#allocation5 + $0x818] sm:$0xf]
        %v1347 = vld [vmem:[#allocation5 + $0x81c] sm:$0xf]
        %v1348 = vld [vmem:[#allocation5 + $0x820] sm:$0xf]
        %v1349 = vld [vmem:[#allocation5 + $0x824] sm:$0xf]
        %v1350 = vld [vmem:[#allocation5 + $0x828] sm:$0xf]
        %v1351 = vld [vmem:[#allocation5 + $0x82c] sm:$0xf]
        %v1352 = vld [vmem:[#allocation5 + $0x830] sm:$0xf]
        %v1353 = vld [vmem:[#allocation5 + $0x834] sm:$0xf]
        %v1354 = vld [vmem:[#allocation5 + $0x838] sm:$0xf]
        %v1355 = vld [vmem:[#allocation5 + $0x83c] sm:$0xf]
        %v1356 = vld [vmem:[#allocation5 + $0x840] sm:$0xf]
        %v1357 = vld [vmem:[#allocation5 + $0x844] sm:$0xf]
        %v1358 = vld [vmem:[#allocation5 + $0x848] sm:$0xf]
        %v1359 = vld [vmem:[#allocation5 + $0x84c] sm:$0xf]
        %v1360 = vld [vmem:[#allocation5 + $0x850] sm:$0xf]
        %v1361 = vld [vmem:[#allocation5 + $0x854] sm:$0xf]
        %v1362 = vld [vmem:[#allocation5 + $0x858] sm:$0xf]
        %v1363 = vld [vmem:[#allocation5 + $0x85c] sm:$0xf]
        %v1364 = vld [vmem:[#allocation5 + $0x860] sm:$0xf]
        %v1365 = vld [vmem:[#allocation5 + $0x864] sm:$0xf]
        %v1366 = vld [vmem:[#allocation5 + $0x868] sm:$0xf]
        %v1367 = vld [vmem:[#allocation5 + $0x86c] sm:$0xf]
        %v1368 = vld [vmem:[#allocation5 + $0x870] sm:$0xf]
        %v1369 = vld [vmem:[#allocation5 + $0x874] sm:$0xf]
        %v1370 = vld [vmem:[#allocation5 + $0x878] sm:$0xf]
        %v1371 = vld [vmem:[#allocation5 + $0x87c] sm:$0xf]
        %v1372 = vld [vmem:[#allocation5 + $0x880] sm:$0xf]
        %v1373 = vld [vmem:[#allocation5 + $0x884] sm:$0xf]
        %v1374 = vld [vmem:[#allocation5 + $0x888] sm:$0xf]
        %v1375 = vld [vmem:[#allocation5 + $0x88c] sm:$0xf]
        %v1376 = vld [vmem:[#allocation5 + $0x890] sm:$0xf]
        %v1377 = vld [vmem:[#allocation5 + $0x894] sm:$0xf]
        %v1378 = vld [vmem:[#allocation5 + $0x898] sm:$0xf]
        %v1379 = vld [vmem:[#allocation5 + $0x89c] sm:$0xf]
        %v1380 = vld [vmem:[#allocation5 + $0x8a0] sm:$0xf]
        %v1381 = vld [vmem:[#allocation5 + $0x8a4] sm:$0xf]
        %v1382 = vld [vmem:[#allocation5 + $0x8a8] sm:$0xf]
        %v1383 = vld [vmem:[#allocation5 + $0x8ac] sm:$0xf]
        %v1384 = vld [vmem:[#allocation5 + $0x8b0] sm:$0xf]
        %v1385 = vld [vmem:[#allocation5 + $0x8b4] sm:$0xf]
        %v1386 = vld [vmem:[#allocation5 + $0x8b8] sm:$0xf]
        %v1387 = vld [vmem:[#allocation5 + $0x8bc] sm:$0xf]
        %v1388 = vld [vmem:[#allocation5 + $0x8c0] sm:$0xf]
        %v1389 = vld [vmem:[#allocation5 + $0x8c4] sm:$0xf]
        %v1390 = vld [vmem:[#allocation5 + $0x8c8] sm:$0xf]
        %v1391 = vld [vmem:[#allocation5 + $0x8cc] sm:$0xf]
        %v1392 = vld [vmem:[#allocation5 + $0x8d0] sm:$0xf]
        %v1393 = vld [vmem:[#allocation5 + $0x8d4] sm:$0xf]
        %v1394 = vld [vmem:[#allocation5 + $0x8d8] sm:$0xf]
        %v1395 = vld [vmem:[#allocation5 + $0x8dc] sm:$0xf]
        %v1396 = vld [vmem:[#allocation5 + $0x8e0] sm:$0xf]
        %v1397 = vld [vmem:[#allocation5 + $0x8e4] sm:$0xf]
        %v1398 = vld [vmem:[#allocation5 + $0x8e8] sm:$0xf]
        %v1399 = vld [vmem:[#allocation5 + $0x8ec] sm:$0xf]
        %v1400 = vld [vmem:[#allocation5 + $0x8f0] sm:$0xf]
        %v1401 = vld [vmem:[#allocation5 + $0x8f4] sm:$0xf]
        %v1402 = vld [vmem:[#allocation5 + $0x8f8] sm:$0xf]
        %v1403 = vld [vmem:[#allocation5 + $0x8fc] sm:$0xf]
        %v1404 = vld [vmem:[#allocation7] sm:$0x1]
        %v1406 = vlaneseq
        %v1407 = vshrl.u32 %v1406, 7
        %v1408 = vsub.s32 0, %v1407
        %v1409 = vrot.slane %v1404, %v1408
        %v1699 = vunpack.c.l.b16 %v540
        %v1700 = vunpack.c.h.b16 %v540
        %v1701 = vunpack.c.l.b16 %v541
        %v1702 = vunpack.c.h.b16 %v541
        %v1703 = vunpack.c.l.b16 %v542
        %v1704 = vunpack.c.h.b16 %v542
        %v1705 = vunpack.c.l.b16 %v543
        %v1706 = vunpack.c.h.b16 %v543
        %v1707 = vunpack.c.l.b16 %v544
        %v1708 = vunpack.c.h.b16 %v544
        %v1709 = vunpack.c.l.b16 %v545
        %v1710 = vunpack.c.h.b16 %v545
        %v1711 = vunpack.c.l.b16 %v546
        %v1712 = vunpack.c.h.b16 %v546
        %v1713 = vunpack.c.l.b16 %v547
        %v1714 = vunpack.c.h.b16 %v547
        %v1715 = vunpack.c.l.b16 %v548
        %v1716 = vunpack.c.h.b16 %v548
        %v1717 = vunpack.c.l.b16 %v549
        %v1718 = vunpack.c.h.b16 %v549
        %v1719 = vunpack.c.l.b16 %v550
        %v1720 = vunpack.c.h.b16 %v550
        %v1721 = vunpack.c.l.b16 %v551
        %v1722 = vunpack.c.h.b16 %v551
        %v1723 = vunpack.c.l.b16 %v552
        %v1724 = vunpack.c.h.b16 %v552
        %v1725 = vunpack.c.l.b16 %v553
        %v1726 = vunpack.c.h.b16 %v553
        %v1727 = vunpack.c.l.b16 %v554
        %v1728 = vunpack.c.h.b16 %v554
        %v1729 = vunpack.c.l.b16 %v555
        %v1730 = vunpack.c.h.b16 %v555
        %v1731 = vunpack.c.l.b16 %v556
        %v1732 = vunpack.c.h.b16 %v556
        %v1733 = vunpack.c.l.b16 %v557
        %v1734 = vunpack.c.h.b16 %v557
        %v1735 = vunpack.c.l.b16 %v558
        %v1736 = vunpack.c.h.b16 %v558
        %v1737 = vunpack.c.l.b16 %v559
        %v1738 = vunpack.c.h.b16 %v559
        %v1739 = vunpack.c.l.b16 %v560
        %v1740 = vunpack.c.h.b16 %v560
        %v1741 = vunpack.c.l.b16 %v561
        %v1742 = vunpack.c.h.b16 %v561
        %v1743 = vunpack.c.l.b16 %v562
        %v1744 = vunpack.c.h.b16 %v562
        %v1745 = vunpack.c.l.b16 %v563
        %v1746 = vunpack.c.h.b16 %v563
        %v1747 = vunpack.c.l.b16 %v564
        %v1748 = vunpack.c.h.b16 %v564
        %v1749 = vunpack.c.l.b16 %v565
        %v1750 = vunpack.c.h.b16 %v565
        %v1751 = vunpack.c.l.b16 %v566
        %v1752 = vunpack.c.h.b16 %v566
        %v1753 = vunpack.c.l.b16 %v567
        %v1754 = vunpack.c.h.b16 %v567
        %v1755 = vunpack.c.l.b16 %v568
        %v1756 = vunpack.c.h.b16 %v568
        %v1757 = vunpack.c.l.b16 %v569
        %v1758 = vunpack.c.h.b16 %v569
        %v1759 = vunpack.c.l.b16 %v570
        %v1760 = vunpack.c.h.b16 %v570
        %v1761 = vunpack.c.l.b16 %v571
        %v1762 = vunpack.c.h.b16 %v571
        %v1763 = vunpack.c.l.b16 %v572
        %v1764 = vunpack.c.h.b16 %v572
        %v1765 = vunpack.c.l.b16 %v573
        %v1766 = vunpack.c.h.b16 %v573
        %v1767 = vunpack.c.l.b16 %v574
        %v1768 = vunpack.c.h.b16 %v574
        %v1769 = vunpack.c.l.b16 %v575
        %v1770 = vunpack.c.h.b16 %v575
        %v1771 = vunpack.c.l.b16 %v576
        %v1772 = vunpack.c.h.b16 %v576
        %v1773 = vunpack.c.l.b16 %v577
        %v1774 = vunpack.c.h.b16 %v577
        %v1775 = vunpack.c.l.b16 %v578
        %v1776 = vunpack.c.h.b16 %v578
        %v1777 = vunpack.c.l.b16 %v579
        %v1778 = vunpack.c.h.b16 %v579
        %v1779 = vunpack.c.l.b16 %v580
        %v1780 = vunpack.c.h.b16 %v580
        %v1781 = vunpack.c.l.b16 %v581
        %v1782 = vunpack.c.h.b16 %v581
        %v1783 = vunpack.c.l.b16 %v582
        %v1784 = vunpack.c.h.b16 %v582
        %v1785 = vunpack.c.l.b16 %v583
        %v1786 = vunpack.c.h.b16 %v583
        %v1787 = vunpack.c.l.b16 %v584
        %v1788 = vunpack.c.h.b16 %v584
        %v1789 = vunpack.c.l.b16 %v585
        %v1790 = vunpack.c.h.b16 %v585
        %v1791 = vunpack.c.l.b16 %v586
        %v1792 = vunpack.c.h.b16 %v586
        %v1793 = vunpack.c.l.b16 %v587
        %v1794 = vunpack.c.h.b16 %v587
        %v1795 = vunpack.c.l.b16 %v588
        %v1796 = vunpack.c.h.b16 %v588
        %v1797 = vunpack.c.l.b16 %v589
        %v1798 = vunpack.c.h.b16 %v589
        %v1799 = vunpack.c.l.b16 %v590
        %v1800 = vunpack.c.h.b16 %v590
        %v1801 = vunpack.c.l.b16 %v591
        %v1802 = vunpack.c.h.b16 %v591
        %v1803 = vunpack.c.l.b16 %v592
        %v1804 = vunpack.c.h.b16 %v592
        %v1805 = vunpack.c.l.b16 %v593
        %v1806 = vunpack.c.h.b16 %v593
        %v1807 = vunpack.c.l.b16 %v594
        %v1808 = vunpack.c.h.b16 %v594
        %v1809 = vunpack.c.l.b16 %v595
        %v1810 = vunpack.c.h.b16 %v595
        %v1811 = vunpack.c.l.b16 %v596
        %v1812 = vunpack.c.h.b16 %v596
        %v1813 = vunpack.c.l.b16 %v597
        %v1814 = vunpack.c.h.b16 %v597
        %v1815 = vunpack.c.l.b16 %v598
        %v1816 = vunpack.c.h.b16 %v598
        %v1817 = vunpack.c.l.b16 %v599
        %v1818 = vunpack.c.h.b16 %v599
        %v1819 = vunpack.c.l.b16 %v600
        %v1820 = vunpack.c.h.b16 %v600
        %v1821 = vunpack.c.l.b16 %v601
        %v1822 = vunpack.c.h.b16 %v601
        %v1823 = vunpack.c.l.b16 %v602
        %v1824 = vunpack.c.h.b16 %v602
        %v1825 = vunpack.c.l.b16 %v603
        %v1826 = vunpack.c.h.b16 %v603
        %v1827 = vunpack.c.l.b16 %v604
        %v1828 = vunpack.c.h.b16 %v604
        %v1829 = vunpack.c.l.b16 %v605
        %v1830 = vunpack.c.h.b16 %v605
        %v1831 = vunpack.c.l.b16 %v606
        %v1832 = vunpack.c.h.b16 %v606
        %v1833 = vunpack.c.l.b16 %v607
        %v1834 = vunpack.c.h.b16 %v607
        %v1835 = vunpack.c.l.b16 %v608
        %v1836 = vunpack.c.h.b16 %v608
        %v1837 = vunpack.c.l.b16 %v609
        %v1838 = vunpack.c.h.b16 %v609
        %v1839 = vunpack.c.l.b16 %v610
        %v1840 = vunpack.c.h.b16 %v610
        %v1841 = vunpack.c.l.b16 %v611
        %v1842 = vunpack.c.h.b16 %v611
        %v1843 = vunpack.c.l.b16 %v612
        %v1844 = vunpack.c.h.b16 %v612
        %v1845 = vunpack.c.l.b16 %v613
        %v1846 = vunpack.c.h.b16 %v613
        %v1847 = vunpack.c.l.b16 %v614
        %v1848 = vunpack.c.h.b16 %v614
        %v1849 = vunpack.c.l.b16 %v615
        %v1850 = vunpack.c.h.b16 %v615
        %v1851 = vunpack.c.l.b16 %v616
        %v1852 = vunpack.c.h.b16 %v616
        %v1853 = vunpack.c.l.b16 %v617
        %v1854 = vunpack.c.h.b16 %v617
        %v1855 = vunpack.c.l.b16 %v618
        %v1856 = vunpack.c.h.b16 %v618
        %v1857 = vunpack.c.l.b16 %v619
        %v1858 = vunpack.c.h.b16 %v619
        %v1859 = vunpack.c.l.b16 %v620
        %v1860 = vunpack.c.h.b16 %v620
        %v1861 = vunpack.c.l.b16 %v621
        %v1862 = vunpack.c.h.b16 %v621
        %v1863 = vunpack.c.l.b16 %v622
        %v1864 = vunpack.c.h.b16 %v622
        %v1865 = vunpack.c.l.b16 %v623
        %v1866 = vunpack.c.h.b16 %v623
        %v1867 = vunpack.c.l.b16 %v624
        %v1868 = vunpack.c.h.b16 %v624
        %v1869 = vunpack.c.l.b16 %v625
        %v1870 = vunpack.c.h.b16 %v625
        %v1871 = vunpack.c.l.b16 %v626
        %v1872 = vunpack.c.h.b16 %v626
        %v1873 = vunpack.c.l.b16 %v627
        %v1874 = vunpack.c.h.b16 %v627
        %v1875 = vunpack.c.l.b16 %v628
        %v1876 = vunpack.c.h.b16 %v628
        %v1877 = vunpack.c.l.b16 %v629
        %v1878 = vunpack.c.h.b16 %v629
        %v1879 = vunpack.c.l.b16 %v630
        %v1880 = vunpack.c.h.b16 %v630
        %v1881 = vunpack.c.l.b16 %v631
        %v1882 = vunpack.c.h.b16 %v631
        %v1883 = vunpack.c.l.b16 %v632
        %v1884 = vunpack.c.h.b16 %v632
        %v1885 = vunpack.c.l.b16 %v633
        %v1886 = vunpack.c.h.b16 %v633
        %v1887 = vunpack.c.l.b16 %v634
        %v1888 = vunpack.c.h.b16 %v634
        %v1889 = vunpack.c.l.b16 %v635
        %v1890 = vunpack.c.h.b16 %v635
        %v1891 = vunpack.c.l.b16 %v636
        %v1892 = vunpack.c.h.b16 %v636
        %v1893 = vunpack.c.l.b16 %v637
        %v1894 = vunpack.c.h.b16 %v637
        %v1895 = vunpack.c.l.b16 %v638
        %v1896 = vunpack.c.h.b16 %v638
        %v1897 = vunpack.c.l.b16 %v639
        %v1898 = vunpack.c.h.b16 %v639
        %v1899 = vunpack.c.l.b16 %v640
        %v1900 = vunpack.c.h.b16 %v640
        %v1901 = vunpack.c.l.b16 %v641
        %v1902 = vunpack.c.h.b16 %v641
        %v1903 = vunpack.c.l.b16 %v642
        %v1904 = vunpack.c.h.b16 %v642
        %v1905 = vunpack.c.l.b16 %v643
        %v1906 = vunpack.c.h.b16 %v643
        %v1907 = vunpack.c.l.b16 %v644
        %v1908 = vunpack.c.h.b16 %v644
        %v1909 = vunpack.c.l.b16 %v645
        %v1910 = vunpack.c.h.b16 %v645
        %v1911 = vunpack.c.l.b16 %v646
        %v1912 = vunpack.c.h.b16 %v646
        %v1913 = vunpack.c.l.b16 %v647
        %v1914 = vunpack.c.h.b16 %v647
        %v1915 = vunpack.c.l.b16 %v648
        %v1916 = vunpack.c.h.b16 %v648
        %v1917 = vunpack.c.l.b16 %v649
        %v1918 = vunpack.c.h.b16 %v649
        %v1919 = vunpack.c.l.b16 %v650
        %v1920 = vunpack.c.h.b16 %v650
        %v1921 = vunpack.c.l.b16 %v651
        %v1922 = vunpack.c.h.b16 %v651
        %v1923 = vunpack.c.l.b16 %v652
        %v1924 = vunpack.c.h.b16 %v652
        %v1925 = vunpack.c.l.b16 %v653
        %v1926 = vunpack.c.h.b16 %v653
        %v1927 = vunpack.c.l.b16 %v654
        %v1928 = vunpack.c.h.b16 %v654
        %v1929 = vunpack.c.l.b16 %v655
        %v1930 = vunpack.c.h.b16 %v655
        %v1931 = vunpack.c.l.b16 %v656
        %v1932 = vunpack.c.h.b16 %v656
        %v1933 = vunpack.c.l.b16 %v657
        %v1934 = vunpack.c.h.b16 %v657
        %v1935 = vunpack.c.l.b16 %v658
        %v1936 = vunpack.c.h.b16 %v658
        %v1937 = vunpack.c.l.b16 %v659
        %v1938 = vunpack.c.h.b16 %v659
        %v1939 = vunpack.c.l.b16 %v660
        %v1940 = vunpack.c.h.b16 %v660
        %v1941 = vunpack.c.l.b16 %v661
        %v1942 = vunpack.c.h.b16 %v661
        %v1943 = vunpack.c.l.b16 %v662
        %v1944 = vunpack.c.h.b16 %v662
        %v1945 = vunpack.c.l.b16 %v663
        %v1946 = vunpack.c.h.b16 %v663
        %v1947 = vunpack.c.l.b16 %v664
        %v1948 = vunpack.c.h.b16 %v664
        %v1949 = vunpack.c.l.b16 %v665
        %v1950 = vunpack.c.h.b16 %v665
        %v1951 = vunpack.c.l.b16 %v666
        %v1952 = vunpack.c.h.b16 %v666
        %v1953 = vunpack.c.l.b16 %v667
        %v1954 = vunpack.c.h.b16 %v667
        %v1955 = vunpack.c.l.b16 %v668
        %v1956 = vunpack.c.h.b16 %v668
        %v1957 = vunpack.c.l.b16 %v669
        %v1958 = vunpack.c.h.b16 %v669
        %v1959 = vunpack.c.l.b16 %v670
        %v1960 = vunpack.c.h.b16 %v670
        %v1961 = vunpack.c.l.b16 %v671
        %v1962 = vunpack.c.h.b16 %v671
        %v1963 = vunpack.c.l.b16 %v672
        %v1964 = vunpack.c.h.b16 %v672
        %v1965 = vunpack.c.l.b16 %v673
        %v1966 = vunpack.c.h.b16 %v673
        %v1967 = vunpack.c.l.b16 %v674
        %v1968 = vunpack.c.h.b16 %v674
        %v1969 = vunpack.c.l.b16 %v675
        %v1970 = vunpack.c.h.b16 %v675
        %v1971 = vunpack.c.l.b16 %v676
        %v1972 = vunpack.c.h.b16 %v676
        %v1973 = vunpack.c.l.b16 %v677
        %v1974 = vunpack.c.h.b16 %v677
        %v1975 = vunpack.c.l.b16 %v678
        %v1976 = vunpack.c.h.b16 %v678
        %v1977 = vunpack.c.l.b16 %v679
        %v1978 = vunpack.c.h.b16 %v679
        %v1979 = vunpack.c.l.b16 %v680
        %v1980 = vunpack.c.h.b16 %v680
        %v1981 = vunpack.c.l.b16 %v681
        %v1982 = vunpack.c.h.b16 %v681
        %v1983 = vunpack.c.l.b16 %v682
        %v1984 = vunpack.c.h.b16 %v682
        %v1985 = vunpack.c.l.b16 %v683
        %v1986 = vunpack.c.h.b16 %v683
        %v1987 = vunpack.c.l.b16 %v684
        %v1988 = vunpack.c.h.b16 %v684
        %v1989 = vunpack.c.l.b16 %v685
        %v1990 = vunpack.c.h.b16 %v685
        %v1991 = vunpack.c.l.b16 %v686
        %v1992 = vunpack.c.h.b16 %v686
        %v1993 = vunpack.c.l.b16 %v687
        %v1994 = vunpack.c.h.b16 %v687
        %v1995 = vunpack.c.l.b16 %v688
        %v1996 = vunpack.c.h.b16 %v688
        %v1997 = vunpack.c.l.b16 %v689
        %v1998 = vunpack.c.h.b16 %v689
        %v1999 = vunpack.c.l.b16 %v690
        %v2000 = vunpack.c.h.b16 %v690
        %v2001 = vunpack.c.l.b16 %v691
        %v2002 = vunpack.c.h.b16 %v691
        %v2003 = vunpack.c.l.b16 %v692
        %v2004 = vunpack.c.h.b16 %v692
        %v2005 = vunpack.c.l.b16 %v693
        %v2006 = vunpack.c.h.b16 %v693
        %v2007 = vunpack.c.l.b16 %v694
        %v2008 = vunpack.c.h.b16 %v694
        %v2009 = vunpack.c.l.b16 %v695
        %v2010 = vunpack.c.h.b16 %v695
        %v2011 = vunpack.c.l.b16 %v696
        %v2012 = vunpack.c.h.b16 %v696
        %v2013 = vunpack.c.l.b16 %v697
        %v2014 = vunpack.c.h.b16 %v697
        %v2015 = vunpack.c.l.b16 %v698
        %v2016 = vunpack.c.h.b16 %v698
        %v2017 = vunpack.c.l.b16 %v699
        %v2018 = vunpack.c.h.b16 %v699
        %v2019 = vunpack.c.l.b16 %v700
        %v2020 = vunpack.c.h.b16 %v700
        %v2021 = vunpack.c.l.b16 %v701
        %v2022 = vunpack.c.h.b16 %v701
        %v2023 = vunpack.c.l.b16 %v702
        %v2024 = vunpack.c.h.b16 %v702
        %v2025 = vunpack.c.l.b16 %v703
        %v2026 = vunpack.c.h.b16 %v703
        %v2027 = vunpack.c.l.b16 %v704
        %v2028 = vunpack.c.h.b16 %v704
        %v2029 = vunpack.c.l.b16 %v705
        %v2030 = vunpack.c.h.b16 %v705
        %v2031 = vunpack.c.l.b16 %v706
        %v2032 = vunpack.c.h.b16 %v706
        %v2033 = vunpack.c.l.b16 %v707
        %v2034 = vunpack.c.h.b16 %v707
        %v2035 = vunpack.c.l.b16 %v708
        %v2036 = vunpack.c.h.b16 %v708
        %v2037 = vunpack.c.l.b16 %v709
        %v2038 = vunpack.c.h.b16 %v709
        %v2039 = vunpack.c.l.b16 %v710
        %v2040 = vunpack.c.h.b16 %v710
        %v2041 = vunpack.c.l.b16 %v711
        %v2042 = vunpack.c.h.b16 %v711
        %v2043 = vunpack.c.l.b16 %v712
        %v2044 = vunpack.c.h.b16 %v712
        %v2045 = vunpack.c.l.b16 %v713
        %v2046 = vunpack.c.h.b16 %v713
        %v2047 = vunpack.c.l.b16 %v714
        %v2048 = vunpack.c.h.b16 %v714
        %v2049 = vunpack.c.l.b16 %v715
        %v2050 = vunpack.c.h.b16 %v715
        %v2051 = vunpack.c.l.b16 %v716
        %v2052 = vunpack.c.h.b16 %v716
        %v2053 = vunpack.c.l.b16 %v717
        %v2054 = vunpack.c.h.b16 %v717
        %v2055 = vunpack.c.l.b16 %v718
        %v2056 = vunpack.c.h.b16 %v718
        %v2057 = vunpack.c.l.b16 %v719
        %v2058 = vunpack.c.h.b16 %v719
        %v2059 = vunpack.c.l.b16 %v720
        %v2060 = vunpack.c.h.b16 %v720
        %v2061 = vunpack.c.l.b16 %v721
        %v2062 = vunpack.c.h.b16 %v721
        %v2063 = vunpack.c.l.b16 %v722
        %v2064 = vunpack.c.h.b16 %v722
        %v2065 = vunpack.c.l.b16 %v723
        %v2066 = vunpack.c.h.b16 %v723
        %v2067 = vunpack.c.l.b16 %v724
        %v2068 = vunpack.c.h.b16 %v724
        %v2069 = vunpack.c.l.b16 %v725
        %v2070 = vunpack.c.h.b16 %v725
        %v2071 = vunpack.c.l.b16 %v726
        %v2072 = vunpack.c.h.b16 %v726
        %v2073 = vunpack.c.l.b16 %v727
        %v2074 = vunpack.c.h.b16 %v727
        %v2075 = vunpack.c.l.b16 %v728
        %v2076 = vunpack.c.h.b16 %v728
        %v2077 = vunpack.c.l.b16 %v729
        %v2078 = vunpack.c.h.b16 %v729
        %v2079 = vunpack.c.l.b16 %v730
        %v2080 = vunpack.c.h.b16 %v730
        %v2081 = vunpack.c.l.b16 %v731
        %v2082 = vunpack.c.h.b16 %v731
        %v2083 = vunpack.c.l.b16 %v732
        %v2084 = vunpack.c.h.b16 %v732
        %v2085 = vunpack.c.l.b16 %v733
        %v2086 = vunpack.c.h.b16 %v733
        %v2087 = vunpack.c.l.b16 %v734
        %v2088 = vunpack.c.h.b16 %v734
        %v2089 = vunpack.c.l.b16 %v735
        %v2090 = vunpack.c.h.b16 %v735
        %v2091 = vunpack.c.l.b16 %v736
        %v2092 = vunpack.c.h.b16 %v736
        %v2093 = vunpack.c.l.b16 %v737
        %v2094 = vunpack.c.h.b16 %v737
        %v2095 = vunpack.c.l.b16 %v738
        %v2096 = vunpack.c.h.b16 %v738
        %v2097 = vunpack.c.l.b16 %v739
        %v2098 = vunpack.c.h.b16 %v739
        %v2099 = vunpack.c.l.b16 %v740
        %v2100 = vunpack.c.h.b16 %v740
        %v2101 = vunpack.c.l.b16 %v741
        %v2102 = vunpack.c.h.b16 %v741
        %v2103 = vunpack.c.l.b16 %v742
        %v2104 = vunpack.c.h.b16 %v742
        %v2105 = vunpack.c.l.b16 %v743
        %v2106 = vunpack.c.h.b16 %v743
        %v2107 = vunpack.c.l.b16 %v744
        %v2108 = vunpack.c.h.b16 %v744
        %v2109 = vunpack.c.l.b16 %v745
        %v2110 = vunpack.c.h.b16 %v745
        %v2111 = vunpack.c.l.b16 %v746
        %v2112 = vunpack.c.h.b16 %v746
        %v2113 = vunpack.c.l.b16 %v747
        %v2114 = vunpack.c.h.b16 %v747
        %v2115 = vunpack.c.l.b16 %v748
        %v2116 = vunpack.c.h.b16 %v748
        %v2117 = vunpack.c.l.b16 %v749
        %v2118 = vunpack.c.h.b16 %v749
        %v2119 = vunpack.c.l.b16 %v750
        %v2120 = vunpack.c.h.b16 %v750
        %v2121 = vunpack.c.l.b16 %v751
        %v2122 = vunpack.c.h.b16 %v751
        %v2123 = vunpack.c.l.b16 %v752
        %v2124 = vunpack.c.h.b16 %v752
        %v2125 = vunpack.c.l.b16 %v753
        %v2126 = vunpack.c.h.b16 %v753
        %v2127 = vunpack.c.l.b16 %v754
        %v2128 = vunpack.c.h.b16 %v754
        %v2129 = vunpack.c.l.b16 %v755
        %v2130 = vunpack.c.h.b16 %v755
        %v2131 = vunpack.c.l.b16 %v756
        %v2132 = vunpack.c.h.b16 %v756
        %v2133 = vunpack.c.l.b16 %v757
        %v2134 = vunpack.c.h.b16 %v757
        %v2135 = vunpack.c.l.b16 %v758
        %v2136 = vunpack.c.h.b16 %v758
        %v2137 = vunpack.c.l.b16 %v759
        %v2138 = vunpack.c.h.b16 %v759
        %v2139 = vunpack.c.l.b16 %v760
        %v2140 = vunpack.c.h.b16 %v760
        %v2141 = vunpack.c.l.b16 %v761
        %v2142 = vunpack.c.h.b16 %v761
        %v2143 = vunpack.c.l.b16 %v762
        %v2144 = vunpack.c.h.b16 %v762
        %v2145 = vunpack.c.l.b16 %v763
        %v2146 = vunpack.c.h.b16 %v763
        %v2147 = vunpack.c.l.b16 %v764
        %v2148 = vunpack.c.h.b16 %v764
        %v2149 = vunpack.c.l.b16 %v765
        %v2150 = vunpack.c.h.b16 %v765
        %v2151 = vunpack.c.l.b16 %v766
        %v2152 = vunpack.c.h.b16 %v766
        %v2153 = vunpack.c.l.b16 %v767
        %v2154 = vunpack.c.h.b16 %v767
        %v2155 = vunpack.c.l.b16 %v768
        %v2156 = vunpack.c.h.b16 %v768
        %v2157 = vunpack.c.l.b16 %v769
        %v2158 = vunpack.c.h.b16 %v769
        %v2159 = vunpack.c.l.b16 %v770
        %v2160 = vunpack.c.h.b16 %v770
        %v2161 = vunpack.c.l.b16 %v771
        %v2162 = vunpack.c.h.b16 %v771
        %v2163 = vunpack.c.l.b16 %v772
        %v2164 = vunpack.c.h.b16 %v772
        %v2165 = vunpack.c.l.b16 %v773
        %v2166 = vunpack.c.h.b16 %v773
        %v2167 = vunpack.c.l.b16 %v774
        %v2168 = vunpack.c.h.b16 %v774
        %v2169 = vunpack.c.l.b16 %v775
        %v2170 = vunpack.c.h.b16 %v775
        %v2171 = vunpack.c.l.b16 %v776
        %v2172 = vunpack.c.h.b16 %v776
        %v2173 = vunpack.c.l.b16 %v777
        %v2174 = vunpack.c.h.b16 %v777
        %v2175 = vunpack.c.l.b16 %v778
        %v2176 = vunpack.c.h.b16 %v778
        %v2177 = vunpack.c.l.b16 %v779
        %v2178 = vunpack.c.h.b16 %v779
        %v2179 = vunpack.c.l.b16 %v780
        %v2180 = vunpack.c.h.b16 %v780
        %v2181 = vunpack.c.l.b16 %v781
        %v2182 = vunpack.c.h.b16 %v781
        %v2183 = vunpack.c.l.b16 %v782
        %v2184 = vunpack.c.h.b16 %v782
        %v2185 = vunpack.c.l.b16 %v783
        %v2186 = vunpack.c.h.b16 %v783
        %v2187 = vunpack.c.l.b16 %v784
        %v2188 = vunpack.c.h.b16 %v784
        %v2189 = vunpack.c.l.b16 %v785
        %v2190 = vunpack.c.h.b16 %v785
        %v2191 = vunpack.c.l.b16 %v786
        %v2192 = vunpack.c.h.b16 %v786
        %v2193 = vunpack.c.l.b16 %v787
        %v2194 = vunpack.c.h.b16 %v787
        %v2195 = vunpack.c.l.b16 %v788
        %v2196 = vunpack.c.h.b16 %v788
        %v2197 = vunpack.c.l.b16 %v789
        %v2198 = vunpack.c.h.b16 %v789
        %v2199 = vunpack.c.l.b16 %v790
        %v2200 = vunpack.c.h.b16 %v790
        %v2201 = vunpack.c.l.b16 %v791
        %v2202 = vunpack.c.h.b16 %v791
        %v2203 = vunpack.c.l.b16 %v792
        %v2204 = vunpack.c.h.b16 %v792
        %v2205 = vunpack.c.l.b16 %v793
        %v2206 = vunpack.c.h.b16 %v793
        %v2207 = vunpack.c.l.b16 %v794
        %v2208 = vunpack.c.h.b16 %v794
        %v2209 = vunpack.c.l.b16 %v795
        %v2210 = vunpack.c.h.b16 %v795
        %v2211 = vunpack.c.l.b16 %v796
        %v2212 = vunpack.c.h.b16 %v796
        %v2213 = vunpack.c.l.b16 %v797
        %v2214 = vunpack.c.h.b16 %v797
        %v2215 = vunpack.c.l.b16 %v798
        %v2216 = vunpack.c.h.b16 %v798
        %v2217 = vunpack.c.l.b16 %v799
        %v2218 = vunpack.c.h.b16 %v799
        %v2219 = vunpack.c.l.b16 %v800
        %v2220 = vunpack.c.h.b16 %v800
        %v2221 = vunpack.c.l.b16 %v801
        %v2222 = vunpack.c.h.b16 %v801
        %v2223 = vunpack.c.l.b16 %v802
        %v2224 = vunpack.c.h.b16 %v802
        %v2225 = vunpack.c.l.b16 %v803
        %v2226 = vunpack.c.h.b16 %v803
        %v2227 = vunpack.c.l.b16 %v804
        %v2228 = vunpack.c.h.b16 %v804
        %v2229 = vunpack.c.l.b16 %v805
        %v2230 = vunpack.c.h.b16 %v805
        %v2231 = vunpack.c.l.b16 %v806
        %v2232 = vunpack.c.h.b16 %v806
        %v2233 = vunpack.c.l.b16 %v807
        %v2234 = vunpack.c.h.b16 %v807
        %v2235 = vunpack.c.l.b16 %v808
        %v2236 = vunpack.c.h.b16 %v808
        %v2237 = vunpack.c.l.b16 %v809
        %v2238 = vunpack.c.h.b16 %v809
        %v2239 = vunpack.c.l.b16 %v810
        %v2240 = vunpack.c.h.b16 %v810
        %v2241 = vunpack.c.l.b16 %v811
        %v2242 = vunpack.c.h.b16 %v811
        %v2243 = vunpack.c.l.b16 %v812
        %v2244 = vunpack.c.h.b16 %v812
        %v2245 = vunpack.c.l.b16 %v813
        %v2246 = vunpack.c.h.b16 %v813
        %v2247 = vunpack.c.l.b16 %v814
        %v2248 = vunpack.c.h.b16 %v814
        %v2249 = vunpack.c.l.b16 %v815
        %v2250 = vunpack.c.h.b16 %v815
        %v2251 = vunpack.c.l.b16 %v816
        %v2252 = vunpack.c.h.b16 %v816
        %v2253 = vunpack.c.l.b16 %v817
        %v2254 = vunpack.c.h.b16 %v817
        %v2255 = vunpack.c.l.b16 %v818
        %v2256 = vunpack.c.h.b16 %v818
        %v2257 = vunpack.c.l.b16 %v819
        %v2258 = vunpack.c.h.b16 %v819
        %v2259 = vunpack.c.l.b16 %v820
        %v2260 = vunpack.c.h.b16 %v820
        %v2261 = vunpack.c.l.b16 %v821
        %v2262 = vunpack.c.h.b16 %v821
        %v2263 = vunpack.c.l.b16 %v822
        %v2264 = vunpack.c.h.b16 %v822
        %v2265 = vunpack.c.l.b16 %v823
        %v2266 = vunpack.c.h.b16 %v823
        %v2267 = vunpack.c.l.b16 %v824
        %v2268 = vunpack.c.h.b16 %v824
        %v2269 = vunpack.c.l.b16 %v825
        %v2270 = vunpack.c.h.b16 %v825
        %v2271 = vunpack.c.l.b16 %v826
        %v2272 = vunpack.c.h.b16 %v826
        %v2273 = vunpack.c.l.b16 %v827
        %v2274 = vunpack.c.h.b16 %v827
        %v2275 = vpack.c.b16 %v1735, %v1699
        %v2276 = vpack.c.b16 %v1736, %v1700
        %v2277 = vpack.c.b16 %v1737, %v1701
        %v2278 = vpack.c.b16 %v1738, %v1702
        %v2279 = vpack.c.b16 %v1739, %v1703
        %v2280 = vpack.c.b16 %v1740, %v1704
        %v2281 = vpack.c.b16 %v1741, %v1705
        %v2282 = vpack.c.b16 %v1742, %v1706
        %v2283 = vpack.c.b16 %v1743, %v1707
        %v2284 = vpack.c.b16 %v1744, %v1708
        %v2285 = vpack.c.b16 %v1745, %v1709
        %v2286 = vpack.c.b16 %v1746, %v1710
        %v2287 = vpack.c.b16 %v1747, %v1711
        %v2288 = vpack.c.b16 %v1748, %v1712
        %v2289 = vpack.c.b16 %v1749, %v1713
        %v2290 = vpack.c.b16 %v1750, %v1714
        %v2291 = vpack.c.b16 %v1751, %v1715
        %v2292 = vpack.c.b16 %v1752, %v1716
        %v2293 = vpack.c.b16 %v1753, %v1717
        %v2294 = vpack.c.b16 %v1754, %v1718
        %v2295 = vpack.c.b16 %v1755, %v1719
        %v2296 = vpack.c.b16 %v1756, %v1720
        %v2297 = vpack.c.b16 %v1757, %v1721
        %v2298 = vpack.c.b16 %v1758, %v1722
        %v2299 = vpack.c.b16 %v1759, %v1723
        %v2300 = vpack.c.b16 %v1760, %v1724
        %v2301 = vpack.c.b16 %v1761, %v1725
        %v2302 = vpack.c.b16 %v1762, %v1726
        %v2303 = vpack.c.b16 %v1763, %v1727
        %v2304 = vpack.c.b16 %v1764, %v1728
        %v2305 = vpack.c.b16 %v1765, %v1729
        %v2306 = vpack.c.b16 %v1766, %v1730
        %v2307 = vpack.c.b16 %v1767, %v1731
        %v2308 = vpack.c.b16 %v1768, %v1732
        %v2309 = vpack.c.b16 %v1769, %v1733
        %v2310 = vpack.c.b16 %v1770, %v1734
        %v2311 = vpack.c.b16 %v1807, %v1771
        %v2312 = vpack.c.b16 %v1808, %v1772
        %v2313 = vpack.c.b16 %v1809, %v1773
        %v2314 = vpack.c.b16 %v1810, %v1774
        %v2315 = vpack.c.b16 %v1811, %v1775
        %v2316 = vpack.c.b16 %v1812, %v1776
        %v2317 = vpack.c.b16 %v1813, %v1777
        %v2318 = vpack.c.b16 %v1814, %v1778
        %v2319 = vpack.c.b16 %v1815, %v1779
        %v2320 = vpack.c.b16 %v1816, %v1780
        %v2321 = vpack.c.b16 %v1817, %v1781
        %v2322 = vpack.c.b16 %v1818, %v1782
        %v2323 = vpack.c.b16 %v1819, %v1783
        %v2324 = vpack.c.b16 %v1820, %v1784
        %v2325 = vpack.c.b16 %v1821, %v1785
        %v2326 = vpack.c.b16 %v1822, %v1786
        %v2327 = vpack.c.b16 %v1823, %v1787
        %v2328 = vpack.c.b16 %v1824, %v1788
        %v2329 = vpack.c.b16 %v1825, %v1789
        %v2330 = vpack.c.b16 %v1826, %v1790
        %v2331 = vpack.c.b16 %v1827, %v1791
        %v2332 = vpack.c.b16 %v1828, %v1792
        %v2333 = vpack.c.b16 %v1829, %v1793
        %v2334 = vpack.c.b16 %v1830, %v1794
        %v2335 = vpack.c.b16 %v1831, %v1795
        %v2336 = vpack.c.b16 %v1832, %v1796
        %v2337 = vpack.c.b16 %v1833, %v1797
        %v2338 = vpack.c.b16 %v1834, %v1798
        %v2339 = vpack.c.b16 %v1835, %v1799
        %v2340 = vpack.c.b16 %v1836, %v1800
        %v2341 = vpack.c.b16 %v1837, %v1801
        %v2342 = vpack.c.b16 %v1838, %v1802
        %v2343 = vpack.c.b16 %v1839, %v1803
        %v2344 = vpack.c.b16 %v1840, %v1804
        %v2345 = vpack.c.b16 %v1841, %v1805
        %v2346 = vpack.c.b16 %v1842, %v1806
        %v2347 = vpack.c.b16 %v1879, %v1843
        %v2348 = vpack.c.b16 %v1880, %v1844
        %v2349 = vpack.c.b16 %v1881, %v1845
        %v2350 = vpack.c.b16 %v1882, %v1846
        %v2351 = vpack.c.b16 %v1883, %v1847
        %v2352 = vpack.c.b16 %v1884, %v1848
        %v2353 = vpack.c.b16 %v1885, %v1849
        %v2354 = vpack.c.b16 %v1886, %v1850
        %v2355 = vpack.c.b16 %v1887, %v1851
        %v2356 = vpack.c.b16 %v1888, %v1852
        %v2357 = vpack.c.b16 %v1889, %v1853
        %v2358 = vpack.c.b16 %v1890, %v1854
        %v2359 = vpack.c.b16 %v1891, %v1855
        %v2360 = vpack.c.b16 %v1892, %v1856
        %v2361 = vpack.c.b16 %v1893, %v1857
        %v2362 = vpack.c.b16 %v1894, %v1858
        %v2363 = vpack.c.b16 %v1895, %v1859
        %v2364 = vpack.c.b16 %v1896, %v1860
        %v2365 = vpack.c.b16 %v1897, %v1861
        %v2366 = vpack.c.b16 %v1898, %v1862
        %v2367 = vpack.c.b16 %v1899, %v1863
        %v2368 = vpack.c.b16 %v1900, %v1864
        %v2369 = vpack.c.b16 %v1901, %v1865
        %v2370 = vpack.c.b16 %v1902, %v1866
        %v2371 = vpack.c.b16 %v1903, %v1867
        %v2372 = vpack.c.b16 %v1904, %v1868
        %v2373 = vpack.c.b16 %v1905, %v1869
        %v2374 = vpack.c.b16 %v1906, %v1870
        %v2375 = vpack.c.b16 %v1907, %v1871
        %v2376 = vpack.c.b16 %v1908, %v1872
        %v2377 = vpack.c.b16 %v1909, %v1873
        %v2378 = vpack.c.b16 %v1910, %v1874
        %v2379 = vpack.c.b16 %v1911, %v1875
        %v2380 = vpack.c.b16 %v1912, %v1876
        %v2381 = vpack.c.b16 %v1913, %v1877
        %v2382 = vpack.c.b16 %v1914, %v1878
        %v2383 = vpack.c.b16 %v1951, %v1915
        %v2384 = vpack.c.b16 %v1952, %v1916
        %v2385 = vpack.c.b16 %v1953, %v1917
        %v2386 = vpack.c.b16 %v1954, %v1918
        %v2387 = vpack.c.b16 %v1955, %v1919
        %v2388 = vpack.c.b16 %v1956, %v1920
        %v2389 = vpack.c.b16 %v1957, %v1921
        %v2390 = vpack.c.b16 %v1958, %v1922
        %v2391 = vpack.c.b16 %v1959, %v1923
        %v2392 = vpack.c.b16 %v1960, %v1924
        %v2393 = vpack.c.b16 %v1961, %v1925
        %v2394 = vpack.c.b16 %v1962, %v1926
        %v2395 = vpack.c.b16 %v1963, %v1927
        %v2396 = vpack.c.b16 %v1964, %v1928
        %v2397 = vpack.c.b16 %v1965, %v1929
        %v2398 = vpack.c.b16 %v1966, %v1930
        %v2399 = vpack.c.b16 %v1967, %v1931
        %v2400 = vpack.c.b16 %v1968, %v1932
        %v2401 = vpack.c.b16 %v1969, %v1933
        %v2402 = vpack.c.b16 %v1970, %v1934
        %v2403 = vpack.c.b16 %v1971, %v1935
        %v2404 = vpack.c.b16 %v1972, %v1936
        %v2405 = vpack.c.b16 %v1973, %v1937
        %v2406 = vpack.c.b16 %v1974, %v1938
        %v2407 = vpack.c.b16 %v1975, %v1939
        %v2408 = vpack.c.b16 %v1976, %v1940
        %v2409 = vpack.c.b16 %v1977, %v1941
        %v2410 = vpack.c.b16 %v1978, %v1942
        %v2411 = vpack.c.b16 %v1979, %v1943
        %v2412 = vpack.c.b16 %v1980, %v1944
        %v2413 = vpack.c.b16 %v1981, %v1945
        %v2414 = vpack.c.b16 %v1982, %v1946
        %v2415 = vpack.c.b16 %v1983, %v1947
        %v2416 = vpack.c.b16 %v1984, %v1948
        %v2417 = vpack.c.b16 %v1985, %v1949
        %v2418 = vpack.c.b16 %v1986, %v1950
        %v2419 = vpack.c.b16 %v2023, %v1987
        %v2420 = vpack.c.b16 %v2024, %v1988
        %v2421 = vpack.c.b16 %v2025, %v1989
        %v2422 = vpack.c.b16 %v2026, %v1990
        %v2423 = vpack.c.b16 %v2027, %v1991
        %v2424 = vpack.c.b16 %v2028, %v1992
        %v2425 = vpack.c.b16 %v2029, %v1993
        %v2426 = vpack.c.b16 %v2030, %v1994
        %v2427 = vpack.c.b16 %v2031, %v1995
        %v2428 = vpack.c.b16 %v2032, %v1996
        %v2429 = vpack.c.b16 %v2033, %v1997
        %v2430 = vpack.c.b16 %v2034, %v1998
        %v2431 = vpack.c.b16 %v2035, %v1999
        %v2432 = vpack.c.b16 %v2036, %v2000
        %v2433 = vpack.c.b16 %v2037, %v2001
        %v2434 = vpack.c.b16 %v2038, %v2002
        %v2435 = vpack.c.b16 %v2039, %v2003
        %v2436 = vpack.c.b16 %v2040, %v2004
        %v2437 = vpack.c.b16 %v2041, %v2005
        %v2438 = vpack.c.b16 %v2042, %v2006
        %v2439 = vpack.c.b16 %v2043, %v2007
        %v2440 = vpack.c.b16 %v2044, %v2008
        %v2441 = vpack.c.b16 %v2045, %v2009
        %v2442 = vpack.c.b16 %v2046, %v2010
        %v2443 = vpack.c.b16 %v2047, %v2011
        %v2444 = vpack.c.b16 %v2048, %v2012
        %v2445 = vpack.c.b16 %v2049, %v2013
        %v2446 = vpack.c.b16 %v2050, %v2014
        %v2447 = vpack.c.b16 %v2051, %v2015
        %v2448 = vpack.c.b16 %v2052, %v2016
        %v2449 = vpack.c.b16 %v2053, %v2017
        %v2450 = vpack.c.b16 %v2054, %v2018
        %v2451 = vpack.c.b16 %v2055, %v2019
        %v2452 = vpack.c.b16 %v2056, %v2020
        %v2453 = vpack.c.b16 %v2057, %v2021
        %v2454 = vpack.c.b16 %v2058, %v2022
        %v2455 = vpack.c.b16 %v2095, %v2059
        %v2456 = vpack.c.b16 %v2096, %v2060
        %v2457 = vpack.c.b16 %v2097, %v2061
        %v2458 = vpack.c.b16 %v2098, %v2062
        %v2459 = vpack.c.b16 %v2099, %v2063
        %v2460 = vpack.c.b16 %v2100, %v2064
        %v2461 = vpack.c.b16 %v2101, %v2065
        %v2462 = vpack.c.b16 %v2102, %v2066
        %v2463 = vpack.c.b16 %v2103, %v2067
        %v2464 = vpack.c.b16 %v2104, %v2068
        %v2465 = vpack.c.b16 %v2105, %v2069
        %v2466 = vpack.c.b16 %v2106, %v2070
        %v2467 = vpack.c.b16 %v2107, %v2071
        %v2468 = vpack.c.b16 %v2108, %v2072
        %v2469 = vpack.c.b16 %v2109, %v2073
        %v2470 = vpack.c.b16 %v2110, %v2074
        %v2471 = vpack.c.b16 %v2111, %v2075
        %v2472 = vpack.c.b16 %v2112, %v2076
        %v2473 = vpack.c.b16 %v2113, %v2077
        %v2474 = vpack.c.b16 %v2114, %v2078
        %v2475 = vpack.c.b16 %v2115, %v2079
        %v2476 = vpack.c.b16 %v2116, %v2080
        %v2477 = vpack.c.b16 %v2117, %v2081
        %v2478 = vpack.c.b16 %v2118, %v2082
        %v2479 = vpack.c.b16 %v2119, %v2083
        %v2480 = vpack.c.b16 %v2120, %v2084
        %v2481 = vpack.c.b16 %v2121, %v2085
        %v2482 = vpack.c.b16 %v2122, %v2086
        %v2483 = vpack.c.b16 %v2123, %v2087
        %v2484 = vpack.c.b16 %v2124, %v2088
        %v2485 = vpack.c.b16 %v2125, %v2089
        %v2486 = vpack.c.b16 %v2126, %v2090
        %v2487 = vpack.c.b16 %v2127, %v2091
        %v2488 = vpack.c.b16 %v2128, %v2092
        %v2489 = vpack.c.b16 %v2129, %v2093
        %v2490 = vpack.c.b16 %v2130, %v2094
        %v2491 = vpack.c.b16 %v2167, %v2131
        %v2492 = vpack.c.b16 %v2168, %v2132
        %v2493 = vpack.c.b16 %v2169, %v2133
        %v2494 = vpack.c.b16 %v2170, %v2134
        %v2495 = vpack.c.b16 %v2171, %v2135
        %v2496 = vpack.c.b16 %v2172, %v2136
        %v2497 = vpack.c.b16 %v2173, %v2137
        %v2498 = vpack.c.b16 %v2174, %v2138
        %v2499 = vpack.c.b16 %v2175, %v2139
        %v2500 = vpack.c.b16 %v2176, %v2140
        %v2501 = vpack.c.b16 %v2177, %v2141
        %v2502 = vpack.c.b16 %v2178, %v2142
        %v2503 = vpack.c.b16 %v2179, %v2143
        %v2504 = vpack.c.b16 %v2180, %v2144
        %v2505 = vpack.c.b16 %v2181, %v2145
        %v2506 = vpack.c.b16 %v2182, %v2146
        %v2507 = vpack.c.b16 %v2183, %v2147
        %v2508 = vpack.c.b16 %v2184, %v2148
        %v2509 = vpack.c.b16 %v2185, %v2149
        %v2510 = vpack.c.b16 %v2186, %v2150
        %v2511 = vpack.c.b16 %v2187, %v2151
        %v2512 = vpack.c.b16 %v2188, %v2152
        %v2513 = vpack.c.b16 %v2189, %v2153
        %v2514 = vpack.c.b16 %v2190, %v2154
        %v2515 = vpack.c.b16 %v2191, %v2155
        %v2516 = vpack.c.b16 %v2192, %v2156
        %v2517 = vpack.c.b16 %v2193, %v2157
        %v2518 = vpack.c.b16 %v2194, %v2158
        %v2519 = vpack.c.b16 %v2195, %v2159
        %v2520 = vpack.c.b16 %v2196, %v2160
        %v2521 = vpack.c.b16 %v2197, %v2161
        %v2522 = vpack.c.b16 %v2198, %v2162
        %v2523 = vpack.c.b16 %v2199, %v2163
        %v2524 = vpack.c.b16 %v2200, %v2164
        %v2525 = vpack.c.b16 %v2201, %v2165
        %v2526 = vpack.c.b16 %v2202, %v2166
        %v2527 = vpack.c.b16 %v2239, %v2203
        %v2528 = vpack.c.b16 %v2240, %v2204
        %v2529 = vpack.c.b16 %v2241, %v2205
        %v2530 = vpack.c.b16 %v2242, %v2206
        %v2531 = vpack.c.b16 %v2243, %v2207
        %v2532 = vpack.c.b16 %v2244, %v2208
        %v2533 = vpack.c.b16 %v2245, %v2209
        %v2534 = vpack.c.b16 %v2246, %v2210
        %v2535 = vpack.c.b16 %v2247, %v2211
        %v2536 = vpack.c.b16 %v2248, %v2212
        %v2537 = vpack.c.b16 %v2249, %v2213
        %v2538 = vpack.c.b16 %v2250, %v2214
        %v2539 = vpack.c.b16 %v2251, %v2215
        %v2540 = vpack.c.b16 %v2252, %v2216
        %v2541 = vpack.c.b16 %v2253, %v2217
        %v2542 = vpack.c.b16 %v2254, %v2218
        %v2543 = vpack.c.b16 %v2255, %v2219
        %v2544 = vpack.c.b16 %v2256, %v2220
        %v2545 = vpack.c.b16 %v2257, %v2221
        %v2546 = vpack.c.b16 %v2258, %v2222
        %v2547 = vpack.c.b16 %v2259, %v2223
        %v2548 = vpack.c.b16 %v2260, %v2224
        %v2549 = vpack.c.b16 %v2261, %v2225
        %v2550 = vpack.c.b16 %v2262, %v2226
        %v2551 = vpack.c.b16 %v2263, %v2227
        %v2552 = vpack.c.b16 %v2264, %v2228
        %v2553 = vpack.c.b16 %v2265, %v2229
        %v2554 = vpack.c.b16 %v2266, %v2230
        %v2555 = vpack.c.b16 %v2267, %v2231
        %v2556 = vpack.c.b16 %v2268, %v2232
        %v2557 = vpack.c.b16 %v2269, %v2233
        %v2558 = vpack.c.b16 %v2270, %v2234
        %v2559 = vpack.c.b16 %v2271, %v2235
        %v2560 = vpack.c.b16 %v2272, %v2236
        %v2561 = vpack.c.b16 %v2273, %v2237
        %v2562 = vpack.c.b16 %v2274, %v2238
        %v3427 = vunpack.c.l.b16 %v828
        %v3428 = vunpack.c.l.b16 %v829
        %v3429 = vunpack.c.l.b16 %v830
        %v3430 = vunpack.c.l.b16 %v831
        %v3431 = vunpack.c.l.b16 %v832
        %v3432 = vunpack.c.l.b16 %v833
        %v3433 = vunpack.c.l.b16 %v834
        %v3434 = vunpack.c.l.b16 %v835
        %v3435 = vunpack.c.l.b16 %v836
        %v3436 = vunpack.c.l.b16 %v837
        %v3437 = vunpack.c.l.b16 %v838
        %v3438 = vunpack.c.l.b16 %v839
        %v3439 = vunpack.c.l.b16 %v840
        %v3440 = vunpack.c.l.b16 %v841
        %v3441 = vunpack.c.l.b16 %v842
        %v3442 = vunpack.c.l.b16 %v843
        %v3443 = vunpack.c.l.b16 %v844
        %v3444 = vunpack.c.l.b16 %v845
        %v3445 = vunpack.c.l.b16 %v846
        %v3446 = vunpack.c.l.b16 %v847
        %v3447 = vunpack.c.l.b16 %v848
        %v3448 = vunpack.c.l.b16 %v849
        %v3449 = vunpack.c.l.b16 %v850
        %v3450 = vunpack.c.l.b16 %v851
        %v3451 = vunpack.c.l.b16 %v852
        %v3452 = vunpack.c.l.b16 %v853
        %v3453 = vunpack.c.l.b16 %v854
        %v3454 = vunpack.c.l.b16 %v855
        %v3455 = vunpack.c.l.b16 %v856
        %v3456 = vunpack.c.l.b16 %v857
        %v3457 = vunpack.c.l.b16 %v858
        %v3458 = vunpack.c.l.b16 %v859
        %v3459 = vunpack.c.l.b16 %v860
        %v3460 = vunpack.c.l.b16 %v861
        %v3461 = vunpack.c.l.b16 %v862
        %v3462 = vunpack.c.l.b16 %v863
        %v3463 = vunpack.c.l.b16 %v864
        %v3464 = vunpack.c.l.b16 %v865
        %v3465 = vunpack.c.l.b16 %v866
        %v3466 = vunpack.c.l.b16 %v867
        %v3467 = vunpack.c.l.b16 %v868
        %v3468 = vunpack.c.l.b16 %v869
        %v3469 = vunpack.c.l.b16 %v870
        %v3470 = vunpack.c.l.b16 %v871
        %v3471 = vunpack.c.l.b16 %v872
        %v3472 = vunpack.c.l.b16 %v873
        %v3473 = vunpack.c.l.b16 %v874
        %v3474 = vunpack.c.l.b16 %v875
        %v3475 = vunpack.c.l.b16 %v876
        %v3476 = vunpack.c.l.b16 %v877
        %v3477 = vunpack.c.l.b16 %v878
        %v3478 = vunpack.c.l.b16 %v879
        %v3479 = vunpack.c.l.b16 %v880
        %v3480 = vunpack.c.l.b16 %v881
        %v3481 = vunpack.c.l.b16 %v882
        %v3482 = vunpack.c.l.b16 %v883
        %v3483 = vunpack.c.l.b16 %v884
        %v3484 = vunpack.c.l.b16 %v885
        %v3485 = vunpack.c.l.b16 %v886
        %v3486 = vunpack.c.l.b16 %v887
        %v3487 = vunpack.c.l.b16 %v888
        %v3488 = vunpack.c.l.b16 %v889
        %v3489 = vunpack.c.l.b16 %v890
        %v3490 = vunpack.c.l.b16 %v891
        %v3491 = vunpack.c.l.b16 %v892
        %v3492 = vunpack.c.l.b16 %v893
        %v3493 = vunpack.c.l.b16 %v894
        %v3494 = vunpack.c.l.b16 %v895
        %v3495 = vunpack.c.l.b16 %v896
        %v3496 = vunpack.c.l.b16 %v897
        %v3497 = vunpack.c.l.b16 %v898
        %v3498 = vunpack.c.l.b16 %v899
        %v3499 = vunpack.c.l.b16 %v900
        %v3500 = vunpack.c.l.b16 %v901
        %v3501 = vunpack.c.l.b16 %v902
        %v3502 = vunpack.c.l.b16 %v903
        %v3503 = vunpack.c.l.b16 %v904
        %v3504 = vunpack.c.l.b16 %v905
        %v3505 = vunpack.c.l.b16 %v906
        %v3506 = vunpack.c.l.b16 %v907
        %v3507 = vunpack.c.l.b16 %v908
        %v3508 = vunpack.c.l.b16 %v909
        %v3509 = vunpack.c.l.b16 %v910
        %v3510 = vunpack.c.l.b16 %v911
        %v3511 = vunpack.c.l.b16 %v912
        %v3512 = vunpack.c.l.b16 %v913
        %v3513 = vunpack.c.l.b16 %v914
        %v3514 = vunpack.c.l.b16 %v915
        %v3515 = vunpack.c.l.b16 %v916
        %v3516 = vunpack.c.l.b16 %v917
        %v3517 = vunpack.c.l.b16 %v918
        %v3518 = vunpack.c.l.b16 %v919
        %v3519 = vunpack.c.l.b16 %v920
        %v3520 = vunpack.c.l.b16 %v921
        %v3521 = vunpack.c.l.b16 %v922
        %v3522 = vunpack.c.l.b16 %v923
        %v3523 = vunpack.c.l.b16 %v924
        %v3524 = vunpack.c.l.b16 %v925
        %v3525 = vunpack.c.l.b16 %v926
        %v3526 = vunpack.c.l.b16 %v927
        %v3527 = vunpack.c.l.b16 %v928
        %v3528 = vunpack.c.l.b16 %v929
        %v3529 = vunpack.c.l.b16 %v930
        %v3530 = vunpack.c.l.b16 %v931
        %v3531 = vunpack.c.l.b16 %v932
        %v3532 = vunpack.c.l.b16 %v933
        %v3533 = vunpack.c.l.b16 %v934
        %v3534 = vunpack.c.l.b16 %v935
        %v3535 = vunpack.c.l.b16 %v936
        %v3536 = vunpack.c.l.b16 %v937
        %v3537 = vunpack.c.l.b16 %v938
        %v3538 = vunpack.c.l.b16 %v939
        %v3539 = vunpack.c.l.b16 %v940
        %v3540 = vunpack.c.l.b16 %v941
        %v3541 = vunpack.c.l.b16 %v942
        %v3542 = vunpack.c.l.b16 %v943
        %v3543 = vunpack.c.l.b16 %v944
        %v3544 = vunpack.c.l.b16 %v945
        %v3545 = vunpack.c.l.b16 %v946
        %v3546 = vunpack.c.l.b16 %v947
        %v3547 = vunpack.c.l.b16 %v948
        %v3548 = vunpack.c.l.b16 %v949
        %v3549 = vunpack.c.l.b16 %v950
        %v3550 = vunpack.c.l.b16 %v951
        %v3551 = vunpack.c.l.b16 %v952
        %v3552 = vunpack.c.l.b16 %v953
        %v3553 = vunpack.c.l.b16 %v954
        %v3554 = vunpack.c.l.b16 %v955
        %v3555 = vunpack.c.l.b16 %v956
        %v3556 = vunpack.c.l.b16 %v957
        %v3557 = vunpack.c.l.b16 %v958
        %v3558 = vunpack.c.l.b16 %v959
        %v3559 = vunpack.c.l.b16 %v960
        %v3560 = vunpack.c.l.b16 %v961
        %v3561 = vunpack.c.l.b16 %v962
        %v3562 = vunpack.c.l.b16 %v963
        %v3563 = vunpack.c.l.b16 %v964
        %v3564 = vunpack.c.l.b16 %v965
        %v3565 = vunpack.c.l.b16 %v966
        %v3566 = vunpack.c.l.b16 %v967
        %v3567 = vunpack.c.l.b16 %v968
        %v3568 = vunpack.c.l.b16 %v969
        %v3569 = vunpack.c.l.b16 %v970
        %v3570 = vunpack.c.l.b16 %v971
        %v3571 = vunpack.c.l.b16 %v972
        %v3572 = vunpack.c.l.b16 %v973
        %v3573 = vunpack.c.l.b16 %v974
        %v3574 = vunpack.c.l.b16 %v975
        %v3575 = vunpack.c.l.b16 %v976
        %v3576 = vunpack.c.l.b16 %v977
        %v3577 = vunpack.c.l.b16 %v978
        %v3578 = vunpack.c.l.b16 %v979
        %v3579 = vunpack.c.l.b16 %v980
        %v3580 = vunpack.c.l.b16 %v981
        %v3581 = vunpack.c.l.b16 %v982
        %v3582 = vunpack.c.l.b16 %v983
        %v3583 = vunpack.c.l.b16 %v984
        %v3584 = vunpack.c.l.b16 %v985
        %v3585 = vunpack.c.l.b16 %v986
        %v3586 = vunpack.c.l.b16 %v987
        %v3587 = vunpack.c.l.b16 %v988
        %v3588 = vunpack.c.l.b16 %v989
        %v3589 = vunpack.c.l.b16 %v990
        %v3590 = vunpack.c.l.b16 %v991
        %v3591 = vunpack.c.l.b16 %v992
        %v3592 = vunpack.c.l.b16 %v993
        %v3593 = vunpack.c.l.b16 %v994
        %v3594 = vunpack.c.l.b16 %v995
        %v3595 = vunpack.c.l.b16 %v996
        %v3596 = vunpack.c.l.b16 %v997
        %v3597 = vunpack.c.l.b16 %v998
        %v3598 = vunpack.c.l.b16 %v999
        %v3599 = vunpack.c.l.b16 %v1000
        %v3600 = vunpack.c.l.b16 %v1001
        %v3601 = vunpack.c.l.b16 %v1002
        %v3602 = vunpack.c.l.b16 %v1003
        %v3603 = vunpack.c.l.b16 %v1004
        %v3604 = vunpack.c.l.b16 %v1005
        %v3605 = vunpack.c.l.b16 %v1006
        %v3606 = vunpack.c.l.b16 %v1007
        %v3607 = vunpack.c.l.b16 %v1008
        %v3608 = vunpack.c.l.b16 %v1009
        %v3609 = vunpack.c.l.b16 %v1010
        %v3610 = vunpack.c.l.b16 %v1011
        %v3611 = vunpack.c.l.b16 %v1012
        %v3612 = vunpack.c.l.b16 %v1013
        %v3613 = vunpack.c.l.b16 %v1014
        %v3614 = vunpack.c.l.b16 %v1015
        %v3615 = vunpack.c.l.b16 %v1016
        %v3616 = vunpack.c.l.b16 %v1017
        %v3617 = vunpack.c.l.b16 %v1018
        %v3618 = vunpack.c.l.b16 %v1019
        %v3619 = vunpack.c.l.b16 %v1020
        %v3620 = vunpack.c.l.b16 %v1021
        %v3621 = vunpack.c.l.b16 %v1022
        %v3622 = vunpack.c.l.b16 %v1023
        %v3623 = vunpack.c.l.b16 %v1024
        %v3624 = vunpack.c.l.b16 %v1025
        %v3625 = vunpack.c.l.b16 %v1026
        %v3626 = vunpack.c.l.b16 %v1027
        %v3627 = vunpack.c.l.b16 %v1028
        %v3628 = vunpack.c.l.b16 %v1029
        %v3629 = vunpack.c.l.b16 %v1030
        %v3630 = vunpack.c.l.b16 %v1031
        %v3631 = vunpack.c.l.b16 %v1032
        %v3632 = vunpack.c.l.b16 %v1033
        %v3633 = vunpack.c.l.b16 %v1034
        %v3634 = vunpack.c.l.b16 %v1035
        %v3635 = vunpack.c.l.b16 %v1036
        %v3636 = vunpack.c.l.b16 %v1037
        %v3637 = vunpack.c.l.b16 %v1038
        %v3638 = vunpack.c.l.b16 %v1039
        %v3639 = vunpack.c.l.b16 %v1040
        %v3640 = vunpack.c.l.b16 %v1041
        %v3641 = vunpack.c.l.b16 %v1042
        %v3642 = vunpack.c.l.b16 %v1043
        %v3643 = vunpack.c.l.b16 %v1044
        %v3644 = vunpack.c.l.b16 %v1045
        %v3645 = vunpack.c.l.b16 %v1046
        %v3646 = vunpack.c.l.b16 %v1047
        %v3647 = vunpack.c.l.b16 %v1048
        %v3648 = vunpack.c.l.b16 %v1049
        %v3649 = vunpack.c.l.b16 %v1050
        %v3650 = vunpack.c.l.b16 %v1051
        %v3651 = vunpack.c.l.b16 %v1052
        %v3652 = vunpack.c.l.b16 %v1053
        %v3653 = vunpack.c.l.b16 %v1054
        %v3654 = vunpack.c.l.b16 %v1055
        %v3655 = vunpack.c.l.b16 %v1056
        %v3656 = vunpack.c.l.b16 %v1057
        %v3657 = vunpack.c.l.b16 %v1058
        %v3658 = vunpack.c.l.b16 %v1059
        %v3659 = vunpack.c.l.b16 %v1060
        %v3660 = vunpack.c.l.b16 %v1061
        %v3661 = vunpack.c.l.b16 %v1062
        %v3662 = vunpack.c.l.b16 %v1063
        %v3663 = vunpack.c.l.b16 %v1064
        %v3664 = vunpack.c.l.b16 %v1065
        %v3665 = vunpack.c.l.b16 %v1066
        %v3666 = vunpack.c.l.b16 %v1067
        %v3667 = vunpack.c.l.b16 %v1068
        %v3668 = vunpack.c.l.b16 %v1069
        %v3669 = vunpack.c.l.b16 %v1070
        %v3670 = vunpack.c.l.b16 %v1071
        %v3671 = vunpack.c.l.b16 %v1072
        %v3672 = vunpack.c.l.b16 %v1073
        %v3673 = vunpack.c.l.b16 %v1074
        %v3674 = vunpack.c.l.b16 %v1075
        %v3675 = vunpack.c.l.b16 %v1076
        %v3676 = vunpack.c.l.b16 %v1077
        %v3677 = vunpack.c.l.b16 %v1078
        %v3678 = vunpack.c.l.b16 %v1079
        %v3679 = vunpack.c.l.b16 %v1080
        %v3680 = vunpack.c.l.b16 %v1081
        %v3681 = vunpack.c.l.b16 %v1082
        %v3682 = vunpack.c.l.b16 %v1083
        %v3683 = vunpack.c.l.b16 %v1084
        %v3684 = vunpack.c.l.b16 %v1085
        %v3685 = vunpack.c.l.b16 %v1086
        %v3686 = vunpack.c.l.b16 %v1087
        %v3687 = vunpack.c.l.b16 %v1088
        %v3688 = vunpack.c.l.b16 %v1089
        %v3689 = vunpack.c.l.b16 %v1090
        %v3690 = vunpack.c.l.b16 %v1091
        %v3691 = vunpack.c.l.b16 %v1092
        %v3692 = vunpack.c.l.b16 %v1093
        %v3693 = vunpack.c.l.b16 %v1094
        %v3694 = vunpack.c.l.b16 %v1095
        %v3695 = vunpack.c.l.b16 %v1096
        %v3696 = vunpack.c.l.b16 %v1097
        %v3697 = vunpack.c.l.b16 %v1098
        %v3698 = vunpack.c.l.b16 %v1099
        %v3699 = vunpack.c.l.b16 %v1100
        %v3700 = vunpack.c.l.b16 %v1101
        %v3701 = vunpack.c.l.b16 %v1102
        %v3702 = vunpack.c.l.b16 %v1103
        %v3703 = vunpack.c.l.b16 %v1104
        %v3704 = vunpack.c.l.b16 %v1105
        %v3705 = vunpack.c.l.b16 %v1106
        %v3706 = vunpack.c.l.b16 %v1107
        %v3707 = vunpack.c.l.b16 %v1108
        %v3708 = vunpack.c.l.b16 %v1109
        %v3709 = vunpack.c.l.b16 %v1110
        %v3710 = vunpack.c.l.b16 %v1111
        %v3711 = vunpack.c.l.b16 %v1112
        %v3712 = vunpack.c.l.b16 %v1113
        %v3713 = vunpack.c.l.b16 %v1114
        %v3714 = vunpack.c.l.b16 %v1115
        %v3715 = vunpack.c.l.b16 %v1116
        %v3716 = vunpack.c.l.b16 %v1117
        %v3717 = vunpack.c.l.b16 %v1118
        %v3718 = vunpack.c.l.b16 %v1119
        %v3719 = vunpack.c.l.b16 %v1120
        %v3720 = vunpack.c.l.b16 %v1121
        %v3721 = vunpack.c.l.b16 %v1122
        %v3722 = vunpack.c.l.b16 %v1123
        %v3723 = vunpack.c.l.b16 %v1124
        %v3724 = vunpack.c.l.b16 %v1125
        %v3725 = vunpack.c.l.b16 %v1126
        %v3726 = vunpack.c.l.b16 %v1127
        %v3727 = vunpack.c.l.b16 %v1128
        %v3728 = vunpack.c.l.b16 %v1129
        %v3729 = vunpack.c.l.b16 %v1130
        %v3730 = vunpack.c.l.b16 %v1131
        %v3731 = vunpack.c.l.b16 %v1132
        %v3732 = vunpack.c.l.b16 %v1133
        %v3733 = vunpack.c.l.b16 %v1134
        %v3734 = vunpack.c.l.b16 %v1135
        %v3735 = vunpack.c.l.b16 %v1136
        %v3736 = vunpack.c.l.b16 %v1137
        %v3737 = vunpack.c.l.b16 %v1138
        %v3738 = vunpack.c.l.b16 %v1139
        %v3739 = vunpack.c.l.b16 %v1140
        %v3740 = vunpack.c.l.b16 %v1141
        %v3741 = vunpack.c.l.b16 %v1142
        %v3742 = vunpack.c.l.b16 %v1143
        %v3743 = vunpack.c.l.b16 %v1144
        %v3744 = vunpack.c.l.b16 %v1145
        %v3745 = vunpack.c.l.b16 %v1146
        %v3746 = vunpack.c.l.b16 %v1147
        %v3747 = vunpack.c.l.b16 %v1148
        %v3748 = vunpack.c.l.b16 %v1149
        %v3749 = vunpack.c.l.b16 %v1150
        %v3750 = vunpack.c.l.b16 %v1151
        %v3751 = vunpack.c.l.b16 %v1152
        %v3752 = vunpack.c.l.b16 %v1153
        %v3753 = vunpack.c.l.b16 %v1154
        %v3754 = vunpack.c.l.b16 %v1155
        %v3755 = vunpack.c.l.b16 %v1156
        %v3756 = vunpack.c.l.b16 %v1157
        %v3757 = vunpack.c.l.b16 %v1158
        %v3758 = vunpack.c.l.b16 %v1159
        %v3759 = vunpack.c.l.b16 %v1160
        %v3760 = vunpack.c.l.b16 %v1161
        %v3761 = vunpack.c.l.b16 %v1162
        %v3762 = vunpack.c.l.b16 %v1163
        %v3763 = vunpack.c.l.b16 %v1164
        %v3764 = vunpack.c.l.b16 %v1165
        %v3765 = vunpack.c.l.b16 %v1166
        %v3766 = vunpack.c.l.b16 %v1167
        %v3767 = vunpack.c.l.b16 %v1168
        %v3768 = vunpack.c.l.b16 %v1169
        %v3769 = vunpack.c.l.b16 %v1170
        %v3770 = vunpack.c.l.b16 %v1171
        %v3771 = vunpack.c.l.b16 %v1172
        %v3772 = vunpack.c.l.b16 %v1173
        %v3773 = vunpack.c.l.b16 %v1174
        %v3774 = vunpack.c.l.b16 %v1175
        %v3775 = vunpack.c.l.b16 %v1176
        %v3776 = vunpack.c.l.b16 %v1177
        %v3777 = vunpack.c.l.b16 %v1178
        %v3778 = vunpack.c.l.b16 %v1179
        %v3779 = vunpack.c.l.b16 %v1180
        %v3780 = vunpack.c.l.b16 %v1181
        %v3781 = vunpack.c.l.b16 %v1182
        %v3782 = vunpack.c.l.b16 %v1183
        %v3783 = vunpack.c.l.b16 %v1184
        %v3784 = vunpack.c.l.b16 %v1185
        %v3785 = vunpack.c.l.b16 %v1186
        %v3786 = vunpack.c.l.b16 %v1187
        %v3787 = vunpack.c.l.b16 %v1188
        %v3788 = vunpack.c.l.b16 %v1189
        %v3789 = vunpack.c.l.b16 %v1190
        %v3790 = vunpack.c.l.b16 %v1191
        %v3791 = vunpack.c.l.b16 %v1192
        %v3792 = vunpack.c.l.b16 %v1193
        %v3793 = vunpack.c.l.b16 %v1194
        %v3794 = vunpack.c.l.b16 %v1195
        %v3795 = vunpack.c.l.b16 %v1196
        %v3796 = vunpack.c.l.b16 %v1197
        %v3797 = vunpack.c.l.b16 %v1198
        %v3798 = vunpack.c.l.b16 %v1199
        %v3799 = vunpack.c.l.b16 %v1200
        %v3800 = vunpack.c.l.b16 %v1201
        %v3801 = vunpack.c.l.b16 %v1202
        %v3802 = vunpack.c.l.b16 %v1203
        %v3803 = vunpack.c.l.b16 %v1204
        %v3804 = vunpack.c.l.b16 %v1205
        %v3805 = vunpack.c.l.b16 %v1206
        %v3806 = vunpack.c.l.b16 %v1207
        %v3807 = vunpack.c.l.b16 %v1208
        %v3808 = vunpack.c.l.b16 %v1209
        %v3809 = vunpack.c.l.b16 %v1210
        %v3810 = vunpack.c.l.b16 %v1211
        %v3811 = vunpack.c.l.b16 %v1212
        %v3812 = vunpack.c.l.b16 %v1213
        %v3813 = vunpack.c.l.b16 %v1214
        %v3814 = vunpack.c.l.b16 %v1215
        %v3815 = vunpack.c.l.b16 %v1216
        %v3816 = vunpack.c.l.b16 %v1217
        %v3817 = vunpack.c.l.b16 %v1218
        %v3818 = vunpack.c.l.b16 %v1219
        %v3819 = vunpack.c.l.b16 %v1220
        %v3820 = vunpack.c.l.b16 %v1221
        %v3821 = vunpack.c.l.b16 %v1222
        %v3822 = vunpack.c.l.b16 %v1223
        %v3823 = vunpack.c.l.b16 %v1224
        %v3824 = vunpack.c.l.b16 %v1225
        %v3825 = vunpack.c.l.b16 %v1226
        %v3826 = vunpack.c.l.b16 %v1227
        %v3827 = vunpack.c.l.b16 %v1228
        %v3828 = vunpack.c.l.b16 %v1229
        %v3829 = vunpack.c.l.b16 %v1230
        %v3830 = vunpack.c.l.b16 %v1231
        %v3831 = vunpack.c.l.b16 %v1232
        %v3832 = vunpack.c.l.b16 %v1233
        %v3833 = vunpack.c.l.b16 %v1234
        %v3834 = vunpack.c.l.b16 %v1235
        %v3835 = vunpack.c.l.b16 %v1236
        %v3836 = vunpack.c.l.b16 %v1237
        %v3837 = vunpack.c.l.b16 %v1238
        %v3838 = vunpack.c.l.b16 %v1239
        %v3839 = vunpack.c.l.b16 %v1240
        %v3840 = vunpack.c.l.b16 %v1241
        %v3841 = vunpack.c.l.b16 %v1242
        %v3842 = vunpack.c.l.b16 %v1243
        %v3843 = vunpack.c.l.b16 %v1244
        %v3844 = vunpack.c.l.b16 %v1245
        %v3845 = vunpack.c.l.b16 %v1246
        %v3846 = vunpack.c.l.b16 %v1247
        %v3847 = vunpack.c.l.b16 %v1248
        %v3848 = vunpack.c.l.b16 %v1249
        %v3849 = vunpack.c.l.b16 %v1250
        %v3850 = vunpack.c.l.b16 %v1251
        %v3851 = vunpack.c.l.b16 %v1252
        %v3852 = vunpack.c.l.b16 %v1253
        %v3853 = vunpack.c.l.b16 %v1254
        %v3854 = vunpack.c.l.b16 %v1255
        %v3855 = vunpack.c.l.b16 %v1256
        %v3856 = vunpack.c.l.b16 %v1257
        %v3857 = vunpack.c.l.b16 %v1258
        %v3858 = vunpack.c.l.b16 %v1259
        %v3859 = vunpack.c.l.b16 %v1260
        %v3860 = vunpack.c.l.b16 %v1261
        %v3861 = vunpack.c.l.b16 %v1262
        %v3862 = vunpack.c.l.b16 %v1263
        %v3863 = vunpack.c.l.b16 %v1264
        %v3864 = vunpack.c.l.b16 %v1265
        %v3865 = vunpack.c.l.b16 %v1266
        %v3866 = vunpack.c.l.b16 %v1267
        %v3867 = vunpack.c.l.b16 %v1268
        %v3868 = vunpack.c.l.b16 %v1269
        %v3869 = vunpack.c.l.b16 %v1270
        %v3870 = vunpack.c.l.b16 %v1271
        %v3871 = vunpack.c.l.b16 %v1272
        %v3872 = vunpack.c.l.b16 %v1273
        %v3873 = vunpack.c.l.b16 %v1274
        %v3874 = vunpack.c.l.b16 %v1275
        %v3875 = vunpack.c.l.b16 %v1276
        %v3876 = vunpack.c.l.b16 %v1277
        %v3877 = vunpack.c.l.b16 %v1278
        %v3878 = vunpack.c.l.b16 %v1279
        %v3879 = vunpack.c.l.b16 %v1280
        %v3880 = vunpack.c.l.b16 %v1281
        %v3881 = vunpack.c.l.b16 %v1282
        %v3882 = vunpack.c.l.b16 %v1283
        %v3883 = vunpack.c.l.b16 %v1284
        %v3884 = vunpack.c.l.b16 %v1285
        %v3885 = vunpack.c.l.b16 %v1286
        %v3886 = vunpack.c.l.b16 %v1287
        %v3887 = vunpack.c.l.b16 %v1288
        %v3888 = vunpack.c.l.b16 %v1289
        %v3889 = vunpack.c.l.b16 %v1290
        %v3890 = vunpack.c.l.b16 %v1291
        %v3891 = vunpack.c.l.b16 %v1292
        %v3892 = vunpack.c.l.b16 %v1293
        %v3893 = vunpack.c.l.b16 %v1294
        %v3894 = vunpack.c.l.b16 %v1295
        %v3895 = vunpack.c.l.b16 %v1296
        %v3896 = vunpack.c.l.b16 %v1297
        %v3897 = vunpack.c.l.b16 %v1298
        %v3898 = vunpack.c.l.b16 %v1299
        %v3899 = vunpack.c.l.b16 %v1300
        %v3900 = vunpack.c.l.b16 %v1301
        %v3901 = vunpack.c.l.b16 %v1302
        %v3902 = vunpack.c.l.b16 %v1303
        %v3903 = vunpack.c.l.b16 %v1304
        %v3904 = vunpack.c.l.b16 %v1305
        %v3905 = vunpack.c.l.b16 %v1306
        %v3906 = vunpack.c.l.b16 %v1307
        %v3907 = vunpack.c.l.b16 %v1308
        %v3908 = vunpack.c.l.b16 %v1309
        %v3909 = vunpack.c.l.b16 %v1310
        %v3910 = vunpack.c.l.b16 %v1311
        %v3911 = vunpack.c.l.b16 %v1312
        %v3912 = vunpack.c.l.b16 %v1313
        %v3913 = vunpack.c.l.b16 %v1314
        %v3914 = vunpack.c.l.b16 %v1315
        %v3915 = vunpack.c.l.b16 %v1316
        %v3916 = vunpack.c.l.b16 %v1317
        %v3917 = vunpack.c.l.b16 %v1318
        %v3918 = vunpack.c.l.b16 %v1319
        %v3919 = vunpack.c.l.b16 %v1320
        %v3920 = vunpack.c.l.b16 %v1321
        %v3921 = vunpack.c.l.b16 %v1322
        %v3922 = vunpack.c.l.b16 %v1323
        %v3923 = vunpack.c.l.b16 %v1324
        %v3924 = vunpack.c.l.b16 %v1325
        %v3925 = vunpack.c.l.b16 %v1326
        %v3926 = vunpack.c.l.b16 %v1327
        %v3927 = vunpack.c.l.b16 %v1328
        %v3928 = vunpack.c.l.b16 %v1329
        %v3929 = vunpack.c.l.b16 %v1330
        %v3930 = vunpack.c.l.b16 %v1331
        %v3931 = vunpack.c.l.b16 %v1332
        %v3932 = vunpack.c.l.b16 %v1333
        %v3933 = vunpack.c.l.b16 %v1334
        %v3934 = vunpack.c.l.b16 %v1335
        %v3935 = vunpack.c.l.b16 %v1336
        %v3936 = vunpack.c.l.b16 %v1337
        %v3937 = vunpack.c.l.b16 %v1338
        %v3938 = vunpack.c.l.b16 %v1339
        %v3939 = vunpack.c.l.b16 %v1340
        %v3940 = vunpack.c.l.b16 %v1341
        %v3941 = vunpack.c.l.b16 %v1342
        %v3942 = vunpack.c.l.b16 %v1343
        %v3943 = vunpack.c.l.b16 %v1344
        %v3944 = vunpack.c.l.b16 %v1345
        %v3945 = vunpack.c.l.b16 %v1346
        %v3946 = vunpack.c.l.b16 %v1347
        %v3947 = vunpack.c.l.b16 %v1348
        %v3948 = vunpack.c.l.b16 %v1349
        %v3949 = vunpack.c.l.b16 %v1350
        %v3950 = vunpack.c.l.b16 %v1351
        %v3951 = vunpack.c.l.b16 %v1352
        %v3952 = vunpack.c.l.b16 %v1353
        %v3953 = vunpack.c.l.b16 %v1354
        %v3954 = vunpack.c.l.b16 %v1355
        %v3955 = vunpack.c.l.b16 %v1356
        %v3956 = vunpack.c.l.b16 %v1357
        %v3957 = vunpack.c.l.b16 %v1358
        %v3958 = vunpack.c.l.b16 %v1359
        %v3959 = vunpack.c.l.b16 %v1360
        %v3960 = vunpack.c.l.b16 %v1361
        %v3961 = vunpack.c.l.b16 %v1362
        %v3962 = vunpack.c.l.b16 %v1363
        %v3963 = vunpack.c.l.b16 %v1364
        %v3964 = vunpack.c.l.b16 %v1365
        %v3965 = vunpack.c.l.b16 %v1366
        %v3966 = vunpack.c.l.b16 %v1367
        %v3967 = vunpack.c.l.b16 %v1368
        %v3968 = vunpack.c.l.b16 %v1369
        %v3969 = vunpack.c.l.b16 %v1370
        %v3970 = vunpack.c.l.b16 %v1371
        %v3971 = vunpack.c.l.b16 %v1372
        %v3972 = vunpack.c.l.b16 %v1373
        %v3973 = vunpack.c.l.b16 %v1374
        %v3974 = vunpack.c.l.b16 %v1375
        %v3975 = vunpack.c.l.b16 %v1376
        %v3976 = vunpack.c.l.b16 %v1377
        %v3977 = vunpack.c.l.b16 %v1378
        %v3978 = vunpack.c.l.b16 %v1379
        %v3979 = vunpack.c.l.b16 %v1380
        %v3980 = vunpack.c.l.b16 %v1381
        %v3981 = vunpack.c.l.b16 %v1382
        %v3982 = vunpack.c.l.b16 %v1383
        %v3983 = vunpack.c.l.b16 %v1384
        %v3984 = vunpack.c.l.b16 %v1385
        %v3985 = vunpack.c.l.b16 %v1386
        %v3986 = vunpack.c.l.b16 %v1387
        %v3987 = vunpack.c.l.b16 %v1388
        %v3988 = vunpack.c.l.b16 %v1389
        %v3989 = vunpack.c.l.b16 %v1390
        %v3990 = vunpack.c.l.b16 %v1391
        %v3991 = vunpack.c.l.b16 %v1392
        %v3992 = vunpack.c.l.b16 %v1393
        %v3993 = vunpack.c.l.b16 %v1394
        %v3994 = vunpack.c.l.b16 %v1395
        %v3995 = vunpack.c.l.b16 %v1396
        %v3996 = vunpack.c.l.b16 %v1397
        %v3997 = vunpack.c.l.b16 %v1398
        %v3998 = vunpack.c.l.b16 %v1399
        %v3999 = vunpack.c.l.b16 %v1400
        %v4000 = vunpack.c.l.b16 %v1401
        %v4001 = vunpack.c.l.b16 %v1402
        %v4002 = vunpack.c.l.b16 %v1403
        %v4003 = vpack.c.b16 %v3428, %v3427
        %v4004 = vpack.c.b16 %v3430, %v3429
        %v4005 = vpack.c.b16 %v3432, %v3431
        %v4006 = vpack.c.b16 %v3434, %v3433
        %v4007 = vpack.c.b16 %v3436, %v3435
        %v4008 = vpack.c.b16 %v3438, %v3437
        %v4009 = vpack.c.b16 %v3440, %v3439
        %v4010 = vpack.c.b16 %v3442, %v3441
        %v4011 = vpack.c.b16 %v3444, %v3443
        %v4012 = vpack.c.b16 %v3446, %v3445
        %v4013 = vpack.c.b16 %v3448, %v3447
        %v4014 = vpack.c.b16 %v3450, %v3449
        %v4015 = vpack.c.b16 %v3452, %v3451
        %v4016 = vpack.c.b16 %v3454, %v3453
        %v4017 = vpack.c.b16 %v3456, %v3455
        %v4018 = vpack.c.b16 %v3458, %v3457
        %v4019 = vpack.c.b16 %v3460, %v3459
        %v4020 = vpack.c.b16 %v3462, %v3461
        %v4021 = vpack.c.b16 %v3464, %v3463
        %v4022 = vpack.c.b16 %v3466, %v3465
        %v4023 = vpack.c.b16 %v3468, %v3467
        %v4024 = vpack.c.b16 %v3470, %v3469
        %v4025 = vpack.c.b16 %v3472, %v3471
        %v4026 = vpack.c.b16 %v3474, %v3473
        %v4027 = vpack.c.b16 %v3476, %v3475
        %v4028 = vpack.c.b16 %v3478, %v3477
        %v4029 = vpack.c.b16 %v3480, %v3479
        %v4030 = vpack.c.b16 %v3482, %v3481
        %v4031 = vpack.c.b16 %v3484, %v3483
        %v4032 = vpack.c.b16 %v3486, %v3485
        %v4033 = vpack.c.b16 %v3488, %v3487
        %v4034 = vpack.c.b16 %v3490, %v3489
        %v4035 = vpack.c.b16 %v3492, %v3491
        %v4036 = vpack.c.b16 %v3494, %v3493
        %v4037 = vpack.c.b16 %v3496, %v3495
        %v4038 = vpack.c.b16 %v3498, %v3497
        %v4039 = vpack.c.b16 %v3500, %v3499
        %v4040 = vpack.c.b16 %v3502, %v3501
        %v4041 = vpack.c.b16 %v3504, %v3503
        %v4042 = vpack.c.b16 %v3506, %v3505
        %v4043 = vpack.c.b16 %v3508, %v3507
        %v4044 = vpack.c.b16 %v3510, %v3509
        %v4045 = vpack.c.b16 %v3512, %v3511
        %v4046 = vpack.c.b16 %v3514, %v3513
        %v4047 = vpack.c.b16 %v3516, %v3515
        %v4048 = vpack.c.b16 %v3518, %v3517
        %v4049 = vpack.c.b16 %v3520, %v3519
        %v4050 = vpack.c.b16 %v3522, %v3521
        %v4051 = vpack.c.b16 %v3524, %v3523
        %v4052 = vpack.c.b16 %v3526, %v3525
        %v4053 = vpack.c.b16 %v3528, %v3527
        %v4054 = vpack.c.b16 %v3530, %v3529
        %v4055 = vpack.c.b16 %v3532, %v3531
        %v4056 = vpack.c.b16 %v3534, %v3533
        %v4057 = vpack.c.b16 %v3536, %v3535
        %v4058 = vpack.c.b16 %v3538, %v3537
        %v4059 = vpack.c.b16 %v3540, %v3539
        %v4060 = vpack.c.b16 %v3542, %v3541
        %v4061 = vpack.c.b16 %v3544, %v3543
        %v4062 = vpack.c.b16 %v3546, %v3545
        %v4063 = vpack.c.b16 %v3548, %v3547
        %v4064 = vpack.c.b16 %v3550, %v3549
        %v4065 = vpack.c.b16 %v3552, %v3551
        %v4066 = vpack.c.b16 %v3554, %v3553
        %v4067 = vpack.c.b16 %v3556, %v3555
        %v4068 = vpack.c.b16 %v3558, %v3557
        %v4069 = vpack.c.b16 %v3560, %v3559
        %v4070 = vpack.c.b16 %v3562, %v3561
        %v4071 = vpack.c.b16 %v3564, %v3563
        %v4072 = vpack.c.b16 %v3566, %v3565
        %v4073 = vpack.c.b16 %v3568, %v3567
        %v4074 = vpack.c.b16 %v3570, %v3569
        %v4075 = vpack.c.b16 %v3572, %v3571
        %v4076 = vpack.c.b16 %v3574, %v3573
        %v4077 = vpack.c.b16 %v3576, %v3575
        %v4078 = vpack.c.b16 %v3578, %v3577
        %v4079 = vpack.c.b16 %v3580, %v3579
        %v4080 = vpack.c.b16 %v3582, %v3581
        %v4081 = vpack.c.b16 %v3584, %v3583
        %v4082 = vpack.c.b16 %v3586, %v3585
        %v4083 = vpack.c.b16 %v3588, %v3587
        %v4084 = vpack.c.b16 %v3590, %v3589
        %v4085 = vpack.c.b16 %v3592, %v3591
        %v4086 = vpack.c.b16 %v3594, %v3593
        %v4087 = vpack.c.b16 %v3596, %v3595
        %v4088 = vpack.c.b16 %v3598, %v3597
        %v4089 = vpack.c.b16 %v3600, %v3599
        %v4090 = vpack.c.b16 %v3602, %v3601
        %v4091 = vpack.c.b16 %v3604, %v3603
        %v4092 = vpack.c.b16 %v3606, %v3605
        %v4093 = vpack.c.b16 %v3608, %v3607
        %v4094 = vpack.c.b16 %v3610, %v3609
        %v4095 = vpack.c.b16 %v3612, %v3611
        %v4096 = vpack.c.b16 %v3614, %v3613
        %v4097 = vpack.c.b16 %v3616, %v3615
        %v4098 = vpack.c.b16 %v3618, %v3617
        %v4099 = vpack.c.b16 %v3620, %v3619
        %v4100 = vpack.c.b16 %v3622, %v3621
        %v4101 = vpack.c.b16 %v3624, %v3623
        %v4102 = vpack.c.b16 %v3626, %v3625
        %v4103 = vpack.c.b16 %v3628, %v3627
        %v4104 = vpack.c.b16 %v3630, %v3629
        %v4105 = vpack.c.b16 %v3632, %v3631
        %v4106 = vpack.c.b16 %v3634, %v3633
        %v4107 = vpack.c.b16 %v3636, %v3635
        %v4108 = vpack.c.b16 %v3638, %v3637
        %v4109 = vpack.c.b16 %v3640, %v3639
        %v4110 = vpack.c.b16 %v3642, %v3641
        %v4111 = vpack.c.b16 %v3644, %v3643
        %v4112 = vpack.c.b16 %v3646, %v3645
        %v4113 = vpack.c.b16 %v3648, %v3647
        %v4114 = vpack.c.b16 %v3650, %v3649
        %v4115 = vpack.c.b16 %v3652, %v3651
        %v4116 = vpack.c.b16 %v3654, %v3653
        %v4117 = vpack.c.b16 %v3656, %v3655
        %v4118 = vpack.c.b16 %v3658, %v3657
        %v4119 = vpack.c.b16 %v3660, %v3659
        %v4120 = vpack.c.b16 %v3662, %v3661
        %v4121 = vpack.c.b16 %v3664, %v3663
        %v4122 = vpack.c.b16 %v3666, %v3665
        %v4123 = vpack.c.b16 %v3668, %v3667
        %v4124 = vpack.c.b16 %v3670, %v3669
        %v4125 = vpack.c.b16 %v3672, %v3671
        %v4126 = vpack.c.b16 %v3674, %v3673
        %v4127 = vpack.c.b16 %v3676, %v3675
        %v4128 = vpack.c.b16 %v3678, %v3677
        %v4129 = vpack.c.b16 %v3680, %v3679
        %v4130 = vpack.c.b16 %v3682, %v3681
        %v4131 = vpack.c.b16 %v3684, %v3683
        %v4132 = vpack.c.b16 %v3686, %v3685
        %v4133 = vpack.c.b16 %v3688, %v3687
        %v4134 = vpack.c.b16 %v3690, %v3689
        %v4135 = vpack.c.b16 %v3692, %v3691
        %v4136 = vpack.c.b16 %v3694, %v3693
        %v4137 = vpack.c.b16 %v3696, %v3695
        %v4138 = vpack.c.b16 %v3698, %v3697
        %v4139 = vpack.c.b16 %v3700, %v3699
        %v4140 = vpack.c.b16 %v3702, %v3701
        %v4141 = vpack.c.b16 %v3704, %v3703
        %v4142 = vpack.c.b16 %v3706, %v3705
        %v4143 = vpack.c.b16 %v3708, %v3707
        %v4144 = vpack.c.b16 %v3710, %v3709
        %v4145 = vpack.c.b16 %v3712, %v3711
        %v4146 = vpack.c.b16 %v3714, %v3713
        %v4147 = vpack.c.b16 %v3716, %v3715
        %v4148 = vpack.c.b16 %v3718, %v3717
        %v4149 = vpack.c.b16 %v3720, %v3719
        %v4150 = vpack.c.b16 %v3722, %v3721
        %v4151 = vpack.c.b16 %v3724, %v3723
        %v4152 = vpack.c.b16 %v3726, %v3725
        %v4153 = vpack.c.b16 %v3728, %v3727
        %v4154 = vpack.c.b16 %v3730, %v3729
        %v4155 = vpack.c.b16 %v3732, %v3731
        %v4156 = vpack.c.b16 %v3734, %v3733
        %v4157 = vpack.c.b16 %v3736, %v3735
        %v4158 = vpack.c.b16 %v3738, %v3737
        %v4159 = vpack.c.b16 %v3740, %v3739
        %v4160 = vpack.c.b16 %v3742, %v3741
        %v4161 = vpack.c.b16 %v3744, %v3743
        %v4162 = vpack.c.b16 %v3746, %v3745
        %v4163 = vpack.c.b16 %v3748, %v3747
        %v4164 = vpack.c.b16 %v3750, %v3749
        %v4165 = vpack.c.b16 %v3752, %v3751
        %v4166 = vpack.c.b16 %v3754, %v3753
        %v4167 = vpack.c.b16 %v3756, %v3755
        %v4168 = vpack.c.b16 %v3758, %v3757
        %v4169 = vpack.c.b16 %v3760, %v3759
        %v4170 = vpack.c.b16 %v3762, %v3761
        %v4171 = vpack.c.b16 %v3764, %v3763
        %v4172 = vpack.c.b16 %v3766, %v3765
        %v4173 = vpack.c.b16 %v3768, %v3767
        %v4174 = vpack.c.b16 %v3770, %v3769
        %v4175 = vpack.c.b16 %v3772, %v3771
        %v4176 = vpack.c.b16 %v3774, %v3773
        %v4177 = vpack.c.b16 %v3776, %v3775
        %v4178 = vpack.c.b16 %v3778, %v3777
        %v4179 = vpack.c.b16 %v3780, %v3779
        %v4180 = vpack.c.b16 %v3782, %v3781
        %v4181 = vpack.c.b16 %v3784, %v3783
        %v4182 = vpack.c.b16 %v3786, %v3785
        %v4183 = vpack.c.b16 %v3788, %v3787
        %v4184 = vpack.c.b16 %v3790, %v3789
        %v4185 = vpack.c.b16 %v3792, %v3791
        %v4186 = vpack.c.b16 %v3794, %v3793
        %v4187 = vpack.c.b16 %v3796, %v3795
        %v4188 = vpack.c.b16 %v3798, %v3797
        %v4189 = vpack.c.b16 %v3800, %v3799
        %v4190 = vpack.c.b16 %v3802, %v3801
        %v4191 = vpack.c.b16 %v3804, %v3803
        %v4192 = vpack.c.b16 %v3806, %v3805
        %v4193 = vpack.c.b16 %v3808, %v3807
        %v4194 = vpack.c.b16 %v3810, %v3809
        %v4195 = vpack.c.b16 %v3812, %v3811
        %v4196 = vpack.c.b16 %v3814, %v3813
        %v4197 = vpack.c.b16 %v3816, %v3815
        %v4198 = vpack.c.b16 %v3818, %v3817
        %v4199 = vpack.c.b16 %v3820, %v3819
        %v4200 = vpack.c.b16 %v3822, %v3821
        %v4201 = vpack.c.b16 %v3824, %v3823
        %v4202 = vpack.c.b16 %v3826, %v3825
        %v4203 = vpack.c.b16 %v3828, %v3827
        %v4204 = vpack.c.b16 %v3830, %v3829
        %v4205 = vpack.c.b16 %v3832, %v3831
        %v4206 = vpack.c.b16 %v3834, %v3833
        %v4207 = vpack.c.b16 %v3836, %v3835
        %v4208 = vpack.c.b16 %v3838, %v3837
        %v4209 = vpack.c.b16 %v3840, %v3839
        %v4210 = vpack.c.b16 %v3842, %v3841
        %v4211 = vpack.c.b16 %v3844, %v3843
        %v4212 = vpack.c.b16 %v3846, %v3845
        %v4213 = vpack.c.b16 %v3848, %v3847
        %v4214 = vpack.c.b16 %v3850, %v3849
        %v4215 = vpack.c.b16 %v3852, %v3851
        %v4216 = vpack.c.b16 %v3854, %v3853
        %v4217 = vpack.c.b16 %v3856, %v3855
        %v4218 = vpack.c.b16 %v3858, %v3857
        %v4219 = vpack.c.b16 %v3860, %v3859
        %v4220 = vpack.c.b16 %v3862, %v3861
        %v4221 = vpack.c.b16 %v3864, %v3863
        %v4222 = vpack.c.b16 %v3866, %v3865
        %v4223 = vpack.c.b16 %v3868, %v3867
        %v4224 = vpack.c.b16 %v3870, %v3869
        %v4225 = vpack.c.b16 %v3872, %v3871
        %v4226 = vpack.c.b16 %v3874, %v3873
        %v4227 = vpack.c.b16 %v3876, %v3875
        %v4228 = vpack.c.b16 %v3878, %v3877
        %v4229 = vpack.c.b16 %v3880, %v3879
        %v4230 = vpack.c.b16 %v3882, %v3881
        %v4231 = vpack.c.b16 %v3884, %v3883
        %v4232 = vpack.c.b16 %v3886, %v3885
        %v4233 = vpack.c.b16 %v3888, %v3887
        %v4234 = vpack.c.b16 %v3890, %v3889
        %v4235 = vpack.c.b16 %v3892, %v3891
        %v4236 = vpack.c.b16 %v3894, %v3893
        %v4237 = vpack.c.b16 %v3896, %v3895
        %v4238 = vpack.c.b16 %v3898, %v3897
        %v4239 = vpack.c.b16 %v3900, %v3899
        %v4240 = vpack.c.b16 %v3902, %v3901
        %v4241 = vpack.c.b16 %v3904, %v3903
        %v4242 = vpack.c.b16 %v3906, %v3905
        %v4243 = vpack.c.b16 %v3908, %v3907
        %v4244 = vpack.c.b16 %v3910, %v3909
        %v4245 = vpack.c.b16 %v3912, %v3911
        %v4246 = vpack.c.b16 %v3914, %v3913
        %v4247 = vpack.c.b16 %v3916, %v3915
        %v4248 = vpack.c.b16 %v3918, %v3917
        %v4249 = vpack.c.b16 %v3920, %v3919
        %v4250 = vpack.c.b16 %v3922, %v3921
        %v4251 = vpack.c.b16 %v3924, %v3923
        %v4252 = vpack.c.b16 %v3926, %v3925
        %v4253 = vpack.c.b16 %v3928, %v3927
        %v4254 = vpack.c.b16 %v3930, %v3929
        %v4255 = vpack.c.b16 %v3932, %v3931
        %v4256 = vpack.c.b16 %v3934, %v3933
        %v4257 = vpack.c.b16 %v3936, %v3935
        %v4258 = vpack.c.b16 %v3938, %v3937
        %v4259 = vpack.c.b16 %v3940, %v3939
        %v4260 = vpack.c.b16 %v3942, %v3941
        %v4261 = vpack.c.b16 %v3944, %v3943
        %v4262 = vpack.c.b16 %v3946, %v3945
        %v4263 = vpack.c.b16 %v3948, %v3947
        %v4264 = vpack.c.b16 %v3950, %v3949
        %v4265 = vpack.c.b16 %v3952, %v3951
        %v4266 = vpack.c.b16 %v3954, %v3953
        %v4267 = vpack.c.b16 %v3956, %v3955
        %v4268 = vpack.c.b16 %v3958, %v3957
        %v4269 = vpack.c.b16 %v3960, %v3959
        %v4270 = vpack.c.b16 %v3962, %v3961
        %v4271 = vpack.c.b16 %v3964, %v3963
        %v4272 = vpack.c.b16 %v3966, %v3965
        %v4273 = vpack.c.b16 %v3968, %v3967
        %v4274 = vpack.c.b16 %v3970, %v3969
        %v4275 = vpack.c.b16 %v3972, %v3971
        %v4276 = vpack.c.b16 %v3974, %v3973
        %v4277 = vpack.c.b16 %v3976, %v3975
        %v4278 = vpack.c.b16 %v3978, %v3977
        %v4279 = vpack.c.b16 %v3980, %v3979
        %v4280 = vpack.c.b16 %v3982, %v3981
        %v4281 = vpack.c.b16 %v3984, %v3983
        %v4282 = vpack.c.b16 %v3986, %v3985
        %v4283 = vpack.c.b16 %v3988, %v3987
        %v4284 = vpack.c.b16 %v3990, %v3989
        %v4285 = vpack.c.b16 %v3992, %v3991
        %v4286 = vpack.c.b16 %v3994, %v3993
        %v4287 = vpack.c.b16 %v3996, %v3995
        %v4288 = vpack.c.b16 %v3998, %v3997
        %v4289 = vpack.c.b16 %v4000, %v3999
        %v4290 = vpack.c.b16 %v4002, %v4001
        %4579 = vmatprep.subr.bf16.mxu0 0
        %4580 = vmatpush1.bf16.msra.mxu0 %v4010
        %4581 = vmatprep.subr.bf16.mxu0 0
        %4582 = vmatpush1.bf16.msra.mxu0 %v4009
        %4583 = vmatprep.subr.bf16.mxu0 0
        %4584 = vmatpush1.bf16.msra.mxu0 %v4008
        %4585 = vmatprep.subr.bf16.mxu0 0
        %4586 = vmatpush1.bf16.msra.mxu0 %v4007
        %4587 = vmatprep.subr.bf16.mxu0 0
        %4588 = vmatpush1.bf16.msra.mxu0 %v4006
        %4589 = vmatprep.subr.bf16.mxu0 0
        %4590 = vmatpush1.bf16.msra.mxu0 %v4005
        %4591 = vmatprep.subr.bf16.mxu0 0
        %4592 = vmatpush1.bf16.msra.mxu0 %v4004
        %4593 = vmatprep.subr.bf16.mxu0 0
        %4594 = vmatpush1.bf16.msra.mxu0 %v4003
        %4595 = vmatprep.subr.bf16.mxu0 0
        %4596 = vmatpush2.bf16.msra.mxu0 %v4018
        %4597 = vmatprep.subr.bf16.mxu0 0
        %4598 = vmatpush2.bf16.msra.mxu0 %v4017
        %4599 = vmatprep.subr.bf16.mxu0 0
        %4600 = vmatpush2.bf16.msra.mxu0 %v4016
        %4601 = vmatprep.subr.bf16.mxu0 0
        %4602 = vmatpush2.bf16.msra.mxu0 %v4015
        %4603 = vmatprep.subr.bf16.mxu0 0
        %4604 = vmatpush2.bf16.msra.mxu0 %v4014
        %4605 = vmatprep.subr.bf16.mxu0 0
        %4606 = vmatpush2.bf16.msra.mxu0 %v4013
        %4607 = vmatprep.subr.bf16.mxu0 0
        %4608 = vmatpush2.bf16.msra.mxu0 %v4012
        %4609 = vmatprep.subr.bf16.mxu0 0
        %4610 = vmatpush2.bf16.msra.mxu0 %v4011
        %4611 = vmatprep.mubr.bf16.mxu0 %v2276
        %4612 = vmatmul.mubr.bf16.gmra.mxu0 %v2275
        %v4613 = vpop.f32.mrf.mxu0
        %v4614 = vadd.f32 %v1409, %v4613
        %v4615 = vpop.f32.mrf.mxu0
        %v4616 = vpop.f32.mrf.mxu0
        %v4617 = vadd.f32 %v1409, %v4616
        %v4618 = vpop.f32.mrf.mxu0
        %4619 = vmatprep.mubr.bf16.mxu0 %v2312
        %4620 = vmatmul.mubr.bf16.gmra.mxu0 %v2311
        %v4621 = vpop.f32.mrf.mxu0
        %v4622 = vadd.f32 %v1409, %v4621
        %v4623 = vpop.f32.mrf.mxu0
        %v4624 = vpop.f32.mrf.mxu0
        %v4625 = vadd.f32 %v1409, %v4624
        %v4626 = vpop.f32.mrf.mxu0
        %4627 = vmatprep.mubr.bf16.mxu0 %v2348
        %4628 = vmatmul.mubr.bf16.gmra.mxu0 %v2347
        %v4629 = vpop.f32.mrf.mxu0
        %v4630 = vadd.f32 %v1409, %v4629
        %v4631 = vpop.f32.mrf.mxu0
        %v4632 = vpop.f32.mrf.mxu0
        %v4633 = vadd.f32 %v1409, %v4632
        %v4634 = vpop.f32.mrf.mxu0
        %4635 = vmatprep.mubr.bf16.mxu0 %v2384
        %4636 = vmatmul.mubr.bf16.gmra.mxu0 %v2383
        %v4637 = vpop.f32.mrf.mxu0
        %v4638 = vadd.f32 %v1409, %v4637
        %v4639 = vpop.f32.mrf.mxu0
        %v4640 = vpop.f32.mrf.mxu0
        %v4641 = vadd.f32 %v1409, %v4640
        %v4642 = vpop.f32.mrf.mxu0
        %4643 = vmatprep.mubr.bf16.mxu0 %v2420
        %4644 = vmatmul.mubr.bf16.gmra.mxu0 %v2419
        %v4645 = vpop.f32.mrf.mxu0
        %v4646 = vadd.f32 %v1409, %v4645
        %v4647 = vpop.f32.mrf.mxu0
        %v4648 = vpop.f32.mrf.mxu0
        %v4649 = vadd.f32 %v1409, %v4648
        %v4650 = vpop.f32.mrf.mxu0
        %4651 = vmatprep.mubr.bf16.mxu0 %v2456
        %4652 = vmatmul.mubr.bf16.gmra.mxu0 %v2455
        %v4653 = vpop.f32.mrf.mxu0
        %v4654 = vadd.f32 %v1409, %v4653
        %v4655 = vpop.f32.mrf.mxu0
        %v4656 = vpop.f32.mrf.mxu0
        %v4657 = vadd.f32 %v1409, %v4656
        %v4658 = vpop.f32.mrf.mxu0
        %4659 = vmatprep.mubr.bf16.mxu0 %v2492
        %4660 = vmatmul.mubr.bf16.gmra.mxu0 %v2491
        %v4661 = vpop.f32.mrf.mxu0
        %v4662 = vadd.f32 %v1409, %v4661
        %v4663 = vpop.f32.mrf.mxu0
        %v4664 = vpop.f32.mrf.mxu0
        %v4665 = vadd.f32 %v1409, %v4664
        %v4666 = vpop.f32.mrf.mxu0
        %4667 = vmatprep.mubr.bf16.mxu0 %v2528
        %4668 = vmatmul.mubr.bf16.gmra.mxu0 %v2527
        %v4669 = vpop.f32.mrf.mxu0
        %v4670 = vadd.f32 %v1409, %v4669
        %v4671 = vpop.f32.mrf.mxu0
        %v4672 = vpop.f32.mrf.mxu0
        %v4673 = vadd.f32 %v1409, %v4672
        %v4674 = vpop.f32.mrf.mxu0
        %4675 = vdwg.mxu0
        %4676 = vmatprep.subr.bf16.mxu0 0
        %4677 = vmatpush1.bf16.msra.mxu0 %v4026
        %4678 = vmatprep.subr.bf16.mxu0 0
        %4679 = vmatpush1.bf16.msra.mxu0 %v4025
        %4680 = vmatprep.subr.bf16.mxu0 0
        %4681 = vmatpush1.bf16.msra.mxu0 %v4024
        %4682 = vmatprep.subr.bf16.mxu0 0
        %4683 = vmatpush1.bf16.msra.mxu0 %v4023
        %4684 = vmatprep.subr.bf16.mxu0 0
        %4685 = vmatpush1.bf16.msra.mxu0 %v4022
        %4686 = vmatprep.subr.bf16.mxu0 0
        %4687 = vmatpush1.bf16.msra.mxu0 %v4021
        %4688 = vmatprep.subr.bf16.mxu0 0
        %4689 = vmatpush1.bf16.msra.mxu0 %v4020
        %4690 = vmatprep.subr.bf16.mxu0 0
        %4691 = vmatpush1.bf16.msra.mxu0 %v4019
        %4692 = vmatprep.subr.bf16.mxu0 0
        %4693 = vmatpush2.bf16.msra.mxu0 %v4034
        %4694 = vmatprep.subr.bf16.mxu0 0
        %4695 = vmatpush2.bf16.msra.mxu0 %v4033
        %4696 = vmatprep.subr.bf16.mxu0 0
        %4697 = vmatpush2.bf16.msra.mxu0 %v4032
        %4698 = vmatprep.subr.bf16.mxu0 0
        %4699 = vmatpush2.bf16.msra.mxu0 %v4031
        %4700 = vmatprep.subr.bf16.mxu0 0
        %4701 = vmatpush2.bf16.msra.mxu0 %v4030
        %4702 = vmatprep.subr.bf16.mxu0 0
        %4703 = vmatpush2.bf16.msra.mxu0 %v4029
        %4704 = vmatprep.subr.bf16.mxu0 0
        %4705 = vmatpush2.bf16.msra.mxu0 %v4028
        %4706 = vmatprep.subr.bf16.mxu0 0
        %4707 = vmatpush2.bf16.msra.mxu0 %v4027
        %4708 = vmatprep.mubr.bf16.mxu0 %v2278
        %4709 = vmatmul.mubr.bf16.gmra.mxu0 %v2277
        %v4710 = vpop.f32.mrf.mxu0
        %v4711 = vadd.f32 %v4614, %v4710
        %v4712 = vpop.f32.mrf.mxu0
        %v4713 = vpop.f32.mrf.mxu0
        %v4714 = vadd.f32 %v4617, %v4713
        %v4715 = vpop.f32.mrf.mxu0
        %4716 = vmatprep.mubr.bf16.mxu0 %v2314
        %4717 = vmatmul.mubr.bf16.gmra.mxu0 %v2313
        %v4718 = vpop.f32.mrf.mxu0
        %v4719 = vadd.f32 %v4622, %v4718
        %v4720 = vpop.f32.mrf.mxu0
        %v4721 = vpop.f32.mrf.mxu0
        %v4722 = vadd.f32 %v4625, %v4721
        %v4723 = vpop.f32.mrf.mxu0
        %4724 = vmatprep.mubr.bf16.mxu0 %v2350
        %4725 = vmatmul.mubr.bf16.gmra.mxu0 %v2349
        %v4726 = vpop.f32.mrf.mxu0
        %v4727 = vadd.f32 %v4630, %v4726
        %v4728 = vpop.f32.mrf.mxu0
        %v4729 = vpop.f32.mrf.mxu0
        %v4730 = vadd.f32 %v4633, %v4729
        %v4731 = vpop.f32.mrf.mxu0
        %4732 = vmatprep.mubr.bf16.mxu0 %v2386
        %4733 = vmatmul.mubr.bf16.gmra.mxu0 %v2385
        %v4734 = vpop.f32.mrf.mxu0
        %v4735 = vadd.f32 %v4638, %v4734
        %v4736 = vpop.f32.mrf.mxu0
        %v4737 = vpop.f32.mrf.mxu0
        %v4738 = vadd.f32 %v4641, %v4737
        %v4739 = vpop.f32.mrf.mxu0
        %4740 = vmatprep.mubr.bf16.mxu0 %v2422
        %4741 = vmatmul.mubr.bf16.gmra.mxu0 %v2421
        %v4742 = vpop.f32.mrf.mxu0
        %v4743 = vadd.f32 %v4646, %v4742
        %v4744 = vpop.f32.mrf.mxu0
        %v4745 = vpop.f32.mrf.mxu0
        %v4746 = vadd.f32 %v4649, %v4745
        %v4747 = vpop.f32.mrf.mxu0
        %4748 = vmatprep.mubr.bf16.mxu0 %v2458
        %4749 = vmatmul.mubr.bf16.gmra.mxu0 %v2457
        %v4750 = vpop.f32.mrf.mxu0
        %v4751 = vadd.f32 %v4654, %v4750
        %v4752 = vpop.f32.mrf.mxu0
        %v4753 = vpop.f32.mrf.mxu0
        %v4754 = vadd.f32 %v4657, %v4753
        %v4755 = vpop.f32.mrf.mxu0
        %4756 = vmatprep.mubr.bf16.mxu0 %v2494
        %4757 = vmatmul.mubr.bf16.gmra.mxu0 %v2493
        %v4758 = vpop.f32.mrf.mxu0
        %v4759 = vadd.f32 %v4662, %v4758
        %v4760 = vpop.f32.mrf.mxu0
        %v4761 = vpop.f32.mrf.mxu0
        %v4762 = vadd.f32 %v4665, %v4761
        %v4763 = vpop.f32.mrf.mxu0
        %4764 = vmatprep.mubr.bf16.mxu0 %v2530
        %4765 = vmatmul.mubr.bf16.gmra.mxu0 %v2529
        %v4766 = vpop.f32.mrf.mxu0
        %v4767 = vadd.f32 %v4670, %v4766
        %v4768 = vpop.f32.mrf.mxu0
        %v4769 = vpop.f32.mrf.mxu0
        %v4770 = vadd.f32 %v4673, %v4769
        %v4771 = vpop.f32.mrf.mxu0
        %4772 = vdwg.mxu0
        %4773 = vmatprep.subr.bf16.mxu0 0
        %4774 = vmatpush1.bf16.msra.mxu0 %v4042
        %4775 = vmatprep.subr.bf16.mxu0 0
        %4776 = vmatpush1.bf16.msra.mxu0 %v4041
        %4777 = vmatprep.subr.bf16.mxu0 0
        %4778 = vmatpush1.bf16.msra.mxu0 %v4040
        %4779 = vmatprep.subr.bf16.mxu0 0
        %4780 = vmatpush1.bf16.msra.mxu0 %v4039
        %4781 = vmatprep.subr.bf16.mxu0 0
        %4782 = vmatpush1.bf16.msra.mxu0 %v4038
        %4783 = vmatprep.subr.bf16.mxu0 0
        %4784 = vmatpush1.bf16.msra.mxu0 %v4037
        %4785 = vmatprep.subr.bf16.mxu0 0
        %4786 = vmatpush1.bf16.msra.mxu0 %v4036
        %4787 = vmatprep.subr.bf16.mxu0 0
        %4788 = vmatpush1.bf16.msra.mxu0 %v4035
        %4789 = vmatprep.subr.bf16.mxu0 0
        %4790 = vmatpush2.bf16.msra.mxu0 %v4050
        %4791 = vmatprep.subr.bf16.mxu0 0
        %4792 = vmatpush2.bf16.msra.mxu0 %v4049
        %4793 = vmatprep.subr.bf16.mxu0 0
        %4794 = vmatpush2.bf16.msra.mxu0 %v4048
        %4795 = vmatprep.subr.bf16.mxu0 0
        %4796 = vmatpush2.bf16.msra.mxu0 %v4047
        %4797 = vmatprep.subr.bf16.mxu0 0
        %4798 = vmatpush2.bf16.msra.mxu0 %v4046
        %4799 = vmatprep.subr.bf16.mxu0 0
        %4800 = vmatpush2.bf16.msra.mxu0 %v4045
        %4801 = vmatprep.subr.bf16.mxu0 0
        %4802 = vmatpush2.bf16.msra.mxu0 %v4044
        %4803 = vmatprep.subr.bf16.mxu0 0
        %4804 = vmatpush2.bf16.msra.mxu0 %v4043
        %4805 = vmatprep.mubr.bf16.mxu0 %v2280
        %4806 = vmatmul.mubr.bf16.gmra.mxu0 %v2279
        %v4807 = vpop.f32.mrf.mxu0
        %v4808 = vadd.f32 %v4711, %v4807
        %v4809 = vpop.f32.mrf.mxu0
        %v4810 = vpop.f32.mrf.mxu0
        %v4811 = vadd.f32 %v4714, %v4810
        %v4812 = vpop.f32.mrf.mxu0
        %4813 = vmatprep.mubr.bf16.mxu0 %v2316
        %4814 = vmatmul.mubr.bf16.gmra.mxu0 %v2315
        %v4815 = vpop.f32.mrf.mxu0
        %v4816 = vadd.f32 %v4719, %v4815
        %v4817 = vpop.f32.mrf.mxu0
        %v4818 = vpop.f32.mrf.mxu0
        %v4819 = vadd.f32 %v4722, %v4818
        %v4820 = vpop.f32.mrf.mxu0
        %4821 = vmatprep.mubr.bf16.mxu0 %v2352
        %4822 = vmatmul.mubr.bf16.gmra.mxu0 %v2351
        %v4823 = vpop.f32.mrf.mxu0
        %v4824 = vadd.f32 %v4727, %v4823
        %v4825 = vpop.f32.mrf.mxu0
        %v4826 = vpop.f32.mrf.mxu0
        %v4827 = vadd.f32 %v4730, %v4826
        %v4828 = vpop.f32.mrf.mxu0
        %4829 = vmatprep.mubr.bf16.mxu0 %v2388
        %4830 = vmatmul.mubr.bf16.gmra.mxu0 %v2387
        %v4831 = vpop.f32.mrf.mxu0
        %v4832 = vadd.f32 %v4735, %v4831
        %v4833 = vpop.f32.mrf.mxu0
        %v4834 = vpop.f32.mrf.mxu0
        %v4835 = vadd.f32 %v4738, %v4834
        %v4836 = vpop.f32.mrf.mxu0
        %4837 = vmatprep.mubr.bf16.mxu0 %v2424
        %4838 = vmatmul.mubr.bf16.gmra.mxu0 %v2423
        %v4839 = vpop.f32.mrf.mxu0
        %v4840 = vadd.f32 %v4743, %v4839
        %v4841 = vpop.f32.mrf.mxu0
        %v4842 = vpop.f32.mrf.mxu0
        %v4843 = vadd.f32 %v4746, %v4842
        %v4844 = vpop.f32.mrf.mxu0
        %4845 = vmatprep.mubr.bf16.mxu0 %v2460
        %4846 = vmatmul.mubr.bf16.gmra.mxu0 %v2459
        %v4847 = vpop.f32.mrf.mxu0
        %v4848 = vadd.f32 %v4751, %v4847
        %v4849 = vpop.f32.mrf.mxu0
        %v4850 = vpop.f32.mrf.mxu0
        %v4851 = vadd.f32 %v4754, %v4850
        %v4852 = vpop.f32.mrf.mxu0
        %4853 = vmatprep.mubr.bf16.mxu0 %v2496
        %4854 = vmatmul.mubr.bf16.gmra.mxu0 %v2495
        %v4855 = vpop.f32.mrf.mxu0
        %v4856 = vadd.f32 %v4759, %v4855
        %v4857 = vpop.f32.mrf.mxu0
        %v4858 = vpop.f32.mrf.mxu0
        %v4859 = vadd.f32 %v4762, %v4858
        %v4860 = vpop.f32.mrf.mxu0
        %4861 = vmatprep.mubr.bf16.mxu0 %v2532
        %4862 = vmatmul.mubr.bf16.gmra.mxu0 %v2531
        %v4863 = vpop.f32.mrf.mxu0
        %v4864 = vadd.f32 %v4767, %v4863
        %v4865 = vpop.f32.mrf.mxu0
        %v4866 = vpop.f32.mrf.mxu0
        %v4867 = vadd.f32 %v4770, %v4866
        %v4868 = vpop.f32.mrf.mxu0
        %4869 = vdwg.mxu0
        %4870 = vmatprep.subr.bf16.mxu0 0
        %4871 = vmatpush1.bf16.msra.mxu0 %v4058
        %4872 = vmatprep.subr.bf16.mxu0 0
        %4873 = vmatpush1.bf16.msra.mxu0 %v4057
        %4874 = vmatprep.subr.bf16.mxu0 0
        %4875 = vmatpush1.bf16.msra.mxu0 %v4056
        %4876 = vmatprep.subr.bf16.mxu0 0
        %4877 = vmatpush1.bf16.msra.mxu0 %v4055
        %4878 = vmatprep.subr.bf16.mxu0 0
        %4879 = vmatpush1.bf16.msra.mxu0 %v4054
        %4880 = vmatprep.subr.bf16.mxu0 0
        %4881 = vmatpush1.bf16.msra.mxu0 %v4053
        %4882 = vmatprep.subr.bf16.mxu0 0
        %4883 = vmatpush1.bf16.msra.mxu0 %v4052
        %4884 = vmatprep.subr.bf16.mxu0 0
        %4885 = vmatpush1.bf16.msra.mxu0 %v4051
        %4886 = vmatprep.subr.bf16.mxu0 0
        %4887 = vmatpush2.bf16.msra.mxu0 %v4066
        %4888 = vmatprep.subr.bf16.mxu0 0
        %4889 = vmatpush2.bf16.msra.mxu0 %v4065
        %4890 = vmatprep.subr.bf16.mxu0 0
        %4891 = vmatpush2.bf16.msra.mxu0 %v4064
        %4892 = vmatprep.subr.bf16.mxu0 0
        %4893 = vmatpush2.bf16.msra.mxu0 %v4063
        %4894 = vmatprep.subr.bf16.mxu0 0
        %4895 = vmatpush2.bf16.msra.mxu0 %v4062
        %4896 = vmatprep.subr.bf16.mxu0 0
        %4897 = vmatpush2.bf16.msra.mxu0 %v4061
        %4898 = vmatprep.subr.bf16.mxu0 0
        %4899 = vmatpush2.bf16.msra.mxu0 %v4060
        %4900 = vmatprep.subr.bf16.mxu0 0
        %4901 = vmatpush2.bf16.msra.mxu0 %v4059
        %4902 = vmatprep.mubr.bf16.mxu0 %v2282
        %4903 = vmatmul.mubr.bf16.gmra.mxu0 %v2281
        %v4904 = vpop.f32.mrf.mxu0
        %v4905 = vadd.f32 %v4808, %v4904
        %v4906 = vpop.f32.mrf.mxu0
        %v4907 = vpop.f32.mrf.mxu0
        %v4908 = vadd.f32 %v4811, %v4907
        %v4909 = vpop.f32.mrf.mxu0
        %4910 = vmatprep.mubr.bf16.mxu0 %v2318
        %4911 = vmatmul.mubr.bf16.gmra.mxu0 %v2317
        %v4912 = vpop.f32.mrf.mxu0
        %v4913 = vadd.f32 %v4816, %v4912
        %v4914 = vpop.f32.mrf.mxu0
        %v4915 = vpop.f32.mrf.mxu0
        %v4916 = vadd.f32 %v4819, %v4915
        %v4917 = vpop.f32.mrf.mxu0
        %4918 = vmatprep.mubr.bf16.mxu0 %v2354
        %4919 = vmatmul.mubr.bf16.gmra.mxu0 %v2353
        %v4920 = vpop.f32.mrf.mxu0
        %v4921 = vadd.f32 %v4824, %v4920
        %v4922 = vpop.f32.mrf.mxu0
        %v4923 = vpop.f32.mrf.mxu0
        %v4924 = vadd.f32 %v4827, %v4923
        %v4925 = vpop.f32.mrf.mxu0
        %4926 = vmatprep.mubr.bf16.mxu0 %v2390
        %4927 = vmatmul.mubr.bf16.gmra.mxu0 %v2389
        %v4928 = vpop.f32.mrf.mxu0
        %v4929 = vadd.f32 %v4832, %v4928
        %v4930 = vpop.f32.mrf.mxu0
        %v4931 = vpop.f32.mrf.mxu0
        %v4932 = vadd.f32 %v4835, %v4931
        %v4933 = vpop.f32.mrf.mxu0
        %4934 = vmatprep.mubr.bf16.mxu0 %v2426
        %4935 = vmatmul.mubr.bf16.gmra.mxu0 %v2425
        %v4936 = vpop.f32.mrf.mxu0
        %v4937 = vadd.f32 %v4840, %v4936
        %v4938 = vpop.f32.mrf.mxu0
        %v4939 = vpop.f32.mrf.mxu0
        %v4940 = vadd.f32 %v4843, %v4939
        %v4941 = vpop.f32.mrf.mxu0
        %4942 = vmatprep.mubr.bf16.mxu0 %v2462
        %4943 = vmatmul.mubr.bf16.gmra.mxu0 %v2461
        %v4944 = vpop.f32.mrf.mxu0
        %v4945 = vadd.f32 %v4848, %v4944
        %v4946 = vpop.f32.mrf.mxu0
        %v4947 = vpop.f32.mrf.mxu0
        %v4948 = vadd.f32 %v4851, %v4947
        %v4949 = vpop.f32.mrf.mxu0
        %4950 = vmatprep.mubr.bf16.mxu0 %v2498
        %4951 = vmatmul.mubr.bf16.gmra.mxu0 %v2497
        %v4952 = vpop.f32.mrf.mxu0
        %v4953 = vadd.f32 %v4856, %v4952
        %v4954 = vpop.f32.mrf.mxu0
        %v4955 = vpop.f32.mrf.mxu0
        %v4956 = vadd.f32 %v4859, %v4955
        %v4957 = vpop.f32.mrf.mxu0
        %4958 = vmatprep.mubr.bf16.mxu0 %v2534
        %4959 = vmatmul.mubr.bf16.gmra.mxu0 %v2533
        %v4960 = vpop.f32.mrf.mxu0
        %v4961 = vadd.f32 %v4864, %v4960
        %v4962 = vpop.f32.mrf.mxu0
        %v4963 = vpop.f32.mrf.mxu0
        %v4964 = vadd.f32 %v4867, %v4963
        %v4965 = vpop.f32.mrf.mxu0
        %4966 = vdwg.mxu0
        %4967 = vmatprep.subr.bf16.mxu0 0
        %4968 = vmatpush1.bf16.msra.mxu0 %v4074
        %4969 = vmatprep.subr.bf16.mxu0 0
        %4970 = vmatpush1.bf16.msra.mxu0 %v4073
        %4971 = vmatprep.subr.bf16.mxu0 0
        %4972 = vmatpush1.bf16.msra.mxu0 %v4072
        %4973 = vmatprep.subr.bf16.mxu0 0
        %4974 = vmatpush1.bf16.msra.mxu0 %v4071
        %4975 = vmatprep.subr.bf16.mxu0 0
        %4976 = vmatpush1.bf16.msra.mxu0 %v4070
        %4977 = vmatprep.subr.bf16.mxu0 0
        %4978 = vmatpush1.bf16.msra.mxu0 %v4069
        %4979 = vmatprep.subr.bf16.mxu0 0
        %4980 = vmatpush1.bf16.msra.mxu0 %v4068
        %4981 = vmatprep.subr.bf16.mxu0 0
        %4982 = vmatpush1.bf16.msra.mxu0 %v4067
        %4983 = vmatprep.subr.bf16.mxu0 0
        %4984 = vmatpush2.bf16.msra.mxu0 %v4082
        %4985 = vmatprep.subr.bf16.mxu0 0
        %4986 = vmatpush2.bf16.msra.mxu0 %v4081
        %4987 = vmatprep.subr.bf16.mxu0 0
        %4988 = vmatpush2.bf16.msra.mxu0 %v4080
        %4989 = vmatprep.subr.bf16.mxu0 0
        %4990 = vmatpush2.bf16.msra.mxu0 %v4079
        %4991 = vmatprep.subr.bf16.mxu0 0
        %4992 = vmatpush2.bf16.msra.mxu0 %v4078
        %4993 = vmatprep.subr.bf16.mxu0 0
        %4994 = vmatpush2.bf16.msra.mxu0 %v4077
        %4995 = vmatprep.subr.bf16.mxu0 0
        %4996 = vmatpush2.bf16.msra.mxu0 %v4076
        %4997 = vmatprep.subr.bf16.mxu0 0
        %4998 = vmatpush2.bf16.msra.mxu0 %v4075
        %4999 = vmatprep.mubr.bf16.mxu0 %v2284
        %5000 = vmatmul.mubr.bf16.gmra.mxu0 %v2283
        %v5001 = vpop.f32.mrf.mxu0
        %v5002 = vadd.f32 %v4905, %v5001
        %v5003 = vpop.f32.mrf.mxu0
        %v5004 = vpop.f32.mrf.mxu0
        %v5005 = vadd.f32 %v4908, %v5004
        %v5006 = vpop.f32.mrf.mxu0
        %5007 = vmatprep.mubr.bf16.mxu0 %v2320
        %5008 = vmatmul.mubr.bf16.gmra.mxu0 %v2319
        %v5009 = vpop.f32.mrf.mxu0
        %v5010 = vadd.f32 %v4913, %v5009
        %v5011 = vpop.f32.mrf.mxu0
        %v5012 = vpop.f32.mrf.mxu0
        %v5013 = vadd.f32 %v4916, %v5012
        %v5014 = vpop.f32.mrf.mxu0
        %5015 = vmatprep.mubr.bf16.mxu0 %v2356
        %5016 = vmatmul.mubr.bf16.gmra.mxu0 %v2355
        %v5017 = vpop.f32.mrf.mxu0
        %v5018 = vadd.f32 %v4921, %v5017
        %v5019 = vpop.f32.mrf.mxu0
        %v5020 = vpop.f32.mrf.mxu0
        %v5021 = vadd.f32 %v4924, %v5020
        %v5022 = vpop.f32.mrf.mxu0
        %5023 = vmatprep.mubr.bf16.mxu0 %v2392
        %5024 = vmatmul.mubr.bf16.gmra.mxu0 %v2391
        %v5025 = vpop.f32.mrf.mxu0
        %v5026 = vadd.f32 %v4929, %v5025
        %v5027 = vpop.f32.mrf.mxu0
        %v5028 = vpop.f32.mrf.mxu0
        %v5029 = vadd.f32 %v4932, %v5028
        %v5030 = vpop.f32.mrf.mxu0
        %5031 = vmatprep.mubr.bf16.mxu0 %v2428
        %5032 = vmatmul.mubr.bf16.gmra.mxu0 %v2427
        %v5033 = vpop.f32.mrf.mxu0
        %v5034 = vadd.f32 %v4937, %v5033
        %v5035 = vpop.f32.mrf.mxu0
        %v5036 = vpop.f32.mrf.mxu0
        %v5037 = vadd.f32 %v4940, %v5036
        %v5038 = vpop.f32.mrf.mxu0
        %5039 = vmatprep.mubr.bf16.mxu0 %v2464
        %5040 = vmatmul.mubr.bf16.gmra.mxu0 %v2463
        %v5041 = vpop.f32.mrf.mxu0
        %v5042 = vadd.f32 %v4945, %v5041
        %v5043 = vpop.f32.mrf.mxu0
        %v5044 = vpop.f32.mrf.mxu0
        %v5045 = vadd.f32 %v4948, %v5044
        %v5046 = vpop.f32.mrf.mxu0
        %5047 = vmatprep.mubr.bf16.mxu0 %v2500
        %5048 = vmatmul.mubr.bf16.gmra.mxu0 %v2499
        %v5049 = vpop.f32.mrf.mxu0
        %v5050 = vadd.f32 %v4953, %v5049
        %v5051 = vpop.f32.mrf.mxu0
        %v5052 = vpop.f32.mrf.mxu0
        %v5053 = vadd.f32 %v4956, %v5052
        %v5054 = vpop.f32.mrf.mxu0
        %5055 = vmatprep.mubr.bf16.mxu0 %v2536
        %5056 = vmatmul.mubr.bf16.gmra.mxu0 %v2535
        %v5057 = vpop.f32.mrf.mxu0
        %v5058 = vadd.f32 %v4961, %v5057
        %v5059 = vpop.f32.mrf.mxu0
        %v5060 = vpop.f32.mrf.mxu0
        %v5061 = vadd.f32 %v4964, %v5060
        %v5062 = vpop.f32.mrf.mxu0
        %5063 = vdwg.mxu0
        %5064 = vmatprep.subr.bf16.mxu0 0
        %5065 = vmatpush1.bf16.msra.mxu0 %v4090
        %5066 = vmatprep.subr.bf16.mxu0 0
        %5067 = vmatpush1.bf16.msra.mxu0 %v4089
        %5068 = vmatprep.subr.bf16.mxu0 0
        %5069 = vmatpush1.bf16.msra.mxu0 %v4088
        %5070 = vmatprep.subr.bf16.mxu0 0
        %5071 = vmatpush1.bf16.msra.mxu0 %v4087
        %5072 = vmatprep.subr.bf16.mxu0 0
        %5073 = vmatpush1.bf16.msra.mxu0 %v4086
        %5074 = vmatprep.subr.bf16.mxu0 0
        %5075 = vmatpush1.bf16.msra.mxu0 %v4085
        %5076 = vmatprep.subr.bf16.mxu0 0
        %5077 = vmatpush1.bf16.msra.mxu0 %v4084
        %5078 = vmatprep.subr.bf16.mxu0 0
        %5079 = vmatpush1.bf16.msra.mxu0 %v4083
        %5080 = vmatprep.subr.bf16.mxu0 0
        %5081 = vmatpush2.bf16.msra.mxu0 %v4098
        %5082 = vmatprep.subr.bf16.mxu0 0
        %5083 = vmatpush2.bf16.msra.mxu0 %v4097
        %5084 = vmatprep.subr.bf16.mxu0 0
        %5085 = vmatpush2.bf16.msra.mxu0 %v4096
        %5086 = vmatprep.subr.bf16.mxu0 0
        %5087 = vmatpush2.bf16.msra.mxu0 %v4095
        %5088 = vmatprep.subr.bf16.mxu0 0
        %5089 = vmatpush2.bf16.msra.mxu0 %v4094
        %5090 = vmatprep.subr.bf16.mxu0 0
        %5091 = vmatpush2.bf16.msra.mxu0 %v4093
        %5092 = vmatprep.subr.bf16.mxu0 0
        %5093 = vmatpush2.bf16.msra.mxu0 %v4092
        %5094 = vmatprep.subr.bf16.mxu0 0
        %5095 = vmatpush2.bf16.msra.mxu0 %v4091
        %5096 = vmatprep.mubr.bf16.mxu0 %v2286
        %5097 = vmatmul.mubr.bf16.gmra.mxu0 %v2285
        %v5098 = vpop.f32.mrf.mxu0
        %v5099 = vadd.f32 %v5002, %v5098
        %v5100 = vpop.f32.mrf.mxu0
        %v5101 = vpop.f32.mrf.mxu0
        %v5102 = vadd.f32 %v5005, %v5101
        %v5103 = vpop.f32.mrf.mxu0
        %5104 = vmatprep.mubr.bf16.mxu0 %v2322
        %5105 = vmatmul.mubr.bf16.gmra.mxu0 %v2321
        %v5106 = vpop.f32.mrf.mxu0
        %v5107 = vadd.f32 %v5010, %v5106
        %v5108 = vpop.f32.mrf.mxu0
        %v5109 = vpop.f32.mrf.mxu0
        %v5110 = vadd.f32 %v5013, %v5109
        %v5111 = vpop.f32.mrf.mxu0
        %5112 = vmatprep.mubr.bf16.mxu0 %v2358
        %5113 = vmatmul.mubr.bf16.gmra.mxu0 %v2357
        %v5114 = vpop.f32.mrf.mxu0
        %v5115 = vadd.f32 %v5018, %v5114
        %v5116 = vpop.f32.mrf.mxu0
        %v5117 = vpop.f32.mrf.mxu0
        %v5118 = vadd.f32 %v5021, %v5117
        %v5119 = vpop.f32.mrf.mxu0
        %5120 = vmatprep.mubr.bf16.mxu0 %v2394
        %5121 = vmatmul.mubr.bf16.gmra.mxu0 %v2393
        %v5122 = vpop.f32.mrf.mxu0
        %v5123 = vadd.f32 %v5026, %v5122
        %v5124 = vpop.f32.mrf.mxu0
        %v5125 = vpop.f32.mrf.mxu0
        %v5126 = vadd.f32 %v5029, %v5125
        %v5127 = vpop.f32.mrf.mxu0
        %5128 = vmatprep.mubr.bf16.mxu0 %v2430
        %5129 = vmatmul.mubr.bf16.gmra.mxu0 %v2429
        %v5130 = vpop.f32.mrf.mxu0
        %v5131 = vadd.f32 %v5034, %v5130
        %v5132 = vpop.f32.mrf.mxu0
        %v5133 = vpop.f32.mrf.mxu0
        %v5134 = vadd.f32 %v5037, %v5133
        %v5135 = vpop.f32.mrf.mxu0
        %5136 = vmatprep.mubr.bf16.mxu0 %v2466
        %5137 = vmatmul.mubr.bf16.gmra.mxu0 %v2465
        %v5138 = vpop.f32.mrf.mxu0
        %v5139 = vadd.f32 %v5042, %v5138
        %v5140 = vpop.f32.mrf.mxu0
        %v5141 = vpop.f32.mrf.mxu0
        %v5142 = vadd.f32 %v5045, %v5141
        %v5143 = vpop.f32.mrf.mxu0
        %5144 = vmatprep.mubr.bf16.mxu0 %v2502
        %5145 = vmatmul.mubr.bf16.gmra.mxu0 %v2501
        %v5146 = vpop.f32.mrf.mxu0
        %v5147 = vadd.f32 %v5050, %v5146
        %v5148 = vpop.f32.mrf.mxu0
        %v5149 = vpop.f32.mrf.mxu0
        %v5150 = vadd.f32 %v5053, %v5149
        %v5151 = vpop.f32.mrf.mxu0
        %5152 = vmatprep.mubr.bf16.mxu0 %v2538
        %5153 = vmatmul.mubr.bf16.gmra.mxu0 %v2537
        %v5154 = vpop.f32.mrf.mxu0
        %v5155 = vadd.f32 %v5058, %v5154
        %v5156 = vpop.f32.mrf.mxu0
        %v5157 = vpop.f32.mrf.mxu0
        %v5158 = vadd.f32 %v5061, %v5157
        %v5159 = vpop.f32.mrf.mxu0
        %5160 = vdwg.mxu0
        %5161 = vmatprep.subr.bf16.mxu0 0
        %5162 = vmatpush1.bf16.msra.mxu0 %v4106
        %5163 = vmatprep.subr.bf16.mxu0 0
        %5164 = vmatpush1.bf16.msra.mxu0 %v4105
        %5165 = vmatprep.subr.bf16.mxu0 0
        %5166 = vmatpush1.bf16.msra.mxu0 %v4104
        %5167 = vmatprep.subr.bf16.mxu0 0
        %5168 = vmatpush1.bf16.msra.mxu0 %v4103
        %5169 = vmatprep.subr.bf16.mxu0 0
        %5170 = vmatpush1.bf16.msra.mxu0 %v4102
        %5171 = vmatprep.subr.bf16.mxu0 0
        %5172 = vmatpush1.bf16.msra.mxu0 %v4101
        %5173 = vmatprep.subr.bf16.mxu0 0
        %5174 = vmatpush1.bf16.msra.mxu0 %v4100
        %5175 = vmatprep.subr.bf16.mxu0 0
        %5176 = vmatpush1.bf16.msra.mxu0 %v4099
        %5177 = vmatprep.subr.bf16.mxu0 0
        %5178 = vmatpush2.bf16.msra.mxu0 %v4114
        %5179 = vmatprep.subr.bf16.mxu0 0
        %5180 = vmatpush2.bf16.msra.mxu0 %v4113
        %5181 = vmatprep.subr.bf16.mxu0 0
        %5182 = vmatpush2.bf16.msra.mxu0 %v4112
        %5183 = vmatprep.subr.bf16.mxu0 0
        %5184 = vmatpush2.bf16.msra.mxu0 %v4111
        %5185 = vmatprep.subr.bf16.mxu0 0
        %5186 = vmatpush2.bf16.msra.mxu0 %v4110
        %5187 = vmatprep.subr.bf16.mxu0 0
        %5188 = vmatpush2.bf16.msra.mxu0 %v4109
        %5189 = vmatprep.subr.bf16.mxu0 0
        %5190 = vmatpush2.bf16.msra.mxu0 %v4108
        %5191 = vmatprep.subr.bf16.mxu0 0
        %5192 = vmatpush2.bf16.msra.mxu0 %v4107
        %5193 = vmatprep.mubr.bf16.mxu0 %v2288
        %5194 = vmatmul.mubr.bf16.gmra.mxu0 %v2287
        %v5195 = vpop.f32.mrf.mxu0
        %v5196 = vadd.f32 %v5099, %v5195
        %v5197 = vpop.f32.mrf.mxu0
        %v5198 = vpop.f32.mrf.mxu0
        %v5199 = vadd.f32 %v5102, %v5198
        %v5200 = vpop.f32.mrf.mxu0
        %5201 = vmatprep.mubr.bf16.mxu0 %v2324
        %5202 = vmatmul.mubr.bf16.gmra.mxu0 %v2323
        %v5203 = vpop.f32.mrf.mxu0
        %v5204 = vadd.f32 %v5107, %v5203
        %v5205 = vpop.f32.mrf.mxu0
        %v5206 = vpop.f32.mrf.mxu0
        %v5207 = vadd.f32 %v5110, %v5206
        %v5208 = vpop.f32.mrf.mxu0
        %5209 = vmatprep.mubr.bf16.mxu0 %v2360
        %5210 = vmatmul.mubr.bf16.gmra.mxu0 %v2359
        %v5211 = vpop.f32.mrf.mxu0
        %v5212 = vadd.f32 %v5115, %v5211
        %v5213 = vpop.f32.mrf.mxu0
        %v5214 = vpop.f32.mrf.mxu0
        %v5215 = vadd.f32 %v5118, %v5214
        %v5216 = vpop.f32.mrf.mxu0
        %5217 = vmatprep.mubr.bf16.mxu0 %v2396
        %5218 = vmatmul.mubr.bf16.gmra.mxu0 %v2395
        %v5219 = vpop.f32.mrf.mxu0
        %v5220 = vadd.f32 %v5123, %v5219
        %v5221 = vpop.f32.mrf.mxu0
        %v5222 = vpop.f32.mrf.mxu0
        %v5223 = vadd.f32 %v5126, %v5222
        %v5224 = vpop.f32.mrf.mxu0
        %5225 = vmatprep.mubr.bf16.mxu0 %v2432
        %5226 = vmatmul.mubr.bf16.gmra.mxu0 %v2431
        %v5227 = vpop.f32.mrf.mxu0
        %v5228 = vadd.f32 %v5131, %v5227
        %v5229 = vpop.f32.mrf.mxu0
        %v5230 = vpop.f32.mrf.mxu0
        %v5231 = vadd.f32 %v5134, %v5230
        %v5232 = vpop.f32.mrf.mxu0
        %5233 = vmatprep.mubr.bf16.mxu0 %v2468
        %5234 = vmatmul.mubr.bf16.gmra.mxu0 %v2467
        %v5235 = vpop.f32.mrf.mxu0
        %v5236 = vadd.f32 %v5139, %v5235
        %v5237 = vpop.f32.mrf.mxu0
        %v5238 = vpop.f32.mrf.mxu0
        %v5239 = vadd.f32 %v5142, %v5238
        %v5240 = vpop.f32.mrf.mxu0
        %5241 = vmatprep.mubr.bf16.mxu0 %v2504
        %5242 = vmatmul.mubr.bf16.gmra.mxu0 %v2503
        %v5243 = vpop.f32.mrf.mxu0
        %v5244 = vadd.f32 %v5147, %v5243
        %v5245 = vpop.f32.mrf.mxu0
        %v5246 = vpop.f32.mrf.mxu0
        %v5247 = vadd.f32 %v5150, %v5246
        %v5248 = vpop.f32.mrf.mxu0
        %5249 = vmatprep.mubr.bf16.mxu0 %v2540
        %5250 = vmatmul.mubr.bf16.gmra.mxu0 %v2539
        %v5251 = vpop.f32.mrf.mxu0
        %v5252 = vadd.f32 %v5155, %v5251
        %v5253 = vpop.f32.mrf.mxu0
        %v5254 = vpop.f32.mrf.mxu0
        %v5255 = vadd.f32 %v5158, %v5254
        %v5256 = vpop.f32.mrf.mxu0
        %5257 = vdwg.mxu0
        %5258 = vmatprep.subr.bf16.mxu0 0
        %5259 = vmatpush1.bf16.msra.mxu0 %v4122
        %5260 = vmatprep.subr.bf16.mxu0 0
        %5261 = vmatpush1.bf16.msra.mxu0 %v4121
        %5262 = vmatprep.subr.bf16.mxu0 0
        %5263 = vmatpush1.bf16.msra.mxu0 %v4120
        %5264 = vmatprep.subr.bf16.mxu0 0
        %5265 = vmatpush1.bf16.msra.mxu0 %v4119
        %5266 = vmatprep.subr.bf16.mxu0 0
        %5267 = vmatpush1.bf16.msra.mxu0 %v4118
        %5268 = vmatprep.subr.bf16.mxu0 0
        %5269 = vmatpush1.bf16.msra.mxu0 %v4117
        %5270 = vmatprep.subr.bf16.mxu0 0
        %5271 = vmatpush1.bf16.msra.mxu0 %v4116
        %5272 = vmatprep.subr.bf16.mxu0 0
        %5273 = vmatpush1.bf16.msra.mxu0 %v4115
        %5274 = vmatprep.subr.bf16.mxu0 0
        %5275 = vmatpush2.bf16.msra.mxu0 %v4130
        %5276 = vmatprep.subr.bf16.mxu0 0
        %5277 = vmatpush2.bf16.msra.mxu0 %v4129
        %5278 = vmatprep.subr.bf16.mxu0 0
        %5279 = vmatpush2.bf16.msra.mxu0 %v4128
        %5280 = vmatprep.subr.bf16.mxu0 0
        %5281 = vmatpush2.bf16.msra.mxu0 %v4127
        %5282 = vmatprep.subr.bf16.mxu0 0
        %5283 = vmatpush2.bf16.msra.mxu0 %v4126
        %5284 = vmatprep.subr.bf16.mxu0 0
        %5285 = vmatpush2.bf16.msra.mxu0 %v4125
        %5286 = vmatprep.subr.bf16.mxu0 0
        %5287 = vmatpush2.bf16.msra.mxu0 %v4124
        %5288 = vmatprep.subr.bf16.mxu0 0
        %5289 = vmatpush2.bf16.msra.mxu0 %v4123
        %5290 = vmatprep.mubr.bf16.mxu0 %v2290
        %5291 = vmatmul.mubr.bf16.gmra.mxu0 %v2289
        %v5292 = vpop.f32.mrf.mxu0
        %v5293 = vadd.f32 %v5196, %v5292
        %v5294 = vpop.f32.mrf.mxu0
        %v5295 = vpop.f32.mrf.mxu0
        %v5296 = vadd.f32 %v5199, %v5295
        %v5297 = vpop.f32.mrf.mxu0
        %5298 = vmatprep.mubr.bf16.mxu0 %v2326
        %5299 = vmatmul.mubr.bf16.gmra.mxu0 %v2325
        %v5300 = vpop.f32.mrf.mxu0
        %v5301 = vadd.f32 %v5204, %v5300
        %v5302 = vpop.f32.mrf.mxu0
        %v5303 = vpop.f32.mrf.mxu0
        %v5304 = vadd.f32 %v5207, %v5303
        %v5305 = vpop.f32.mrf.mxu0
        %5306 = vmatprep.mubr.bf16.mxu0 %v2362
        %5307 = vmatmul.mubr.bf16.gmra.mxu0 %v2361
        %v5308 = vpop.f32.mrf.mxu0
        %v5309 = vadd.f32 %v5212, %v5308
        %v5310 = vpop.f32.mrf.mxu0
        %v5311 = vpop.f32.mrf.mxu0
        %v5312 = vadd.f32 %v5215, %v5311
        %v5313 = vpop.f32.mrf.mxu0
        %5314 = vmatprep.mubr.bf16.mxu0 %v2398
        %5315 = vmatmul.mubr.bf16.gmra.mxu0 %v2397
        %v5316 = vpop.f32.mrf.mxu0
        %v5317 = vadd.f32 %v5220, %v5316
        %v5318 = vpop.f32.mrf.mxu0
        %v5319 = vpop.f32.mrf.mxu0
        %v5320 = vadd.f32 %v5223, %v5319
        %v5321 = vpop.f32.mrf.mxu0
        %5322 = vmatprep.mubr.bf16.mxu0 %v2434
        %5323 = vmatmul.mubr.bf16.gmra.mxu0 %v2433
        %v5324 = vpop.f32.mrf.mxu0
        %v5325 = vadd.f32 %v5228, %v5324
        %v5326 = vpop.f32.mrf.mxu0
        %v5327 = vpop.f32.mrf.mxu0
        %v5328 = vadd.f32 %v5231, %v5327
        %v5329 = vpop.f32.mrf.mxu0
        %5330 = vmatprep.mubr.bf16.mxu0 %v2470
        %5331 = vmatmul.mubr.bf16.gmra.mxu0 %v2469
        %v5332 = vpop.f32.mrf.mxu0
        %v5333 = vadd.f32 %v5236, %v5332
        %v5334 = vpop.f32.mrf.mxu0
        %v5335 = vpop.f32.mrf.mxu0
        %v5336 = vadd.f32 %v5239, %v5335
        %v5337 = vpop.f32.mrf.mxu0
        %5338 = vmatprep.mubr.bf16.mxu0 %v2506
        %5339 = vmatmul.mubr.bf16.gmra.mxu0 %v2505
        %v5340 = vpop.f32.mrf.mxu0
        %v5341 = vadd.f32 %v5244, %v5340
        %v5342 = vpop.f32.mrf.mxu0
        %v5343 = vpop.f32.mrf.mxu0
        %v5344 = vadd.f32 %v5247, %v5343
        %v5345 = vpop.f32.mrf.mxu0
        %5346 = vmatprep.mubr.bf16.mxu0 %v2542
        %5347 = vmatmul.mubr.bf16.gmra.mxu0 %v2541
        %v5348 = vpop.f32.mrf.mxu0
        %v5349 = vadd.f32 %v5252, %v5348
        %v5350 = vpop.f32.mrf.mxu0
        %v5351 = vpop.f32.mrf.mxu0
        %v5352 = vadd.f32 %v5255, %v5351
        %v5353 = vpop.f32.mrf.mxu0
        %5354 = vdwg.mxu0
        %5355 = vmatprep.subr.bf16.mxu0 0
        %5356 = vmatpush1.bf16.msra.mxu0 %v4138
        %5357 = vmatprep.subr.bf16.mxu0 0
        %5358 = vmatpush1.bf16.msra.mxu0 %v4137
        %5359 = vmatprep.subr.bf16.mxu0 0
        %5360 = vmatpush1.bf16.msra.mxu0 %v4136
        %5361 = vmatprep.subr.bf16.mxu0 0
        %5362 = vmatpush1.bf16.msra.mxu0 %v4135
        %5363 = vmatprep.subr.bf16.mxu0 0
        %5364 = vmatpush1.bf16.msra.mxu0 %v4134
        %5365 = vmatprep.subr.bf16.mxu0 0
        %5366 = vmatpush1.bf16.msra.mxu0 %v4133
        %5367 = vmatprep.subr.bf16.mxu0 0
        %5368 = vmatpush1.bf16.msra.mxu0 %v4132
        %5369 = vmatprep.subr.bf16.mxu0 0
        %5370 = vmatpush1.bf16.msra.mxu0 %v4131
        %5371 = vmatprep.subr.bf16.mxu0 0
        %5372 = vmatpush2.bf16.msra.mxu0 %v4146
        %5373 = vmatprep.subr.bf16.mxu0 0
        %5374 = vmatpush2.bf16.msra.mxu0 %v4145
        %5375 = vmatprep.subr.bf16.mxu0 0
        %5376 = vmatpush2.bf16.msra.mxu0 %v4144
        %5377 = vmatprep.subr.bf16.mxu0 0
        %5378 = vmatpush2.bf16.msra.mxu0 %v4143
        %5379 = vmatprep.subr.bf16.mxu0 0
        %5380 = vmatpush2.bf16.msra.mxu0 %v4142
        %5381 = vmatprep.subr.bf16.mxu0 0
        %5382 = vmatpush2.bf16.msra.mxu0 %v4141
        %5383 = vmatprep.subr.bf16.mxu0 0
        %5384 = vmatpush2.bf16.msra.mxu0 %v4140
        %5385 = vmatprep.subr.bf16.mxu0 0
        %5386 = vmatpush2.bf16.msra.mxu0 %v4139
        %5387 = vmatprep.mubr.bf16.mxu0 %v2292
        %5388 = vmatmul.mubr.bf16.gmra.mxu0 %v2291
        %v5389 = vpop.f32.mrf.mxu0
        %v5390 = vadd.f32 %v5293, %v5389
        %v5391 = vpop.f32.mrf.mxu0
        %v5392 = vpop.f32.mrf.mxu0
        %v5393 = vadd.f32 %v5296, %v5392
        %v5394 = vpop.f32.mrf.mxu0
        %5395 = vmatprep.mubr.bf16.mxu0 %v2328
        %5396 = vmatmul.mubr.bf16.gmra.mxu0 %v2327
        %v5397 = vpop.f32.mrf.mxu0
        %v5398 = vadd.f32 %v5301, %v5397
        %v5399 = vpop.f32.mrf.mxu0
        %v5400 = vpop.f32.mrf.mxu0
        %v5401 = vadd.f32 %v5304, %v5400
        %v5402 = vpop.f32.mrf.mxu0
        %5403 = vmatprep.mubr.bf16.mxu0 %v2364
        %5404 = vmatmul.mubr.bf16.gmra.mxu0 %v2363
        %v5405 = vpop.f32.mrf.mxu0
        %v5406 = vadd.f32 %v5309, %v5405
        %v5407 = vpop.f32.mrf.mxu0
        %v5408 = vpop.f32.mrf.mxu0
        %v5409 = vadd.f32 %v5312, %v5408
        %v5410 = vpop.f32.mrf.mxu0
        %5411 = vmatprep.mubr.bf16.mxu0 %v2400
        %5412 = vmatmul.mubr.bf16.gmra.mxu0 %v2399
        %v5413 = vpop.f32.mrf.mxu0
        %v5414 = vadd.f32 %v5317, %v5413
        %v5415 = vpop.f32.mrf.mxu0
        %v5416 = vpop.f32.mrf.mxu0
        %v5417 = vadd.f32 %v5320, %v5416
        %v5418 = vpop.f32.mrf.mxu0
        %5419 = vmatprep.mubr.bf16.mxu0 %v2436
        %5420 = vmatmul.mubr.bf16.gmra.mxu0 %v2435
        %v5421 = vpop.f32.mrf.mxu0
        %v5422 = vadd.f32 %v5325, %v5421
        %v5423 = vpop.f32.mrf.mxu0
        %v5424 = vpop.f32.mrf.mxu0
        %v5425 = vadd.f32 %v5328, %v5424
        %v5426 = vpop.f32.mrf.mxu0
        %5427 = vmatprep.mubr.bf16.mxu0 %v2472
        %5428 = vmatmul.mubr.bf16.gmra.mxu0 %v2471
        %v5429 = vpop.f32.mrf.mxu0
        %v5430 = vadd.f32 %v5333, %v5429
        %v5431 = vpop.f32.mrf.mxu0
        %v5432 = vpop.f32.mrf.mxu0
        %v5433 = vadd.f32 %v5336, %v5432
        %v5434 = vpop.f32.mrf.mxu0
        %5435 = vmatprep.mubr.bf16.mxu0 %v2508
        %5436 = vmatmul.mubr.bf16.gmra.mxu0 %v2507
        %v5437 = vpop.f32.mrf.mxu0
        %v5438 = vadd.f32 %v5341, %v5437
        %v5439 = vpop.f32.mrf.mxu0
        %v5440 = vpop.f32.mrf.mxu0
        %v5441 = vadd.f32 %v5344, %v5440
        %v5442 = vpop.f32.mrf.mxu0
        %5443 = vmatprep.mubr.bf16.mxu0 %v2544
        %5444 = vmatmul.mubr.bf16.gmra.mxu0 %v2543
        %v5445 = vpop.f32.mrf.mxu0
        %v5446 = vadd.f32 %v5349, %v5445
        %v5447 = vpop.f32.mrf.mxu0
        %v5448 = vpop.f32.mrf.mxu0
        %v5449 = vadd.f32 %v5352, %v5448
        %v5450 = vpop.f32.mrf.mxu0
        %5451 = vdwg.mxu0
        %5452 = vmatprep.subr.bf16.mxu0 0
        %5453 = vmatpush1.bf16.msra.mxu0 %v4154
        %5454 = vmatprep.subr.bf16.mxu0 0
        %5455 = vmatpush1.bf16.msra.mxu0 %v4153
        %5456 = vmatprep.subr.bf16.mxu0 0
        %5457 = vmatpush1.bf16.msra.mxu0 %v4152
        %5458 = vmatprep.subr.bf16.mxu0 0
        %5459 = vmatpush1.bf16.msra.mxu0 %v4151
        %5460 = vmatprep.subr.bf16.mxu0 0
        %5461 = vmatpush1.bf16.msra.mxu0 %v4150
        %5462 = vmatprep.subr.bf16.mxu0 0
        %5463 = vmatpush1.bf16.msra.mxu0 %v4149
        %5464 = vmatprep.subr.bf16.mxu0 0
        %5465 = vmatpush1.bf16.msra.mxu0 %v4148
        %5466 = vmatprep.subr.bf16.mxu0 0
        %5467 = vmatpush1.bf16.msra.mxu0 %v4147
        %5468 = vmatprep.subr.bf16.mxu0 0
        %5469 = vmatpush2.bf16.msra.mxu0 %v4162
        %5470 = vmatprep.subr.bf16.mxu0 0
        %5471 = vmatpush2.bf16.msra.mxu0 %v4161
        %5472 = vmatprep.subr.bf16.mxu0 0
        %5473 = vmatpush2.bf16.msra.mxu0 %v4160
        %5474 = vmatprep.subr.bf16.mxu0 0
        %5475 = vmatpush2.bf16.msra.mxu0 %v4159
        %5476 = vmatprep.subr.bf16.mxu0 0
        %5477 = vmatpush2.bf16.msra.mxu0 %v4158
        %5478 = vmatprep.subr.bf16.mxu0 0
        %5479 = vmatpush2.bf16.msra.mxu0 %v4157
        %5480 = vmatprep.subr.bf16.mxu0 0
        %5481 = vmatpush2.bf16.msra.mxu0 %v4156
        %5482 = vmatprep.subr.bf16.mxu0 0
        %5483 = vmatpush2.bf16.msra.mxu0 %v4155
        %5484 = vmatprep.mubr.bf16.mxu0 %v2294
        %5485 = vmatmul.mubr.bf16.gmra.mxu0 %v2293
        %v5486 = vpop.f32.mrf.mxu0
        %v5487 = vadd.f32 %v5390, %v5486
        %v5488 = vpop.f32.mrf.mxu0
        %v5489 = vpop.f32.mrf.mxu0
        %v5490 = vadd.f32 %v5393, %v5489
        %v5491 = vpop.f32.mrf.mxu0
        %5492 = vmatprep.mubr.bf16.mxu0 %v2330
        %5493 = vmatmul.mubr.bf16.gmra.mxu0 %v2329
        %v5494 = vpop.f32.mrf.mxu0
        %v5495 = vadd.f32 %v5398, %v5494
        %v5496 = vpop.f32.mrf.mxu0
        %v5497 = vpop.f32.mrf.mxu0
        %v5498 = vadd.f32 %v5401, %v5497
        %v5499 = vpop.f32.mrf.mxu0
        %5500 = vmatprep.mubr.bf16.mxu0 %v2366
        %5501 = vmatmul.mubr.bf16.gmra.mxu0 %v2365
        %v5502 = vpop.f32.mrf.mxu0
        %v5503 = vadd.f32 %v5406, %v5502
        %v5504 = vpop.f32.mrf.mxu0
        %v5505 = vpop.f32.mrf.mxu0
        %v5506 = vadd.f32 %v5409, %v5505
        %v5507 = vpop.f32.mrf.mxu0
        %5508 = vmatprep.mubr.bf16.mxu0 %v2402
        %5509 = vmatmul.mubr.bf16.gmra.mxu0 %v2401
        %v5510 = vpop.f32.mrf.mxu0
        %v5511 = vadd.f32 %v5414, %v5510
        %v5512 = vpop.f32.mrf.mxu0
        %v5513 = vpop.f32.mrf.mxu0
        %v5514 = vadd.f32 %v5417, %v5513
        %v5515 = vpop.f32.mrf.mxu0
        %5516 = vmatprep.mubr.bf16.mxu0 %v2438
        %5517 = vmatmul.mubr.bf16.gmra.mxu0 %v2437
        %v5518 = vpop.f32.mrf.mxu0
        %v5519 = vadd.f32 %v5422, %v5518
        %v5520 = vpop.f32.mrf.mxu0
        %v5521 = vpop.f32.mrf.mxu0
        %v5522 = vadd.f32 %v5425, %v5521
        %v5523 = vpop.f32.mrf.mxu0
        %5524 = vmatprep.mubr.bf16.mxu0 %v2474
        %5525 = vmatmul.mubr.bf16.gmra.mxu0 %v2473
        %v5526 = vpop.f32.mrf.mxu0
        %v5527 = vadd.f32 %v5430, %v5526
        %v5528 = vpop.f32.mrf.mxu0
        %v5529 = vpop.f32.mrf.mxu0
        %v5530 = vadd.f32 %v5433, %v5529
        %v5531 = vpop.f32.mrf.mxu0
        %5532 = vmatprep.mubr.bf16.mxu0 %v2510
        %5533 = vmatmul.mubr.bf16.gmra.mxu0 %v2509
        %v5534 = vpop.f32.mrf.mxu0
        %v5535 = vadd.f32 %v5438, %v5534
        %v5536 = vpop.f32.mrf.mxu0
        %v5537 = vpop.f32.mrf.mxu0
        %v5538 = vadd.f32 %v5441, %v5537
        %v5539 = vpop.f32.mrf.mxu0
        %5540 = vmatprep.mubr.bf16.mxu0 %v2546
        %5541 = vmatmul.mubr.bf16.gmra.mxu0 %v2545
        %v5542 = vpop.f32.mrf.mxu0
        %v5543 = vadd.f32 %v5446, %v5542
        %v5544 = vpop.f32.mrf.mxu0
        %v5545 = vpop.f32.mrf.mxu0
        %v5546 = vadd.f32 %v5449, %v5545
        %v5547 = vpop.f32.mrf.mxu0
        %5548 = vdwg.mxu0
        %5549 = vmatprep.subr.bf16.mxu0 0
        %5550 = vmatpush1.bf16.msra.mxu0 %v4170
        %5551 = vmatprep.subr.bf16.mxu0 0
        %5552 = vmatpush1.bf16.msra.mxu0 %v4169
        %5553 = vmatprep.subr.bf16.mxu0 0
        %5554 = vmatpush1.bf16.msra.mxu0 %v4168
        %5555 = vmatprep.subr.bf16.mxu0 0
        %5556 = vmatpush1.bf16.msra.mxu0 %v4167
        %5557 = vmatprep.subr.bf16.mxu0 0
        %5558 = vmatpush1.bf16.msra.mxu0 %v4166
        %5559 = vmatprep.subr.bf16.mxu0 0
        %5560 = vmatpush1.bf16.msra.mxu0 %v4165
        %5561 = vmatprep.subr.bf16.mxu0 0
        %5562 = vmatpush1.bf16.msra.mxu0 %v4164
        %5563 = vmatprep.subr.bf16.mxu0 0
        %5564 = vmatpush1.bf16.msra.mxu0 %v4163
        %5565 = vmatprep.subr.bf16.mxu0 0
        %5566 = vmatpush2.bf16.msra.mxu0 %v4178
        %5567 = vmatprep.subr.bf16.mxu0 0
        %5568 = vmatpush2.bf16.msra.mxu0 %v4177
        %5569 = vmatprep.subr.bf16.mxu0 0
        %5570 = vmatpush2.bf16.msra.mxu0 %v4176
        %5571 = vmatprep.subr.bf16.mxu0 0
        %5572 = vmatpush2.bf16.msra.mxu0 %v4175
        %5573 = vmatprep.subr.bf16.mxu0 0
        %5574 = vmatpush2.bf16.msra.mxu0 %v4174
        %5575 = vmatprep.subr.bf16.mxu0 0
        %5576 = vmatpush2.bf16.msra.mxu0 %v4173
        %5577 = vmatprep.subr.bf16.mxu0 0
        %5578 = vmatpush2.bf16.msra.mxu0 %v4172
        %5579 = vmatprep.subr.bf16.mxu0 0
        %5580 = vmatpush2.bf16.msra.mxu0 %v4171
        %5581 = vmatprep.mubr.bf16.mxu0 %v2296
        %5582 = vmatmul.mubr.bf16.gmra.mxu0 %v2295
        %v5583 = vpop.f32.mrf.mxu0
        %v5584 = vadd.f32 %v5487, %v5583
        %v5585 = vpop.f32.mrf.mxu0
        %v5586 = vpop.f32.mrf.mxu0
        %v5587 = vadd.f32 %v5490, %v5586
        %v5588 = vpop.f32.mrf.mxu0
        %5589 = vmatprep.mubr.bf16.mxu0 %v2332
        %5590 = vmatmul.mubr.bf16.gmra.mxu0 %v2331
        %v5591 = vpop.f32.mrf.mxu0
        %v5592 = vadd.f32 %v5495, %v5591
        %v5593 = vpop.f32.mrf.mxu0
        %v5594 = vpop.f32.mrf.mxu0
        %v5595 = vadd.f32 %v5498, %v5594
        %v5596 = vpop.f32.mrf.mxu0
        %5597 = vmatprep.mubr.bf16.mxu0 %v2368
        %5598 = vmatmul.mubr.bf16.gmra.mxu0 %v2367
        %v5599 = vpop.f32.mrf.mxu0
        %v5600 = vadd.f32 %v5503, %v5599
        %v5601 = vpop.f32.mrf.mxu0
        %v5602 = vpop.f32.mrf.mxu0
        %v5603 = vadd.f32 %v5506, %v5602
        %v5604 = vpop.f32.mrf.mxu0
        %5605 = vmatprep.mubr.bf16.mxu0 %v2404
        %5606 = vmatmul.mubr.bf16.gmra.mxu0 %v2403
        %v5607 = vpop.f32.mrf.mxu0
        %v5608 = vadd.f32 %v5511, %v5607
        %v5609 = vpop.f32.mrf.mxu0
        %v5610 = vpop.f32.mrf.mxu0
        %v5611 = vadd.f32 %v5514, %v5610
        %v5612 = vpop.f32.mrf.mxu0
        %5613 = vmatprep.mubr.bf16.mxu0 %v2440
        %5614 = vmatmul.mubr.bf16.gmra.mxu0 %v2439
        %v5615 = vpop.f32.mrf.mxu0
        %v5616 = vadd.f32 %v5519, %v5615
        %v5617 = vpop.f32.mrf.mxu0
        %v5618 = vpop.f32.mrf.mxu0
        %v5619 = vadd.f32 %v5522, %v5618
        %v5620 = vpop.f32.mrf.mxu0
        %5621 = vmatprep.mubr.bf16.mxu0 %v2476
        %5622 = vmatmul.mubr.bf16.gmra.mxu0 %v2475
        %v5623 = vpop.f32.mrf.mxu0
        %v5624 = vadd.f32 %v5527, %v5623
        %v5625 = vpop.f32.mrf.mxu0
        %v5626 = vpop.f32.mrf.mxu0
        %v5627 = vadd.f32 %v5530, %v5626
        %v5628 = vpop.f32.mrf.mxu0
        %5629 = vmatprep.mubr.bf16.mxu0 %v2512
        %5630 = vmatmul.mubr.bf16.gmra.mxu0 %v2511
        %v5631 = vpop.f32.mrf.mxu0
        %v5632 = vadd.f32 %v5535, %v5631
        %v5633 = vpop.f32.mrf.mxu0
        %v5634 = vpop.f32.mrf.mxu0
        %v5635 = vadd.f32 %v5538, %v5634
        %v5636 = vpop.f32.mrf.mxu0
        %5637 = vmatprep.mubr.bf16.mxu0 %v2548
        %5638 = vmatmul.mubr.bf16.gmra.mxu0 %v2547
        %v5639 = vpop.f32.mrf.mxu0
        %v5640 = vadd.f32 %v5543, %v5639
        %v5641 = vpop.f32.mrf.mxu0
        %v5642 = vpop.f32.mrf.mxu0
        %v5643 = vadd.f32 %v5546, %v5642
        %v5644 = vpop.f32.mrf.mxu0
        %5645 = vdwg.mxu0
        %5646 = vmatprep.subr.bf16.mxu0 0
        %5647 = vmatpush1.bf16.msra.mxu0 %v4186
        %5648 = vmatprep.subr.bf16.mxu0 0
        %5649 = vmatpush1.bf16.msra.mxu0 %v4185
        %5650 = vmatprep.subr.bf16.mxu0 0
        %5651 = vmatpush1.bf16.msra.mxu0 %v4184
        %5652 = vmatprep.subr.bf16.mxu0 0
        %5653 = vmatpush1.bf16.msra.mxu0 %v4183
        %5654 = vmatprep.subr.bf16.mxu0 0
        %5655 = vmatpush1.bf16.msra.mxu0 %v4182
        %5656 = vmatprep.subr.bf16.mxu0 0
        %5657 = vmatpush1.bf16.msra.mxu0 %v4181
        %5658 = vmatprep.subr.bf16.mxu0 0
        %5659 = vmatpush1.bf16.msra.mxu0 %v4180
        %5660 = vmatprep.subr.bf16.mxu0 0
        %5661 = vmatpush1.bf16.msra.mxu0 %v4179
        %5662 = vmatprep.subr.bf16.mxu0 0
        %5663 = vmatpush2.bf16.msra.mxu0 %v4194
        %5664 = vmatprep.subr.bf16.mxu0 0
        %5665 = vmatpush2.bf16.msra.mxu0 %v4193
        %5666 = vmatprep.subr.bf16.mxu0 0
        %5667 = vmatpush2.bf16.msra.mxu0 %v4192
        %5668 = vmatprep.subr.bf16.mxu0 0
        %5669 = vmatpush2.bf16.msra.mxu0 %v4191
        %5670 = vmatprep.subr.bf16.mxu0 0
        %5671 = vmatpush2.bf16.msra.mxu0 %v4190
        %5672 = vmatprep.subr.bf16.mxu0 0
        %5673 = vmatpush2.bf16.msra.mxu0 %v4189
        %5674 = vmatprep.subr.bf16.mxu0 0
        %5675 = vmatpush2.bf16.msra.mxu0 %v4188
        %5676 = vmatprep.subr.bf16.mxu0 0
        %5677 = vmatpush2.bf16.msra.mxu0 %v4187
        %5678 = vmatprep.mubr.bf16.mxu0 %v2298
        %5679 = vmatmul.mubr.bf16.gmra.mxu0 %v2297
        %v5680 = vpop.f32.mrf.mxu0
        %v5681 = vadd.f32 %v5584, %v5680
        %v5682 = vpop.f32.mrf.mxu0
        %v5683 = vpop.f32.mrf.mxu0
        %v5684 = vadd.f32 %v5587, %v5683
        %v5685 = vpop.f32.mrf.mxu0
        %5686 = vmatprep.mubr.bf16.mxu0 %v2334
        %5687 = vmatmul.mubr.bf16.gmra.mxu0 %v2333
        %v5688 = vpop.f32.mrf.mxu0
        %v5689 = vadd.f32 %v5592, %v5688
        %v5690 = vpop.f32.mrf.mxu0
        %v5691 = vpop.f32.mrf.mxu0
        %v5692 = vadd.f32 %v5595, %v5691
        %v5693 = vpop.f32.mrf.mxu0
        %5694 = vmatprep.mubr.bf16.mxu0 %v2370
        %5695 = vmatmul.mubr.bf16.gmra.mxu0 %v2369
        %v5696 = vpop.f32.mrf.mxu0
        %v5697 = vadd.f32 %v5600, %v5696
        %v5698 = vpop.f32.mrf.mxu0
        %v5699 = vpop.f32.mrf.mxu0
        %v5700 = vadd.f32 %v5603, %v5699
        %v5701 = vpop.f32.mrf.mxu0
        %5702 = vmatprep.mubr.bf16.mxu0 %v2406
        %5703 = vmatmul.mubr.bf16.gmra.mxu0 %v2405
        %v5704 = vpop.f32.mrf.mxu0
        %v5705 = vadd.f32 %v5608, %v5704
        %v5706 = vpop.f32.mrf.mxu0
        %v5707 = vpop.f32.mrf.mxu0
        %v5708 = vadd.f32 %v5611, %v5707
        %v5709 = vpop.f32.mrf.mxu0
        %5710 = vmatprep.mubr.bf16.mxu0 %v2442
        %5711 = vmatmul.mubr.bf16.gmra.mxu0 %v2441
        %v5712 = vpop.f32.mrf.mxu0
        %v5713 = vadd.f32 %v5616, %v5712
        %v5714 = vpop.f32.mrf.mxu0
        %v5715 = vpop.f32.mrf.mxu0
        %v5716 = vadd.f32 %v5619, %v5715
        %v5717 = vpop.f32.mrf.mxu0
        %5718 = vmatprep.mubr.bf16.mxu0 %v2478
        %5719 = vmatmul.mubr.bf16.gmra.mxu0 %v2477
        %v5720 = vpop.f32.mrf.mxu0
        %v5721 = vadd.f32 %v5624, %v5720
        %v5722 = vpop.f32.mrf.mxu0
        %v5723 = vpop.f32.mrf.mxu0
        %v5724 = vadd.f32 %v5627, %v5723
        %v5725 = vpop.f32.mrf.mxu0
        %5726 = vmatprep.mubr.bf16.mxu0 %v2514
        %5727 = vmatmul.mubr.bf16.gmra.mxu0 %v2513
        %v5728 = vpop.f32.mrf.mxu0
        %v5729 = vadd.f32 %v5632, %v5728
        %v5730 = vpop.f32.mrf.mxu0
        %v5731 = vpop.f32.mrf.mxu0
        %v5732 = vadd.f32 %v5635, %v5731
        %v5733 = vpop.f32.mrf.mxu0
        %5734 = vmatprep.mubr.bf16.mxu0 %v2550
        %5735 = vmatmul.mubr.bf16.gmra.mxu0 %v2549
        %v5736 = vpop.f32.mrf.mxu0
        %v5737 = vadd.f32 %v5640, %v5736
        %v5738 = vpop.f32.mrf.mxu0
        %v5739 = vpop.f32.mrf.mxu0
        %v5740 = vadd.f32 %v5643, %v5739
        %v5741 = vpop.f32.mrf.mxu0
        %5742 = vdwg.mxu0
        %5743 = vmatprep.subr.bf16.mxu0 0
        %5744 = vmatpush1.bf16.msra.mxu0 %v4202
        %5745 = vmatprep.subr.bf16.mxu0 0
        %5746 = vmatpush1.bf16.msra.mxu0 %v4201
        %5747 = vmatprep.subr.bf16.mxu0 0
        %5748 = vmatpush1.bf16.msra.mxu0 %v4200
        %5749 = vmatprep.subr.bf16.mxu0 0
        %5750 = vmatpush1.bf16.msra.mxu0 %v4199
        %5751 = vmatprep.subr.bf16.mxu0 0
        %5752 = vmatpush1.bf16.msra.mxu0 %v4198
        %5753 = vmatprep.subr.bf16.mxu0 0
        %5754 = vmatpush1.bf16.msra.mxu0 %v4197
        %5755 = vmatprep.subr.bf16.mxu0 0
        %5756 = vmatpush1.bf16.msra.mxu0 %v4196
        %5757 = vmatprep.subr.bf16.mxu0 0
        %5758 = vmatpush1.bf16.msra.mxu0 %v4195
        %5759 = vmatprep.subr.bf16.mxu0 0
        %5760 = vmatpush2.bf16.msra.mxu0 %v4210
        %5761 = vmatprep.subr.bf16.mxu0 0
        %5762 = vmatpush2.bf16.msra.mxu0 %v4209
        %5763 = vmatprep.subr.bf16.mxu0 0
        %5764 = vmatpush2.bf16.msra.mxu0 %v4208
        %5765 = vmatprep.subr.bf16.mxu0 0
        %5766 = vmatpush2.bf16.msra.mxu0 %v4207
        %5767 = vmatprep.subr.bf16.mxu0 0
        %5768 = vmatpush2.bf16.msra.mxu0 %v4206
        %5769 = vmatprep.subr.bf16.mxu0 0
        %5770 = vmatpush2.bf16.msra.mxu0 %v4205
        %5771 = vmatprep.subr.bf16.mxu0 0
        %5772 = vmatpush2.bf16.msra.mxu0 %v4204
        %5773 = vmatprep.subr.bf16.mxu0 0
        %5774 = vmatpush2.bf16.msra.mxu0 %v4203
        %5775 = vmatprep.mubr.bf16.mxu0 %v2300
        %5776 = vmatmul.mubr.bf16.gmra.mxu0 %v2299
        %v5777 = vpop.f32.mrf.mxu0
        %v5778 = vadd.f32 %v5681, %v5777
        %v5779 = vpop.f32.mrf.mxu0
        %v5780 = vpop.f32.mrf.mxu0
        %v5781 = vadd.f32 %v5684, %v5780
        %v5782 = vpop.f32.mrf.mxu0
        %5783 = vmatprep.mubr.bf16.mxu0 %v2336
        %5784 = vmatmul.mubr.bf16.gmra.mxu0 %v2335
        %v5785 = vpop.f32.mrf.mxu0
        %v5786 = vadd.f32 %v5689, %v5785
        %v5787 = vpop.f32.mrf.mxu0
        %v5788 = vpop.f32.mrf.mxu0
        %v5789 = vadd.f32 %v5692, %v5788
        %v5790 = vpop.f32.mrf.mxu0
        %5791 = vmatprep.mubr.bf16.mxu0 %v2372
        %5792 = vmatmul.mubr.bf16.gmra.mxu0 %v2371
        %v5793 = vpop.f32.mrf.mxu0
        %v5794 = vadd.f32 %v5697, %v5793
        %v5795 = vpop.f32.mrf.mxu0
        %v5796 = vpop.f32.mrf.mxu0
        %v5797 = vadd.f32 %v5700, %v5796
        %v5798 = vpop.f32.mrf.mxu0
        %5799 = vmatprep.mubr.bf16.mxu0 %v2408
        %5800 = vmatmul.mubr.bf16.gmra.mxu0 %v2407
        %v5801 = vpop.f32.mrf.mxu0
        %v5802 = vadd.f32 %v5705, %v5801
        %v5803 = vpop.f32.mrf.mxu0
        %v5804 = vpop.f32.mrf.mxu0
        %v5805 = vadd.f32 %v5708, %v5804
        %v5806 = vpop.f32.mrf.mxu0
        %5807 = vmatprep.mubr.bf16.mxu0 %v2444
        %5808 = vmatmul.mubr.bf16.gmra.mxu0 %v2443
        %v5809 = vpop.f32.mrf.mxu0
        %v5810 = vadd.f32 %v5713, %v5809
        %v5811 = vpop.f32.mrf.mxu0
        %v5812 = vpop.f32.mrf.mxu0
        %v5813 = vadd.f32 %v5716, %v5812
        %v5814 = vpop.f32.mrf.mxu0
        %5815 = vmatprep.mubr.bf16.mxu0 %v2480
        %5816 = vmatmul.mubr.bf16.gmra.mxu0 %v2479
        %v5817 = vpop.f32.mrf.mxu0
        %v5818 = vadd.f32 %v5721, %v5817
        %v5819 = vpop.f32.mrf.mxu0
        %v5820 = vpop.f32.mrf.mxu0
        %v5821 = vadd.f32 %v5724, %v5820
        %v5822 = vpop.f32.mrf.mxu0
        %5823 = vmatprep.mubr.bf16.mxu0 %v2516
        %5824 = vmatmul.mubr.bf16.gmra.mxu0 %v2515
        %v5825 = vpop.f32.mrf.mxu0
        %v5826 = vadd.f32 %v5729, %v5825
        %v5827 = vpop.f32.mrf.mxu0
        %v5828 = vpop.f32.mrf.mxu0
        %v5829 = vadd.f32 %v5732, %v5828
        %v5830 = vpop.f32.mrf.mxu0
        %5831 = vmatprep.mubr.bf16.mxu0 %v2552
        %5832 = vmatmul.mubr.bf16.gmra.mxu0 %v2551
        %v5833 = vpop.f32.mrf.mxu0
        %v5834 = vadd.f32 %v5737, %v5833
        %v5835 = vpop.f32.mrf.mxu0
        %v5836 = vpop.f32.mrf.mxu0
        %v5837 = vadd.f32 %v5740, %v5836
        %v5838 = vpop.f32.mrf.mxu0
        %5839 = vdwg.mxu0
        %5840 = vmatprep.subr.bf16.mxu0 0
        %5841 = vmatpush1.bf16.msra.mxu0 %v4218
        %5842 = vmatprep.subr.bf16.mxu0 0
        %5843 = vmatpush1.bf16.msra.mxu0 %v4217
        %5844 = vmatprep.subr.bf16.mxu0 0
        %5845 = vmatpush1.bf16.msra.mxu0 %v4216
        %5846 = vmatprep.subr.bf16.mxu0 0
        %5847 = vmatpush1.bf16.msra.mxu0 %v4215
        %5848 = vmatprep.subr.bf16.mxu0 0
        %5849 = vmatpush1.bf16.msra.mxu0 %v4214
        %5850 = vmatprep.subr.bf16.mxu0 0
        %5851 = vmatpush1.bf16.msra.mxu0 %v4213
        %5852 = vmatprep.subr.bf16.mxu0 0
        %5853 = vmatpush1.bf16.msra.mxu0 %v4212
        %5854 = vmatprep.subr.bf16.mxu0 0
        %5855 = vmatpush1.bf16.msra.mxu0 %v4211
        %5856 = vmatprep.subr.bf16.mxu0 0
        %5857 = vmatpush2.bf16.msra.mxu0 %v4226
        %5858 = vmatprep.subr.bf16.mxu0 0
        %5859 = vmatpush2.bf16.msra.mxu0 %v4225
        %5860 = vmatprep.subr.bf16.mxu0 0
        %5861 = vmatpush2.bf16.msra.mxu0 %v4224
        %5862 = vmatprep.subr.bf16.mxu0 0
        %5863 = vmatpush2.bf16.msra.mxu0 %v4223
        %5864 = vmatprep.subr.bf16.mxu0 0
        %5865 = vmatpush2.bf16.msra.mxu0 %v4222
        %5866 = vmatprep.subr.bf16.mxu0 0
        %5867 = vmatpush2.bf16.msra.mxu0 %v4221
        %5868 = vmatprep.subr.bf16.mxu0 0
        %5869 = vmatpush2.bf16.msra.mxu0 %v4220
        %5870 = vmatprep.subr.bf16.mxu0 0
        %5871 = vmatpush2.bf16.msra.mxu0 %v4219
        %5872 = vmatprep.mubr.bf16.mxu0 %v2302
        %5873 = vmatmul.mubr.bf16.gmra.mxu0 %v2301
        %v5874 = vpop.f32.mrf.mxu0
        %v5875 = vadd.f32 %v5778, %v5874
        %v5876 = vpop.f32.mrf.mxu0
        %v5877 = vpop.f32.mrf.mxu0
        %v5878 = vadd.f32 %v5781, %v5877
        %v5879 = vpop.f32.mrf.mxu0
        %5880 = vmatprep.mubr.bf16.mxu0 %v2338
        %5881 = vmatmul.mubr.bf16.gmra.mxu0 %v2337
        %v5882 = vpop.f32.mrf.mxu0
        %v5883 = vadd.f32 %v5786, %v5882
        %v5884 = vpop.f32.mrf.mxu0
        %v5885 = vpop.f32.mrf.mxu0
        %v5886 = vadd.f32 %v5789, %v5885
        %v5887 = vpop.f32.mrf.mxu0
        %5888 = vmatprep.mubr.bf16.mxu0 %v2374
        %5889 = vmatmul.mubr.bf16.gmra.mxu0 %v2373
        %v5890 = vpop.f32.mrf.mxu0
        %v5891 = vadd.f32 %v5794, %v5890
        %v5892 = vpop.f32.mrf.mxu0
        %v5893 = vpop.f32.mrf.mxu0
        %v5894 = vadd.f32 %v5797, %v5893
        %v5895 = vpop.f32.mrf.mxu0
        %5896 = vmatprep.mubr.bf16.mxu0 %v2410
        %5897 = vmatmul.mubr.bf16.gmra.mxu0 %v2409
        %v5898 = vpop.f32.mrf.mxu0
        %v5899 = vadd.f32 %v5802, %v5898
        %v5900 = vpop.f32.mrf.mxu0
        %v5901 = vpop.f32.mrf.mxu0
        %v5902 = vadd.f32 %v5805, %v5901
        %v5903 = vpop.f32.mrf.mxu0
        %5904 = vmatprep.mubr.bf16.mxu0 %v2446
        %5905 = vmatmul.mubr.bf16.gmra.mxu0 %v2445
        %v5906 = vpop.f32.mrf.mxu0
        %v5907 = vadd.f32 %v5810, %v5906
        %v5908 = vpop.f32.mrf.mxu0
        %v5909 = vpop.f32.mrf.mxu0
        %v5910 = vadd.f32 %v5813, %v5909
        %v5911 = vpop.f32.mrf.mxu0
        %5912 = vmatprep.mubr.bf16.mxu0 %v2482
        %5913 = vmatmul.mubr.bf16.gmra.mxu0 %v2481
        %v5914 = vpop.f32.mrf.mxu0
        %v5915 = vadd.f32 %v5818, %v5914
        %v5916 = vpop.f32.mrf.mxu0
        %v5917 = vpop.f32.mrf.mxu0
        %v5918 = vadd.f32 %v5821, %v5917
        %v5919 = vpop.f32.mrf.mxu0
        %5920 = vmatprep.mubr.bf16.mxu0 %v2518
        %5921 = vmatmul.mubr.bf16.gmra.mxu0 %v2517
        %v5922 = vpop.f32.mrf.mxu0
        %v5923 = vadd.f32 %v5826, %v5922
        %v5924 = vpop.f32.mrf.mxu0
        %v5925 = vpop.f32.mrf.mxu0
        %v5926 = vadd.f32 %v5829, %v5925
        %v5927 = vpop.f32.mrf.mxu0
        %5928 = vmatprep.mubr.bf16.mxu0 %v2554
        %5929 = vmatmul.mubr.bf16.gmra.mxu0 %v2553
        %v5930 = vpop.f32.mrf.mxu0
        %v5931 = vadd.f32 %v5834, %v5930
        %v5932 = vpop.f32.mrf.mxu0
        %v5933 = vpop.f32.mrf.mxu0
        %v5934 = vadd.f32 %v5837, %v5933
        %v5935 = vpop.f32.mrf.mxu0
        %5936 = vdwg.mxu0
        %5937 = vmatprep.subr.bf16.mxu0 0
        %5938 = vmatpush1.bf16.msra.mxu0 %v4234
        %5939 = vmatprep.subr.bf16.mxu0 0
        %5940 = vmatpush1.bf16.msra.mxu0 %v4233
        %5941 = vmatprep.subr.bf16.mxu0 0
        %5942 = vmatpush1.bf16.msra.mxu0 %v4232
        %5943 = vmatprep.subr.bf16.mxu0 0
        %5944 = vmatpush1.bf16.msra.mxu0 %v4231
        %5945 = vmatprep.subr.bf16.mxu0 0
        %5946 = vmatpush1.bf16.msra.mxu0 %v4230
        %5947 = vmatprep.subr.bf16.mxu0 0
        %5948 = vmatpush1.bf16.msra.mxu0 %v4229
        %5949 = vmatprep.subr.bf16.mxu0 0
        %5950 = vmatpush1.bf16.msra.mxu0 %v4228
        %5951 = vmatprep.subr.bf16.mxu0 0
        %5952 = vmatpush1.bf16.msra.mxu0 %v4227
        %5953 = vmatprep.subr.bf16.mxu0 0
        %5954 = vmatpush2.bf16.msra.mxu0 %v4242
        %5955 = vmatprep.subr.bf16.mxu0 0
        %5956 = vmatpush2.bf16.msra.mxu0 %v4241
        %5957 = vmatprep.subr.bf16.mxu0 0
        %5958 = vmatpush2.bf16.msra.mxu0 %v4240
        %5959 = vmatprep.subr.bf16.mxu0 0
        %5960 = vmatpush2.bf16.msra.mxu0 %v4239
        %5961 = vmatprep.subr.bf16.mxu0 0
        %5962 = vmatpush2.bf16.msra.mxu0 %v4238
        %5963 = vmatprep.subr.bf16.mxu0 0
        %5964 = vmatpush2.bf16.msra.mxu0 %v4237
        %5965 = vmatprep.subr.bf16.mxu0 0
        %5966 = vmatpush2.bf16.msra.mxu0 %v4236
        %5967 = vmatprep.subr.bf16.mxu0 0
        %5968 = vmatpush2.bf16.msra.mxu0 %v4235
        %5969 = vmatprep.mubr.bf16.mxu0 %v2304
        %5970 = vmatmul.mubr.bf16.gmra.mxu0 %v2303
        %v5971 = vpop.f32.mrf.mxu0
        %v5972 = vadd.f32 %v5875, %v5971
        %v5973 = vpop.f32.mrf.mxu0
        %v5974 = vpop.f32.mrf.mxu0
        %v5975 = vadd.f32 %v5878, %v5974
        %v5976 = vpop.f32.mrf.mxu0
        %5977 = vmatprep.mubr.bf16.mxu0 %v2340
        %5978 = vmatmul.mubr.bf16.gmra.mxu0 %v2339
        %v5979 = vpop.f32.mrf.mxu0
        %v5980 = vadd.f32 %v5883, %v5979
        %v5981 = vpop.f32.mrf.mxu0
        %v5982 = vpop.f32.mrf.mxu0
        %v5983 = vadd.f32 %v5886, %v5982
        %v5984 = vpop.f32.mrf.mxu0
        %5985 = vmatprep.mubr.bf16.mxu0 %v2376
        %5986 = vmatmul.mubr.bf16.gmra.mxu0 %v2375
        %v5987 = vpop.f32.mrf.mxu0
        %v5988 = vadd.f32 %v5891, %v5987
        %v5989 = vpop.f32.mrf.mxu0
        %v5990 = vpop.f32.mrf.mxu0
        %v5991 = vadd.f32 %v5894, %v5990
        %v5992 = vpop.f32.mrf.mxu0
        %5993 = vmatprep.mubr.bf16.mxu0 %v2412
        %5994 = vmatmul.mubr.bf16.gmra.mxu0 %v2411
        %v5995 = vpop.f32.mrf.mxu0
        %v5996 = vadd.f32 %v5899, %v5995
        %v5997 = vpop.f32.mrf.mxu0
        %v5998 = vpop.f32.mrf.mxu0
        %v5999 = vadd.f32 %v5902, %v5998
        %v6000 = vpop.f32.mrf.mxu0
        %6001 = vmatprep.mubr.bf16.mxu0 %v2448
        %6002 = vmatmul.mubr.bf16.gmra.mxu0 %v2447
        %v6003 = vpop.f32.mrf.mxu0
        %v6004 = vadd.f32 %v5907, %v6003
        %v6005 = vpop.f32.mrf.mxu0
        %v6006 = vpop.f32.mrf.mxu0
        %v6007 = vadd.f32 %v5910, %v6006
        %v6008 = vpop.f32.mrf.mxu0
        %6009 = vmatprep.mubr.bf16.mxu0 %v2484
        %6010 = vmatmul.mubr.bf16.gmra.mxu0 %v2483
        %v6011 = vpop.f32.mrf.mxu0
        %v6012 = vadd.f32 %v5915, %v6011
        %v6013 = vpop.f32.mrf.mxu0
        %v6014 = vpop.f32.mrf.mxu0
        %v6015 = vadd.f32 %v5918, %v6014
        %v6016 = vpop.f32.mrf.mxu0
        %6017 = vmatprep.mubr.bf16.mxu0 %v2520
        %6018 = vmatmul.mubr.bf16.gmra.mxu0 %v2519
        %v6019 = vpop.f32.mrf.mxu0
        %v6020 = vadd.f32 %v5923, %v6019
        %v6021 = vpop.f32.mrf.mxu0
        %v6022 = vpop.f32.mrf.mxu0
        %v6023 = vadd.f32 %v5926, %v6022
        %v6024 = vpop.f32.mrf.mxu0
        %6025 = vmatprep.mubr.bf16.mxu0 %v2556
        %6026 = vmatmul.mubr.bf16.gmra.mxu0 %v2555
        %v6027 = vpop.f32.mrf.mxu0
        %v6028 = vadd.f32 %v5931, %v6027
        %v6029 = vpop.f32.mrf.mxu0
        %v6030 = vpop.f32.mrf.mxu0
        %v6031 = vadd.f32 %v5934, %v6030
        %v6032 = vpop.f32.mrf.mxu0
        %6033 = vdwg.mxu0
        %6034 = vmatprep.subr.bf16.mxu0 0
        %6035 = vmatpush1.bf16.msra.mxu0 %v4250
        %6036 = vmatprep.subr.bf16.mxu0 0
        %6037 = vmatpush1.bf16.msra.mxu0 %v4249
        %6038 = vmatprep.subr.bf16.mxu0 0
        %6039 = vmatpush1.bf16.msra.mxu0 %v4248
        %6040 = vmatprep.subr.bf16.mxu0 0
        %6041 = vmatpush1.bf16.msra.mxu0 %v4247
        %6042 = vmatprep.subr.bf16.mxu0 0
        %6043 = vmatpush1.bf16.msra.mxu0 %v4246
        %6044 = vmatprep.subr.bf16.mxu0 0
        %6045 = vmatpush1.bf16.msra.mxu0 %v4245
        %6046 = vmatprep.subr.bf16.mxu0 0
        %6047 = vmatpush1.bf16.msra.mxu0 %v4244
        %6048 = vmatprep.subr.bf16.mxu0 0
        %6049 = vmatpush1.bf16.msra.mxu0 %v4243
        %6050 = vmatprep.subr.bf16.mxu0 0
        %6051 = vmatpush2.bf16.msra.mxu0 %v4258
        %6052 = vmatprep.subr.bf16.mxu0 0
        %6053 = vmatpush2.bf16.msra.mxu0 %v4257
        %6054 = vmatprep.subr.bf16.mxu0 0
        %6055 = vmatpush2.bf16.msra.mxu0 %v4256
        %6056 = vmatprep.subr.bf16.mxu0 0
        %6057 = vmatpush2.bf16.msra.mxu0 %v4255
        %6058 = vmatprep.subr.bf16.mxu0 0
        %6059 = vmatpush2.bf16.msra.mxu0 %v4254
        %6060 = vmatprep.subr.bf16.mxu0 0
        %6061 = vmatpush2.bf16.msra.mxu0 %v4253
        %6062 = vmatprep.subr.bf16.mxu0 0
        %6063 = vmatpush2.bf16.msra.mxu0 %v4252
        %6064 = vmatprep.subr.bf16.mxu0 0
        %6065 = vmatpush2.bf16.msra.mxu0 %v4251
        %6066 = vmatprep.mubr.bf16.mxu0 %v2306
        %6067 = vmatmul.mubr.bf16.gmra.mxu0 %v2305
        %v6068 = vpop.f32.mrf.mxu0
        %v6069 = vadd.f32 %v5972, %v6068
        %v6070 = vpop.f32.mrf.mxu0
        %v6071 = vpop.f32.mrf.mxu0
        %v6072 = vadd.f32 %v5975, %v6071
        %v6073 = vpop.f32.mrf.mxu0
        %6074 = vmatprep.mubr.bf16.mxu0 %v2342
        %6075 = vmatmul.mubr.bf16.gmra.mxu0 %v2341
        %v6076 = vpop.f32.mrf.mxu0
        %v6077 = vadd.f32 %v5980, %v6076
        %v6078 = vpop.f32.mrf.mxu0
        %v6079 = vpop.f32.mrf.mxu0
        %v6080 = vadd.f32 %v5983, %v6079
        %v6081 = vpop.f32.mrf.mxu0
        %6082 = vmatprep.mubr.bf16.mxu0 %v2378
        %6083 = vmatmul.mubr.bf16.gmra.mxu0 %v2377
        %v6084 = vpop.f32.mrf.mxu0
        %v6085 = vadd.f32 %v5988, %v6084
        %v6086 = vpop.f32.mrf.mxu0
        %v6087 = vpop.f32.mrf.mxu0
        %v6088 = vadd.f32 %v5991, %v6087
        %v6089 = vpop.f32.mrf.mxu0
        %6090 = vmatprep.mubr.bf16.mxu0 %v2414
        %6091 = vmatmul.mubr.bf16.gmra.mxu0 %v2413
        %v6092 = vpop.f32.mrf.mxu0
        %v6093 = vadd.f32 %v5996, %v6092
        %v6094 = vpop.f32.mrf.mxu0
        %v6095 = vpop.f32.mrf.mxu0
        %v6096 = vadd.f32 %v5999, %v6095
        %v6097 = vpop.f32.mrf.mxu0
        %6098 = vmatprep.mubr.bf16.mxu0 %v2450
        %6099 = vmatmul.mubr.bf16.gmra.mxu0 %v2449
        %v6100 = vpop.f32.mrf.mxu0
        %v6101 = vadd.f32 %v6004, %v6100
        %v6102 = vpop.f32.mrf.mxu0
        %v6103 = vpop.f32.mrf.mxu0
        %v6104 = vadd.f32 %v6007, %v6103
        %v6105 = vpop.f32.mrf.mxu0
        %6106 = vmatprep.mubr.bf16.mxu0 %v2486
        %6107 = vmatmul.mubr.bf16.gmra.mxu0 %v2485
        %v6108 = vpop.f32.mrf.mxu0
        %v6109 = vadd.f32 %v6012, %v6108
        %v6110 = vpop.f32.mrf.mxu0
        %v6111 = vpop.f32.mrf.mxu0
        %v6112 = vadd.f32 %v6015, %v6111
        %v6113 = vpop.f32.mrf.mxu0
        %6114 = vmatprep.mubr.bf16.mxu0 %v2522
        %6115 = vmatmul.mubr.bf16.gmra.mxu0 %v2521
        %v6116 = vpop.f32.mrf.mxu0
        %v6117 = vadd.f32 %v6020, %v6116
        %v6118 = vpop.f32.mrf.mxu0
        %v6119 = vpop.f32.mrf.mxu0
        %v6120 = vadd.f32 %v6023, %v6119
        %v6121 = vpop.f32.mrf.mxu0
        %6122 = vmatprep.mubr.bf16.mxu0 %v2558
        %6123 = vmatmul.mubr.bf16.gmra.mxu0 %v2557
        %v6124 = vpop.f32.mrf.mxu0
        %v6125 = vadd.f32 %v6028, %v6124
        %v6126 = vpop.f32.mrf.mxu0
        %v6127 = vpop.f32.mrf.mxu0
        %v6128 = vadd.f32 %v6031, %v6127
        %v6129 = vpop.f32.mrf.mxu0
        %6130 = vdwg.mxu0
        %6131 = vmatprep.subr.bf16.mxu0 0
        %6132 = vmatpush1.bf16.msra.mxu0 %v4266
        %6133 = vmatprep.subr.bf16.mxu0 0
        %6134 = vmatpush1.bf16.msra.mxu0 %v4265
        %6135 = vmatprep.subr.bf16.mxu0 0
        %6136 = vmatpush1.bf16.msra.mxu0 %v4264
        %6137 = vmatprep.subr.bf16.mxu0 0
        %6138 = vmatpush1.bf16.msra.mxu0 %v4263
        %6139 = vmatprep.subr.bf16.mxu0 0
        %6140 = vmatpush1.bf16.msra.mxu0 %v4262
        %6141 = vmatprep.subr.bf16.mxu0 0
        %6142 = vmatpush1.bf16.msra.mxu0 %v4261
        %6143 = vmatprep.subr.bf16.mxu0 0
        %6144 = vmatpush1.bf16.msra.mxu0 %v4260
        %6145 = vmatprep.subr.bf16.mxu0 0
        %6146 = vmatpush1.bf16.msra.mxu0 %v4259
        %6147 = vmatprep.subr.bf16.mxu0 0
        %6148 = vmatpush2.bf16.msra.mxu0 %v4274
        %6149 = vmatprep.subr.bf16.mxu0 0
        %6150 = vmatpush2.bf16.msra.mxu0 %v4273
        %6151 = vmatprep.subr.bf16.mxu0 0
        %6152 = vmatpush2.bf16.msra.mxu0 %v4272
        %6153 = vmatprep.subr.bf16.mxu0 0
        %6154 = vmatpush2.bf16.msra.mxu0 %v4271
        %6155 = vmatprep.subr.bf16.mxu0 0
        %6156 = vmatpush2.bf16.msra.mxu0 %v4270
        %6157 = vmatprep.subr.bf16.mxu0 0
        %6158 = vmatpush2.bf16.msra.mxu0 %v4269
        %6159 = vmatprep.subr.bf16.mxu0 0
        %6160 = vmatpush2.bf16.msra.mxu0 %v4268
        %6161 = vmatprep.subr.bf16.mxu0 0
        %6162 = vmatpush2.bf16.msra.mxu0 %v4267
        %6163 = vmatprep.mubr.bf16.mxu0 %v2308
        %6164 = vmatmul.mubr.bf16.gmra.mxu0 %v2307
        %v6165 = vpop.f32.mrf.mxu0
        %v6166 = vadd.f32 %v6069, %v6165
        %v6167 = vpop.f32.mrf.mxu0
        %v6168 = vpop.f32.mrf.mxu0
        %v6169 = vadd.f32 %v6072, %v6168
        %v6170 = vpop.f32.mrf.mxu0
        %6171 = vmatprep.mubr.bf16.mxu0 %v2344
        %6172 = vmatmul.mubr.bf16.gmra.mxu0 %v2343
        %v6173 = vpop.f32.mrf.mxu0
        %v6174 = vadd.f32 %v6077, %v6173
        %v6175 = vpop.f32.mrf.mxu0
        %v6176 = vpop.f32.mrf.mxu0
        %v6177 = vadd.f32 %v6080, %v6176
        %v6178 = vpop.f32.mrf.mxu0
        %6179 = vmatprep.mubr.bf16.mxu0 %v2380
        %6180 = vmatmul.mubr.bf16.gmra.mxu0 %v2379
        %v6181 = vpop.f32.mrf.mxu0
        %v6182 = vadd.f32 %v6085, %v6181
        %v6183 = vpop.f32.mrf.mxu0
        %v6184 = vpop.f32.mrf.mxu0
        %v6185 = vadd.f32 %v6088, %v6184
        %v6186 = vpop.f32.mrf.mxu0
        %6187 = vmatprep.mubr.bf16.mxu0 %v2416
        %6188 = vmatmul.mubr.bf16.gmra.mxu0 %v2415
        %v6189 = vpop.f32.mrf.mxu0
        %v6190 = vadd.f32 %v6093, %v6189
        %v6191 = vpop.f32.mrf.mxu0
        %v6192 = vpop.f32.mrf.mxu0
        %v6193 = vadd.f32 %v6096, %v6192
        %v6194 = vpop.f32.mrf.mxu0
        %6195 = vmatprep.mubr.bf16.mxu0 %v2452
        %6196 = vmatmul.mubr.bf16.gmra.mxu0 %v2451
        %v6197 = vpop.f32.mrf.mxu0
        %v6198 = vadd.f32 %v6101, %v6197
        %v6199 = vpop.f32.mrf.mxu0
        %v6200 = vpop.f32.mrf.mxu0
        %v6201 = vadd.f32 %v6104, %v6200
        %v6202 = vpop.f32.mrf.mxu0
        %6203 = vmatprep.mubr.bf16.mxu0 %v2488
        %6204 = vmatmul.mubr.bf16.gmra.mxu0 %v2487
        %v6205 = vpop.f32.mrf.mxu0
        %v6206 = vadd.f32 %v6109, %v6205
        %v6207 = vpop.f32.mrf.mxu0
        %v6208 = vpop.f32.mrf.mxu0
        %v6209 = vadd.f32 %v6112, %v6208
        %v6210 = vpop.f32.mrf.mxu0
        %6211 = vmatprep.mubr.bf16.mxu0 %v2524
        %6212 = vmatmul.mubr.bf16.gmra.mxu0 %v2523
        %v6213 = vpop.f32.mrf.mxu0
        %v6214 = vadd.f32 %v6117, %v6213
        %v6215 = vpop.f32.mrf.mxu0
        %v6216 = vpop.f32.mrf.mxu0
        %v6217 = vadd.f32 %v6120, %v6216
        %v6218 = vpop.f32.mrf.mxu0
        %6219 = vmatprep.mubr.bf16.mxu0 %v2560
        %6220 = vmatmul.mubr.bf16.gmra.mxu0 %v2559
        %v6221 = vpop.f32.mrf.mxu0
        %v6222 = vadd.f32 %v6125, %v6221
        %v6223 = vpop.f32.mrf.mxu0
        %v6224 = vpop.f32.mrf.mxu0
        %v6225 = vadd.f32 %v6128, %v6224
        %v6226 = vpop.f32.mrf.mxu0
        %6227 = vdwg.mxu0
        %6228 = vmatprep.subr.bf16.mxu0 0
        %6229 = vmatpush1.bf16.msra.mxu0 %v4282
        %6230 = vmatprep.subr.bf16.mxu0 0
        %6231 = vmatpush1.bf16.msra.mxu0 %v4281
        %6232 = vmatprep.subr.bf16.mxu0 0
        %6233 = vmatpush1.bf16.msra.mxu0 %v4280
        %6234 = vmatprep.subr.bf16.mxu0 0
        %6235 = vmatpush1.bf16.msra.mxu0 %v4279
        %6236 = vmatprep.subr.bf16.mxu0 0
        %6237 = vmatpush1.bf16.msra.mxu0 %v4278
        %6238 = vmatprep.subr.bf16.mxu0 0
        %6239 = vmatpush1.bf16.msra.mxu0 %v4277
        %6240 = vmatprep.subr.bf16.mxu0 0
        %6241 = vmatpush1.bf16.msra.mxu0 %v4276
        %6242 = vmatprep.subr.bf16.mxu0 0
        %6243 = vmatpush1.bf16.msra.mxu0 %v4275
        %6244 = vmatprep.subr.bf16.mxu0 0
        %6245 = vmatpush2.bf16.msra.mxu0 %v4290
        %6246 = vmatprep.subr.bf16.mxu0 0
        %6247 = vmatpush2.bf16.msra.mxu0 %v4289
        %6248 = vmatprep.subr.bf16.mxu0 0
        %6249 = vmatpush2.bf16.msra.mxu0 %v4288
        %6250 = vmatprep.subr.bf16.mxu0 0
        %6251 = vmatpush2.bf16.msra.mxu0 %v4287
        %6252 = vmatprep.subr.bf16.mxu0 0
        %6253 = vmatpush2.bf16.msra.mxu0 %v4286
        %6254 = vmatprep.subr.bf16.mxu0 0
        %6255 = vmatpush2.bf16.msra.mxu0 %v4285
        %6256 = vmatprep.subr.bf16.mxu0 0
        %6257 = vmatpush2.bf16.msra.mxu0 %v4284
        %6258 = vmatprep.subr.bf16.mxu0 0
        %6259 = vmatpush2.bf16.msra.mxu0 %v4283
        %6260 = vmatprep.mubr.bf16.mxu0 %v2310
        %6261 = vmatmul.mubr.bf16.gmra.mxu0 %v2309
        %v6262 = vpop.f32.mrf.mxu0
        %v6263 = vadd.f32 %v6166, %v6262
        %v6264 = vpop.f32.mrf.mxu0
        %v6265 = vpop.f32.mrf.mxu0
        %v6266 = vadd.f32 %v6169, %v6265
        %v6267 = vpop.f32.mrf.mxu0
        %6268 = vmatprep.mubr.bf16.mxu0 %v2346
        %6269 = vmatmul.mubr.bf16.gmra.mxu0 %v2345
        %v6270 = vpop.f32.mrf.mxu0
        %v6271 = vadd.f32 %v6174, %v6270
        %v6272 = vpop.f32.mrf.mxu0
        %v6273 = vpop.f32.mrf.mxu0
        %v6274 = vadd.f32 %v6177, %v6273
        %v6275 = vpop.f32.mrf.mxu0
        %6276 = vmatprep.mubr.bf16.mxu0 %v2382
        %6277 = vmatmul.mubr.bf16.gmra.mxu0 %v2381
        %v6278 = vpop.f32.mrf.mxu0
        %v6279 = vadd.f32 %v6182, %v6278
        %v6280 = vpop.f32.mrf.mxu0
        %v6281 = vpop.f32.mrf.mxu0
        %v6282 = vadd.f32 %v6185, %v6281
        %v6283 = vpop.f32.mrf.mxu0
        %6284 = vmatprep.mubr.bf16.mxu0 %v2418
        %6285 = vmatmul.mubr.bf16.gmra.mxu0 %v2417
        %v6286 = vpop.f32.mrf.mxu0
        %v6287 = vadd.f32 %v6190, %v6286
        %v6288 = vpop.f32.mrf.mxu0
        %v6289 = vpop.f32.mrf.mxu0
        %v6290 = vadd.f32 %v6193, %v6289
        %v6291 = vpop.f32.mrf.mxu0
        %6292 = vmatprep.mubr.bf16.mxu0 %v2454
        %6293 = vmatmul.mubr.bf16.gmra.mxu0 %v2453
        %v6294 = vpop.f32.mrf.mxu0
        %v6295 = vadd.f32 %v6198, %v6294
        %v6296 = vpop.f32.mrf.mxu0
        %v6297 = vpop.f32.mrf.mxu0
        %v6298 = vadd.f32 %v6201, %v6297
        %v6299 = vpop.f32.mrf.mxu0
        %6300 = vmatprep.mubr.bf16.mxu0 %v2490
        %6301 = vmatmul.mubr.bf16.gmra.mxu0 %v2489
        %v6302 = vpop.f32.mrf.mxu0
        %v6303 = vadd.f32 %v6206, %v6302
        %v6304 = vpop.f32.mrf.mxu0
        %v6305 = vpop.f32.mrf.mxu0
        %v6306 = vadd.f32 %v6209, %v6305
        %v6307 = vpop.f32.mrf.mxu0
        %6308 = vmatprep.mubr.bf16.mxu0 %v2526
        %6309 = vmatmul.mubr.bf16.gmra.mxu0 %v2525
        %v6310 = vpop.f32.mrf.mxu0
        %v6311 = vadd.f32 %v6214, %v6310
        %v6312 = vpop.f32.mrf.mxu0
        %v6313 = vpop.f32.mrf.mxu0
        %v6314 = vadd.f32 %v6217, %v6313
        %v6315 = vpop.f32.mrf.mxu0
        %6316 = vmatprep.mubr.bf16.mxu0 %v2562
        %6317 = vmatmul.mubr.bf16.gmra.mxu0 %v2561
        %v6318 = vpop.f32.mrf.mxu0
        %v6319 = vadd.f32 %v6222, %v6318
        %v6320 = vpop.f32.mrf.mxu0
        %v6321 = vpop.f32.mrf.mxu0
        %v6322 = vadd.f32 %v6225, %v6321
        %v6323 = vpop.f32.mrf.mxu0
        %6324 = vdwg.mxu0
        %v6325 = vld [vmem:[#allocation8] sm:$0x1]
        %v6326 = vld [vmem:[#allocation10] sm:$0x1]
        %6327 = vadd.xlane.f32.xlu0 %v6263
        %v6328 = vpop.xlane.xlu0 %6327
        %6329 = vadd.xlane.f32.xlu0 %v6266
        %v6330 = vpop.xlane.xlu0 %6329
        %6331 = vadd.xlane.f32.xlu0 %v6271
        %v6332 = vpop.xlane.xlu0 %6331
        %6333 = vadd.xlane.f32.xlu0 %v6274
        %v6334 = vpop.xlane.xlu0 %6333
        %6335 = vadd.xlane.f32.xlu0 %v6279
        %v6336 = vpop.xlane.xlu0 %6335
        %6337 = vadd.xlane.f32.xlu0 %v6282
        %v6338 = vpop.xlane.xlu0 %6337
        %6339 = vadd.xlane.f32.xlu0 %v6287
        %v6340 = vpop.xlane.xlu0 %6339
        %6341 = vadd.xlane.f32.xlu0 %v6290
        %v6342 = vpop.xlane.xlu0 %6341
        %6343 = vadd.xlane.f32.xlu0 %v6295
        %v6344 = vpop.xlane.xlu0 %6343
        %6345 = vadd.xlane.f32.xlu0 %v6298
        %v6346 = vpop.xlane.xlu0 %6345
        %6347 = vadd.xlane.f32.xlu0 %v6303
        %v6348 = vpop.xlane.xlu0 %6347
        %6349 = vadd.xlane.f32.xlu0 %v6306
        %v6350 = vpop.xlane.xlu0 %6349
        %6351 = vadd.xlane.f32.xlu0 %v6311
        %v6352 = vpop.xlane.xlu0 %6351
        %6353 = vadd.xlane.f32.xlu0 %v6314
        %v6354 = vpop.xlane.xlu0 %6353
        %6355 = vadd.xlane.f32.xlu0 %v6319
        %v6356 = vpop.xlane.xlu0 %6355
        %6357 = vadd.xlane.f32.xlu0 %v6322
        %v6358 = vpop.xlane.xlu0 %6357
        %v6359 = vrcp.pop 128.0
        %v6360 = vmul.f32 %v6328, %v6359
        %v6361 = vmul.f32 %v6330, %v6359
        %v6362 = vmul.f32 %v6332, %v6359
        %v6363 = vmul.f32 %v6334, %v6359
        %v6364 = vmul.f32 %v6336, %v6359
        %v6365 = vmul.f32 %v6338, %v6359
        %v6366 = vmul.f32 %v6340, %v6359
        %v6367 = vmul.f32 %v6342, %v6359
        %v6368 = vmul.f32 %v6344, %v6359
        %v6369 = vmul.f32 %v6346, %v6359
        %v6370 = vmul.f32 %v6348, %v6359
        %v6371 = vmul.f32 %v6350, %v6359
        %v6372 = vmul.f32 %v6352, %v6359
        %v6373 = vmul.f32 %v6354, %v6359
        %v6374 = vmul.f32 %v6356, %v6359
        %v6375 = vmul.f32 %v6358, %v6359
        %v6376 = vsub.f32 %v6263, %v6360
        %v6377 = vsub.f32 %v6266, %v6361
        %v6378 = vsub.f32 %v6271, %v6362
        %v6379 = vsub.f32 %v6274, %v6363
        %v6380 = vsub.f32 %v6279, %v6364
        %v6381 = vsub.f32 %v6282, %v6365
        %v6382 = vsub.f32 %v6287, %v6366
        %v6383 = vsub.f32 %v6290, %v6367
        %v6384 = vsub.f32 %v6295, %v6368
        %v6385 = vsub.f32 %v6298, %v6369
        %v6386 = vsub.f32 %v6303, %v6370
        %v6387 = vsub.f32 %v6306, %v6371
        %v6388 = vsub.f32 %v6311, %v6372
        %v6389 = vsub.f32 %v6314, %v6373
        %v6390 = vsub.f32 %v6319, %v6374
        %v6391 = vsub.f32 %v6322, %v6375
        %v6392 = vmul.f32 %v6376, %v6376
        %v6393 = vmul.f32 %v6377, %v6377
        %v6394 = vmul.f32 %v6378, %v6378
        %v6395 = vmul.f32 %v6379, %v6379
        %v6396 = vmul.f32 %v6380, %v6380
        %v6397 = vmul.f32 %v6381, %v6381
        %v6398 = vmul.f32 %v6382, %v6382
        %v6399 = vmul.f32 %v6383, %v6383
        %v6400 = vmul.f32 %v6384, %v6384
        %v6401 = vmul.f32 %v6385, %v6385
        %v6402 = vmul.f32 %v6386, %v6386
        %v6403 = vmul.f32 %v6387, %v6387
        %v6404 = vmul.f32 %v6388, %v6388
        %v6405 = vmul.f32 %v6389, %v6389
        %v6406 = vmul.f32 %v6390, %v6390
        %v6407 = vmul.f32 %v6391, %v6391
        %6408 = vadd.xlane.f32.xlu0 %v6392
        %v6409 = vpop.xlane.xlu0 %6408
        %6410 = vadd.xlane.f32.xlu0 %v6393
        %v6411 = vpop.xlane.xlu0 %6410
        %6412 = vadd.xlane.f32.xlu0 %v6394
        %v6413 = vpop.xlane.xlu0 %6412
        %6414 = vadd.xlane.f32.xlu0 %v6395
        %v6415 = vpop.xlane.xlu0 %6414
        %6416 = vadd.xlane.f32.xlu0 %v6396
        %v6417 = vpop.xlane.xlu0 %6416
        %6418 = vadd.xlane.f32.xlu0 %v6397
        %v6419 = vpop.xlane.xlu0 %6418
        %6420 = vadd.xlane.f32.xlu0 %v6398
        %v6421 = vpop.xlane.xlu0 %6420
        %6422 = vadd.xlane.f32.xlu0 %v6399
        %v6423 = vpop.xlane.xlu0 %6422
        %6424 = vadd.xlane.f32.xlu0 %v6400
        %v6425 = vpop.xlane.xlu0 %6424
        %6426 = vadd.xlane.f32.xlu0 %v6401
        %v6427 = vpop.xlane.xlu0 %6426
        %6428 = vadd.xlane.f32.xlu0 %v6402
        %v6429 = vpop.xlane.xlu0 %6428
        %6430 = vadd.xlane.f32.xlu0 %v6403
        %v6431 = vpop.xlane.xlu0 %6430
        %6432 = vadd.xlane.f32.xlu0 %v6404
        %v6433 = vpop.xlane.xlu0 %6432
        %6434 = vadd.xlane.f32.xlu0 %v6405
        %v6435 = vpop.xlane.xlu0 %6434
        %6436 = vadd.xlane.f32.xlu0 %v6406
        %v6437 = vpop.xlane.xlu0 %6436
        %6438 = vadd.xlane.f32.xlu0 %v6407
        %v6439 = vpop.xlane.xlu0 %6438
        %v6440 = vmul.f32 %v6409, %v6359
        %v6441 = vmul.f32 %v6411, %v6359
        %v6442 = vmul.f32 %v6413, %v6359
        %v6443 = vmul.f32 %v6415, %v6359
        %v6444 = vmul.f32 %v6417, %v6359
        %v6445 = vmul.f32 %v6419, %v6359
        %v6446 = vmul.f32 %v6421, %v6359
        %v6447 = vmul.f32 %v6423, %v6359
        %v6448 = vmul.f32 %v6425, %v6359
        %v6449 = vmul.f32 %v6427, %v6359
        %v6450 = vmul.f32 %v6429, %v6359
        %v6451 = vmul.f32 %v6431, %v6359
        %v6452 = vmul.f32 %v6433, %v6359
        %v6453 = vmul.f32 %v6435, %v6359
        %v6454 = vmul.f32 %v6437, %v6359
        %v6455 = vmul.f32 %v6439, %v6359
        %v6456 = vadd.f32 %v6440, 1e-05
        %v6457 = vadd.f32 %v6441, 1e-05
        %v6458 = vadd.f32 %v6442, 1e-05
        %v6459 = vadd.f32 %v6443, 1e-05
        %v6460 = vadd.f32 %v6444, 1e-05
        %v6461 = vadd.f32 %v6445, 1e-05
        %v6462 = vadd.f32 %v6446, 1e-05
        %v6463 = vadd.f32 %v6447, 1e-05
        %v6464 = vadd.f32 %v6448, 1e-05
        %v6465 = vadd.f32 %v6449, 1e-05
        %v6466 = vadd.f32 %v6450, 1e-05
        %v6467 = vadd.f32 %v6451, 1e-05
        %v6468 = vadd.f32 %v6452, 1e-05
        %v6469 = vadd.f32 %v6453, 1e-05
        %v6470 = vadd.f32 %v6454, 1e-05
        %v6471 = vadd.f32 %v6455, 1e-05
        %v6472 = vrsqrt.pop %v6456
        %v6473 = vrsqrt.pop %v6457
        %v6474 = vrsqrt.pop %v6458
        %v6475 = vrsqrt.pop %v6459
        %v6476 = vrsqrt.pop %v6460
        %v6477 = vrsqrt.pop %v6461
        %v6478 = vrsqrt.pop %v6462
        %v6479 = vrsqrt.pop %v6463
        %v6480 = vrsqrt.pop %v6464
        %v6481 = vrsqrt.pop %v6465
        %v6482 = vrsqrt.pop %v6466
        %v6483 = vrsqrt.pop %v6467
        %v6484 = vrsqrt.pop %v6468
        %v6485 = vrsqrt.pop %v6469
        %v6486 = vrsqrt.pop %v6470
        %v6487 = vrsqrt.pop %v6471
        %v6488 = vmul.f32 %v6376, %v6472
        %v6489 = vmul.f32 %v6377, %v6473
        %v6490 = vmul.f32 %v6378, %v6474
        %v6491 = vmul.f32 %v6379, %v6475
        %v6492 = vmul.f32 %v6380, %v6476
        %v6493 = vmul.f32 %v6381, %v6477
        %v6494 = vmul.f32 %v6382, %v6478
        %v6495 = vmul.f32 %v6383, %v6479
        %v6496 = vmul.f32 %v6384, %v6480
        %v6497 = vmul.f32 %v6385, %v6481
        %v6498 = vmul.f32 %v6386, %v6482
        %v6499 = vmul.f32 %v6387, %v6483
        %v6500 = vmul.f32 %v6388, %v6484
        %v6501 = vmul.f32 %v6389, %v6485
        %v6502 = vmul.f32 %v6390, %v6486
        %v6503 = vmul.f32 %v6391, %v6487
        %v6505 = vlaneseq
        %v6506 = vshrl.u32 %v6505, 7
        %v6507 = vsub.s32 0, %v6506
        %v6508 = vrot.slane %v6325, %v6507
        %v6510 = vmul.f32 %v6488, %v6508
        %v6511 = vmul.f32 %v6489, %v6508
        %v6512 = vmul.f32 %v6490, %v6508
        %v6513 = vmul.f32 %v6491, %v6508
        %v6514 = vmul.f32 %v6492, %v6508
        %v6515 = vmul.f32 %v6493, %v6508
        %v6516 = vmul.f32 %v6494, %v6508
        %v6517 = vmul.f32 %v6495, %v6508
        %v6518 = vmul.f32 %v6496, %v6508
        %v6519 = vmul.f32 %v6497, %v6508
        %v6520 = vmul.f32 %v6498, %v6508
        %v6521 = vmul.f32 %v6499, %v6508
        %v6522 = vmul.f32 %v6500, %v6508
        %v6523 = vmul.f32 %v6501, %v6508
        %v6524 = vmul.f32 %v6502, %v6508
        %v6525 = vmul.f32 %v6503, %v6508
        %v6527 = vlaneseq
        %v6528 = vshrl.u32 %v6527, 7
        %v6529 = vsub.s32 0, %v6528
        %v6530 = vrot.slane %v6326, %v6529
        %v6532 = vadd.f32 %v6510, %v6530
        %v6533 = vadd.f32 %v6511, %v6530
        %v6534 = vadd.f32 %v6512, %v6530
        %v6535 = vadd.f32 %v6513, %v6530
        %v6536 = vadd.f32 %v6514, %v6530
        %v6537 = vadd.f32 %v6515, %v6530
        %v6538 = vadd.f32 %v6516, %v6530
        %v6539 = vadd.f32 %v6517, %v6530
        %v6540 = vadd.f32 %v6518, %v6530
        %v6541 = vadd.f32 %v6519, %v6530
        %v6542 = vadd.f32 %v6520, %v6530
        %v6543 = vadd.f32 %v6521, %v6530
        %v6544 = vadd.f32 %v6522, %v6530
        %v6545 = vadd.f32 %v6523, %v6530
        %v6546 = vadd.f32 %v6524, %v6530
        %v6547 = vadd.f32 %v6525, %v6530
        %v6548 = vmax.f32 %v6532, 0.0
        %v6549 = vmax.f32 %v6533, 0.0
        %v6550 = vmax.f32 %v6534, 0.0
        %v6551 = vmax.f32 %v6535, 0.0
        %v6552 = vmax.f32 %v6536, 0.0
        %v6553 = vmax.f32 %v6537, 0.0
        %v6554 = vmax.f32 %v6538, 0.0
        %v6555 = vmax.f32 %v6539, 0.0
        %v6556 = vmax.f32 %v6540, 0.0
        %v6557 = vmax.f32 %v6541, 0.0
        %v6558 = vmax.f32 %v6542, 0.0
        %v6559 = vmax.f32 %v6543, 0.0
        %v6560 = vmax.f32 %v6544, 0.0
        %v6561 = vmax.f32 %v6545, 0.0
        %v6562 = vmax.f32 %v6546, 0.0
        %v6563 = vmax.f32 %v6547, 0.0
        %v6564 = vpack.c.bf16 %v6549, %v6548
        %v6565 = vpack.c.bf16 %v6551, %v6550
        %v6566 = vpack.c.bf16 %v6553, %v6552
        %v6567 = vpack.c.bf16 %v6555, %v6554
        %v6568 = vpack.c.bf16 %v6557, %v6556
        %v6569 = vpack.c.bf16 %v6559, %v6558
        %v6570 = vpack.c.bf16 %v6561, %v6560
        %v6571 = vpack.c.bf16 %v6563, %v6562
        %v6572 = vld [vmem:[#allocation11] sm:$0xf]
        %v6573 = vld [vmem:[#allocation11 + $0x4] sm:$0xf]
        %v6574 = vld [vmem:[#allocation11 + $0x8] sm:$0xf]
        %v6575 = vld [vmem:[#allocation11 + $0xc] sm:$0xf]
        %v6576 = vld [vmem:[#allocation11 + $0x10] sm:$0xf]
        %v6577 = vld [vmem:[#allocation11 + $0x14] sm:$0xf]
        %v6578 = vld [vmem:[#allocation11 + $0x18] sm:$0xf]
        %v6579 = vld [vmem:[#allocation11 + $0x1c] sm:$0xf]
        %v6580 = vld [vmem:[#allocation11 + $0x20] sm:$0xf]
        %v6581 = vld [vmem:[#allocation11 + $0x24] sm:$0xf]
        %v6582 = vld [vmem:[#allocation11 + $0x28] sm:$0xf]
        %v6583 = vld [vmem:[#allocation11 + $0x2c] sm:$0xf]
        %v6584 = vld [vmem:[#allocation11 + $0x30] sm:$0xf]
        %v6585 = vld [vmem:[#allocation11 + $0x34] sm:$0xf]
        %v6586 = vld [vmem:[#allocation11 + $0x38] sm:$0xf]
        %v6587 = vld [vmem:[#allocation11 + $0x3c] sm:$0xf]
        %v6588 = vld [vmem:[#allocation13] sm:$0x1]
        %v6590 = vlaneseq
        %v6591 = vshrl.u32 %v6590, 7
        %v6592 = vsub.s32 0, %v6591
        %v6593 = vrot.slane %v6588, %v6592
        %v6611 = vunpack.c.l.b16 %v6572
        %v6612 = vunpack.c.l.b16 %v6573
        %v6613 = vunpack.c.l.b16 %v6574
        %v6614 = vunpack.c.l.b16 %v6575
        %v6615 = vunpack.c.l.b16 %v6576
        %v6616 = vunpack.c.l.b16 %v6577
        %v6617 = vunpack.c.l.b16 %v6578
        %v6618 = vunpack.c.l.b16 %v6579
        %v6619 = vunpack.c.l.b16 %v6580
        %v6620 = vunpack.c.l.b16 %v6581
        %v6621 = vunpack.c.l.b16 %v6582
        %v6622 = vunpack.c.l.b16 %v6583
        %v6623 = vunpack.c.l.b16 %v6584
        %v6624 = vunpack.c.l.b16 %v6585
        %v6625 = vunpack.c.l.b16 %v6586
        %v6626 = vunpack.c.l.b16 %v6587
        %v6627 = vpack.c.b16 %v6612, %v6611
        %v6628 = vpack.c.b16 %v6614, %v6613
        %v6629 = vpack.c.b16 %v6616, %v6615
        %v6630 = vpack.c.b16 %v6618, %v6617
        %v6631 = vpack.c.b16 %v6620, %v6619
        %v6632 = vpack.c.b16 %v6622, %v6621
        %v6633 = vpack.c.b16 %v6624, %v6623
        %v6634 = vpack.c.b16 %v6626, %v6625
        %6643 = vmatprep.subr.bf16.mxu0 0
        %6644 = vmatpush1.bf16.msra.mxu0 %v6634
        %6645 = vmatprep.subr.bf16.mxu0 0
        %6646 = vmatpush1.bf16.msra.mxu0 %v6633
        %6647 = vmatprep.subr.bf16.mxu0 0
        %6648 = vmatpush1.bf16.msra.mxu0 %v6632
        %6649 = vmatprep.subr.bf16.mxu0 0
        %6650 = vmatpush1.bf16.msra.mxu0 %v6631
        %6651 = vmatprep.subr.bf16.mxu0 0
        %6652 = vmatpush1.bf16.msra.mxu0 %v6630
        %6653 = vmatprep.subr.bf16.mxu0 0
        %6654 = vmatpush1.bf16.msra.mxu0 %v6629
        %6655 = vmatprep.subr.bf16.mxu0 0
        %6656 = vmatpush1.bf16.msra.mxu0 %v6628
        %6657 = vmatprep.subr.bf16.mxu0 0
        %6658 = vmatpush1.bf16.msra.mxu0 %v6627
        %6659 = vmatprep.subr.bf16.mxu0 0
        %6660 = vmatpush2.bf16.msra.mxu0 0
        %6661 = vmatprep.subr.bf16.mxu0 0
        %6662 = vmatpush2.bf16.msra.mxu0 0
        %6663 = vmatprep.subr.bf16.mxu0 0
        %6664 = vmatpush2.bf16.msra.mxu0 0
        %6665 = vmatprep.subr.bf16.mxu0 0
        %6666 = vmatpush2.bf16.msra.mxu0 0
        %6667 = vmatprep.subr.bf16.mxu0 0
        %6668 = vmatpush2.bf16.msra.mxu0 0
        %6669 = vmatprep.subr.bf16.mxu0 0
        %6670 = vmatpush2.bf16.msra.mxu0 0
        %6671 = vmatprep.subr.bf16.mxu0 0
        %6672 = vmatpush2.bf16.msra.mxu0 0
        %6673 = vmatprep.subr.bf16.mxu0 0
        %6674 = vmatpush2.bf16.msra.mxu0 0
        %6675 = vmatprep.mubr.bf16.mxu0 0
        %6676 = vmatmul.mubr.bf16.gmra.mxu0 %v6564
        %v6677 = vpop.f32.mrf.mxu0
        %v6678 = vadd.f32 %v6593, %v6677
        %v6679 = vpop.f32.mrf.mxu0
        %v6680 = vpop.f32.mrf.mxu0
        %v6681 = vadd.f32 %v6593, %v6680
        %v6682 = vpop.f32.mrf.mxu0
        %6683 = vmatprep.mubr.bf16.mxu0 0
        %6684 = vmatmul.mubr.bf16.gmra.mxu0 %v6565
        %v6685 = vpop.f32.mrf.mxu0
        %v6686 = vadd.f32 %v6593, %v6685
        %v6687 = vpop.f32.mrf.mxu0
        %v6688 = vpop.f32.mrf.mxu0
        %v6689 = vadd.f32 %v6593, %v6688
        %v6690 = vpop.f32.mrf.mxu0
        %6691 = vmatprep.mubr.bf16.mxu0 0
        %6692 = vmatmul.mubr.bf16.gmra.mxu0 %v6566
        %v6693 = vpop.f32.mrf.mxu0
        %v6694 = vadd.f32 %v6593, %v6693
        %v6695 = vpop.f32.mrf.mxu0
        %v6696 = vpop.f32.mrf.mxu0
        %v6697 = vadd.f32 %v6593, %v6696
        %v6698 = vpop.f32.mrf.mxu0
        %6699 = vmatprep.mubr.bf16.mxu0 0
        %6700 = vmatmul.mubr.bf16.gmra.mxu0 %v6567
        %v6701 = vpop.f32.mrf.mxu0
        %v6702 = vadd.f32 %v6593, %v6701
        %v6703 = vpop.f32.mrf.mxu0
        %v6704 = vpop.f32.mrf.mxu0
        %v6705 = vadd.f32 %v6593, %v6704
        %v6706 = vpop.f32.mrf.mxu0
        %6707 = vmatprep.mubr.bf16.mxu0 0
        %6708 = vmatmul.mubr.bf16.gmra.mxu0 %v6568
        %v6709 = vpop.f32.mrf.mxu0
        %v6710 = vadd.f32 %v6593, %v6709
        %v6711 = vpop.f32.mrf.mxu0
        %v6712 = vpop.f32.mrf.mxu0
        %v6713 = vadd.f32 %v6593, %v6712
        %v6714 = vpop.f32.mrf.mxu0
        %6715 = vmatprep.mubr.bf16.mxu0 0
        %6716 = vmatmul.mubr.bf16.gmra.mxu0 %v6569
        %v6717 = vpop.f32.mrf.mxu0
        %v6718 = vadd.f32 %v6593, %v6717
        %v6719 = vpop.f32.mrf.mxu0
        %v6720 = vpop.f32.mrf.mxu0
        %v6721 = vadd.f32 %v6593, %v6720
        %v6722 = vpop.f32.mrf.mxu0
        %6723 = vmatprep.mubr.bf16.mxu0 0
        %6724 = vmatmul.mubr.bf16.gmra.mxu0 %v6570
        %v6725 = vpop.f32.mrf.mxu0
        %v6726 = vadd.f32 %v6593, %v6725
        %v6727 = vpop.f32.mrf.mxu0
        %v6728 = vpop.f32.mrf.mxu0
        %v6729 = vadd.f32 %v6593, %v6728
        %v6730 = vpop.f32.mrf.mxu0
        %6731 = vmatprep.mubr.bf16.mxu0 0
        %6732 = vmatmul.mubr.bf16.gmra.mxu0 %v6571
        %v6733 = vpop.f32.mrf.mxu0
        %v6734 = vadd.f32 %v6593, %v6733
        %v6735 = vpop.f32.mrf.mxu0
        %v6736 = vpop.f32.mrf.mxu0
        %v6737 = vadd.f32 %v6593, %v6736
        %v6738 = vpop.f32.mrf.mxu0
        %6739 = vdwg.mxu0
        %v6740 = vld [vmem:[#allocation14] sm:$0x1]
        %v6741 = vld [vmem:[#allocation16] sm:$0x1]
        %6742 = vadd.xlane.f32.xlu0 %v6678
        %v6743 = vpop.xlane.xlu0 %6742
        %6744 = vadd.xlane.f32.xlu0 %v6681
        %v6745 = vpop.xlane.xlu0 %6744
        %6746 = vadd.xlane.f32.xlu0 %v6686
        %v6747 = vpop.xlane.xlu0 %6746
        %6748 = vadd.xlane.f32.xlu0 %v6689
        %v6749 = vpop.xlane.xlu0 %6748
        %6750 = vadd.xlane.f32.xlu0 %v6694
        %v6751 = vpop.xlane.xlu0 %6750
        %6752 = vadd.xlane.f32.xlu0 %v6697
        %v6753 = vpop.xlane.xlu0 %6752
        %6754 = vadd.xlane.f32.xlu0 %v6702
        %v6755 = vpop.xlane.xlu0 %6754
        %6756 = vadd.xlane.f32.xlu0 %v6705
        %v6757 = vpop.xlane.xlu0 %6756
        %6758 = vadd.xlane.f32.xlu0 %v6710
        %v6759 = vpop.xlane.xlu0 %6758
        %6760 = vadd.xlane.f32.xlu0 %v6713
        %v6761 = vpop.xlane.xlu0 %6760
        %6762 = vadd.xlane.f32.xlu0 %v6718
        %v6763 = vpop.xlane.xlu0 %6762
        %6764 = vadd.xlane.f32.xlu0 %v6721
        %v6765 = vpop.xlane.xlu0 %6764
        %6766 = vadd.xlane.f32.xlu0 %v6726
        %v6767 = vpop.xlane.xlu0 %6766
        %6768 = vadd.xlane.f32.xlu0 %v6729
        %v6769 = vpop.xlane.xlu0 %6768
        %6770 = vadd.xlane.f32.xlu0 %v6734
        %v6771 = vpop.xlane.xlu0 %6770
        %6772 = vadd.xlane.f32.xlu0 %v6737
        %v6773 = vpop.xlane.xlu0 %6772
        %v6774 = vmul.f32 %v6743, %v6359
        %v6775 = vmul.f32 %v6745, %v6359
        %v6776 = vmul.f32 %v6747, %v6359
        %v6777 = vmul.f32 %v6749, %v6359
        %v6778 = vmul.f32 %v6751, %v6359
        %v6779 = vmul.f32 %v6753, %v6359
        %v6780 = vmul.f32 %v6755, %v6359
        %v6781 = vmul.f32 %v6757, %v6359
        %v6782 = vmul.f32 %v6759, %v6359
        %v6783 = vmul.f32 %v6761, %v6359
        %v6784 = vmul.f32 %v6763, %v6359
        %v6785 = vmul.f32 %v6765, %v6359
        %v6786 = vmul.f32 %v6767, %v6359
        %v6787 = vmul.f32 %v6769, %v6359
        %v6788 = vmul.f32 %v6771, %v6359
        %v6789 = vmul.f32 %v6773, %v6359
        %v6790 = vsub.f32 %v6678, %v6774
        %v6791 = vsub.f32 %v6681, %v6775
        %v6792 = vsub.f32 %v6686, %v6776
        %v6793 = vsub.f32 %v6689, %v6777
        %v6794 = vsub.f32 %v6694, %v6778
        %v6795 = vsub.f32 %v6697, %v6779
        %v6796 = vsub.f32 %v6702, %v6780
        %v6797 = vsub.f32 %v6705, %v6781
        %v6798 = vsub.f32 %v6710, %v6782
        %v6799 = vsub.f32 %v6713, %v6783
        %v6800 = vsub.f32 %v6718, %v6784
        %v6801 = vsub.f32 %v6721, %v6785
        %v6802 = vsub.f32 %v6726, %v6786
        %v6803 = vsub.f32 %v6729, %v6787
        %v6804 = vsub.f32 %v6734, %v6788
        %v6805 = vsub.f32 %v6737, %v6789
        %v6806 = vmul.f32 %v6790, %v6790
        %v6807 = vmul.f32 %v6791, %v6791
        %v6808 = vmul.f32 %v6792, %v6792
        %v6809 = vmul.f32 %v6793, %v6793
        %v6810 = vmul.f32 %v6794, %v6794
        %v6811 = vmul.f32 %v6795, %v6795
        %v6812 = vmul.f32 %v6796, %v6796
        %v6813 = vmul.f32 %v6797, %v6797
        %v6814 = vmul.f32 %v6798, %v6798
        %v6815 = vmul.f32 %v6799, %v6799
        %v6816 = vmul.f32 %v6800, %v6800
        %v6817 = vmul.f32 %v6801, %v6801
        %v6818 = vmul.f32 %v6802, %v6802
        %v6819 = vmul.f32 %v6803, %v6803
        %v6820 = vmul.f32 %v6804, %v6804
        %v6821 = vmul.f32 %v6805, %v6805
        %6822 = vadd.xlane.f32.xlu0 %v6806
        %v6823 = vpop.xlane.xlu0 %6822
        %6824 = vadd.xlane.f32.xlu0 %v6807
        %v6825 = vpop.xlane.xlu0 %6824
        %6826 = vadd.xlane.f32.xlu0 %v6808
        %v6827 = vpop.xlane.xlu0 %6826
        %6828 = vadd.xlane.f32.xlu0 %v6809
        %v6829 = vpop.xlane.xlu0 %6828
        %6830 = vadd.xlane.f32.xlu0 %v6810
        %v6831 = vpop.xlane.xlu0 %6830
        %6832 = vadd.xlane.f32.xlu0 %v6811
        %v6833 = vpop.xlane.xlu0 %6832
        %6834 = vadd.xlane.f32.xlu0 %v6812
        %v6835 = vpop.xlane.xlu0 %6834
        %6836 = vadd.xlane.f32.xlu0 %v6813
        %v6837 = vpop.xlane.xlu0 %6836
        %6838 = vadd.xlane.f32.xlu0 %v6814
        %v6839 = vpop.xlane.xlu0 %6838
        %6840 = vadd.xlane.f32.xlu0 %v6815
        %v6841 = vpop.xlane.xlu0 %6840
        %6842 = vadd.xlane.f32.xlu0 %v6816
        %v6843 = vpop.xlane.xlu0 %6842
        %6844 = vadd.xlane.f32.xlu0 %v6817
        %v6845 = vpop.xlane.xlu0 %6844
        %6846 = vadd.xlane.f32.xlu0 %v6818
        %v6847 = vpop.xlane.xlu0 %6846
        %6848 = vadd.xlane.f32.xlu0 %v6819
        %v6849 = vpop.xlane.xlu0 %6848
        %6850 = vadd.xlane.f32.xlu0 %v6820
        %v6851 = vpop.xlane.xlu0 %6850
        %6852 = vadd.xlane.f32.xlu0 %v6821
        %v6853 = vpop.xlane.xlu0 %6852
        %v6854 = vmul.f32 %v6823, %v6359
        %v6855 = vmul.f32 %v6825, %v6359
        %v6856 = vmul.f32 %v6827, %v6359
        %v6857 = vmul.f32 %v6829, %v6359
        %v6858 = vmul.f32 %v6831, %v6359
        %v6859 = vmul.f32 %v6833, %v6359
        %v6860 = vmul.f32 %v6835, %v6359
        %v6861 = vmul.f32 %v6837, %v6359
        %v6862 = vmul.f32 %v6839, %v6359
        %v6863 = vmul.f32 %v6841, %v6359
        %v6864 = vmul.f32 %v6843, %v6359
        %v6865 = vmul.f32 %v6845, %v6359
        %v6866 = vmul.f32 %v6847, %v6359
        %v6867 = vmul.f32 %v6849, %v6359
        %v6868 = vmul.f32 %v6851, %v6359
        %v6869 = vmul.f32 %v6853, %v6359
        %v6870 = vadd.f32 %v6854, 1e-05
        %v6871 = vadd.f32 %v6855, 1e-05
        %v6872 = vadd.f32 %v6856, 1e-05
        %v6873 = vadd.f32 %v6857, 1e-05
        %v6874 = vadd.f32 %v6858, 1e-05
        %v6875 = vadd.f32 %v6859, 1e-05
        %v6876 = vadd.f32 %v6860, 1e-05
        %v6877 = vadd.f32 %v6861, 1e-05
        %v6878 = vadd.f32 %v6862, 1e-05
        %v6879 = vadd.f32 %v6863, 1e-05
        %v6880 = vadd.f32 %v6864, 1e-05
        %v6881 = vadd.f32 %v6865, 1e-05
        %v6882 = vadd.f32 %v6866, 1e-05
        %v6883 = vadd.f32 %v6867, 1e-05
        %v6884 = vadd.f32 %v6868, 1e-05
        %v6885 = vadd.f32 %v6869, 1e-05
        %v6886 = vrsqrt.pop %v6870
        %v6887 = vrsqrt.pop %v6871
        %v6888 = vrsqrt.pop %v6872
        %v6889 = vrsqrt.pop %v6873
        %v6890 = vrsqrt.pop %v6874
        %v6891 = vrsqrt.pop %v6875
        %v6892 = vrsqrt.pop %v6876
        %v6893 = vrsqrt.pop %v6877
        %v6894 = vrsqrt.pop %v6878
        %v6895 = vrsqrt.pop %v6879
        %v6896 = vrsqrt.pop %v6880
        %v6897 = vrsqrt.pop %v6881
        %v6898 = vrsqrt.pop %v6882
        %v6899 = vrsqrt.pop %v6883
        %v6900 = vrsqrt.pop %v6884
        %v6901 = vrsqrt.pop %v6885
        %v6902 = vmul.f32 %v6790, %v6886
        %v6903 = vmul.f32 %v6791, %v6887
        %v6904 = vmul.f32 %v6792, %v6888
        %v6905 = vmul.f32 %v6793, %v6889
        %v6906 = vmul.f32 %v6794, %v6890
        %v6907 = vmul.f32 %v6795, %v6891
        %v6908 = vmul.f32 %v6796, %v6892
        %v6909 = vmul.f32 %v6797, %v6893
        %v6910 = vmul.f32 %v6798, %v6894
        %v6911 = vmul.f32 %v6799, %v6895
        %v6912 = vmul.f32 %v6800, %v6896
        %v6913 = vmul.f32 %v6801, %v6897
        %v6914 = vmul.f32 %v6802, %v6898
        %v6915 = vmul.f32 %v6803, %v6899
        %v6916 = vmul.f32 %v6804, %v6900
        %v6917 = vmul.f32 %v6805, %v6901
        %v6919 = vlaneseq
        %v6920 = vshrl.u32 %v6919, 7
        %v6921 = vsub.s32 0, %v6920
        %v6922 = vrot.slane %v6740, %v6921
        %v6924 = vmul.f32 %v6902, %v6922
        %v6925 = vmul.f32 %v6903, %v6922
        %v6926 = vmul.f32 %v6904, %v6922
        %v6927 = vmul.f32 %v6905, %v6922
        %v6928 = vmul.f32 %v6906, %v6922
        %v6929 = vmul.f32 %v6907, %v6922
        %v6930 = vmul.f32 %v6908, %v6922
        %v6931 = vmul.f32 %v6909, %v6922
        %v6932 = vmul.f32 %v6910, %v6922
        %v6933 = vmul.f32 %v6911, %v6922
        %v6934 = vmul.f32 %v6912, %v6922
        %v6935 = vmul.f32 %v6913, %v6922
        %v6936 = vmul.f32 %v6914, %v6922
        %v6937 = vmul.f32 %v6915, %v6922
        %v6938 = vmul.f32 %v6916, %v6922
        %v6939 = vmul.f32 %v6917, %v6922
        %v6941 = vlaneseq
        %v6942 = vshrl.u32 %v6941, 7
        %v6943 = vsub.s32 0, %v6942
        %v6944 = vrot.slane %v6741, %v6943
        %v6946 = vadd.f32 %v6924, %v6944
        %v6947 = vadd.f32 %v6925, %v6944
        %v6948 = vadd.f32 %v6926, %v6944
        %v6949 = vadd.f32 %v6927, %v6944
        %v6950 = vadd.f32 %v6928, %v6944
        %v6951 = vadd.f32 %v6929, %v6944
        %v6952 = vadd.f32 %v6930, %v6944
        %v6953 = vadd.f32 %v6931, %v6944
        %v6954 = vadd.f32 %v6932, %v6944
        %v6955 = vadd.f32 %v6933, %v6944
        %v6956 = vadd.f32 %v6934, %v6944
        %v6957 = vadd.f32 %v6935, %v6944
        %v6958 = vadd.f32 %v6936, %v6944
        %v6959 = vadd.f32 %v6937, %v6944
        %v6960 = vadd.f32 %v6938, %v6944
        %v6961 = vadd.f32 %v6939, %v6944
        %v6962 = vmax.f32 %v6946, 0.0
        %v6963 = vmax.f32 %v6947, 0.0
        %v6964 = vmax.f32 %v6948, 0.0
        %v6965 = vmax.f32 %v6949, 0.0
        %v6966 = vmax.f32 %v6950, 0.0
        %v6967 = vmax.f32 %v6951, 0.0
        %v6968 = vmax.f32 %v6952, 0.0
        %v6969 = vmax.f32 %v6953, 0.0
        %v6970 = vmax.f32 %v6954, 0.0
        %v6971 = vmax.f32 %v6955, 0.0
        %v6972 = vmax.f32 %v6956, 0.0
        %v6973 = vmax.f32 %v6957, 0.0
        %v6974 = vmax.f32 %v6958, 0.0
        %v6975 = vmax.f32 %v6959, 0.0
        %v6976 = vmax.f32 %v6960, 0.0
        %v6977 = vmax.f32 %v6961, 0.0
        %v6978 = vpack.c.bf16 %v6963, %v6962
        %v6979 = vpack.c.bf16 %v6965, %v6964
        %v6980 = vpack.c.bf16 %v6967, %v6966
        %v6981 = vpack.c.bf16 %v6969, %v6968
        %v6982 = vpack.c.bf16 %v6971, %v6970
        %v6983 = vpack.c.bf16 %v6973, %v6972
        %v6984 = vpack.c.bf16 %v6975, %v6974
        %v6985 = vpack.c.bf16 %v6977, %v6976
        %v6986 = vld [vmem:[#allocation17] sm:$0xf]
        %v6987 = vld [vmem:[#allocation17 + $0x4] sm:$0xf]
        %v6988 = vld [vmem:[#allocation17 + $0x8] sm:$0xf]
        %v6989 = vld [vmem:[#allocation17 + $0xc] sm:$0xf]
        %v6990 = vld [vmem:[#allocation17 + $0x10] sm:$0xf]
        %v6991 = vld [vmem:[#allocation17 + $0x14] sm:$0xf]
        %v6992 = vld [vmem:[#allocation17 + $0x18] sm:$0xf]
        %v6993 = vld [vmem:[#allocation17 + $0x1c] sm:$0xf]
        %v6994 = vld [vmem:[#allocation17 + $0x20] sm:$0xf]
        %v6995 = vld [vmem:[#allocation17 + $0x24] sm:$0xf]
        %v6996 = vld [vmem:[#allocation17 + $0x28] sm:$0xf]
        %v6997 = vld [vmem:[#allocation17 + $0x2c] sm:$0xf]
        %v6998 = vld [vmem:[#allocation17 + $0x30] sm:$0xf]
        %v6999 = vld [vmem:[#allocation17 + $0x34] sm:$0xf]
        %v7000 = vld [vmem:[#allocation17 + $0x38] sm:$0xf]
        %v7001 = vld [vmem:[#allocation17 + $0x3c] sm:$0xf]
        %v7002 = vld [vmem:[#allocation19] sm:$0x1]
        %v7004 = vlaneseq
        %v7005 = vshrl.u32 %v7004, 7
        %v7006 = vsub.s32 0, %v7005
        %v7007 = vrot.slane %v7002, %v7006
        %v7025 = vunpack.c.l.b16 %v6986
        %v7026 = vunpack.c.l.b16 %v6987
        %v7027 = vunpack.c.l.b16 %v6988
        %v7028 = vunpack.c.l.b16 %v6989
        %v7029 = vunpack.c.l.b16 %v6990
        %v7030 = vunpack.c.l.b16 %v6991
        %v7031 = vunpack.c.l.b16 %v6992
        %v7032 = vunpack.c.l.b16 %v6993
        %v7033 = vunpack.c.l.b16 %v6994
        %v7034 = vunpack.c.l.b16 %v6995
        %v7035 = vunpack.c.l.b16 %v6996
        %v7036 = vunpack.c.l.b16 %v6997
        %v7037 = vunpack.c.l.b16 %v6998
        %v7038 = vunpack.c.l.b16 %v6999
        %v7039 = vunpack.c.l.b16 %v7000
        %v7040 = vunpack.c.l.b16 %v7001
        %v7041 = vpack.c.b16 %v7026, %v7025
        %v7042 = vpack.c.b16 %v7028, %v7027
        %v7043 = vpack.c.b16 %v7030, %v7029
        %v7044 = vpack.c.b16 %v7032, %v7031
        %v7045 = vpack.c.b16 %v7034, %v7033
        %v7046 = vpack.c.b16 %v7036, %v7035
        %v7047 = vpack.c.b16 %v7038, %v7037
        %v7048 = vpack.c.b16 %v7040, %v7039
        %7057 = vmatprep.subr.bf16.mxu0 0
        %7058 = vmatpush1.bf16.msra.mxu0 %v7048
        %7059 = vmatprep.subr.bf16.mxu0 0
        %7060 = vmatpush1.bf16.msra.mxu0 %v7047
        %7061 = vmatprep.subr.bf16.mxu0 0
        %7062 = vmatpush1.bf16.msra.mxu0 %v7046
        %7063 = vmatprep.subr.bf16.mxu0 0
        %7064 = vmatpush1.bf16.msra.mxu0 %v7045
        %7065 = vmatprep.subr.bf16.mxu0 0
        %7066 = vmatpush1.bf16.msra.mxu0 %v7044
        %7067 = vmatprep.subr.bf16.mxu0 0
        %7068 = vmatpush1.bf16.msra.mxu0 %v7043
        %7069 = vmatprep.subr.bf16.mxu0 0
        %7070 = vmatpush1.bf16.msra.mxu0 %v7042
        %7071 = vmatprep.subr.bf16.mxu0 0
        %7072 = vmatpush1.bf16.msra.mxu0 %v7041
        %7073 = vmatprep.subr.bf16.mxu0 0
        %7074 = vmatpush2.bf16.msra.mxu0 0
        %7075 = vmatprep.subr.bf16.mxu0 0
        %7076 = vmatpush2.bf16.msra.mxu0 0
        %7077 = vmatprep.subr.bf16.mxu0 0
        %7078 = vmatpush2.bf16.msra.mxu0 0
        %7079 = vmatprep.subr.bf16.mxu0 0
        %7080 = vmatpush2.bf16.msra.mxu0 0
        %7081 = vmatprep.subr.bf16.mxu0 0
        %7082 = vmatpush2.bf16.msra.mxu0 0
        %7083 = vmatprep.subr.bf16.mxu0 0
        %7084 = vmatpush2.bf16.msra.mxu0 0
        %7085 = vmatprep.subr.bf16.mxu0 0
        %7086 = vmatpush2.bf16.msra.mxu0 0
        %7087 = vmatprep.subr.bf16.mxu0 0
        %7088 = vmatpush2.bf16.msra.mxu0 0
        %7089 = vmatprep.mubr.bf16.mxu0 0
        %7090 = vmatmul.mubr.bf16.gmra.mxu0 %v6978
        %v7091 = vpop.f32.mrf.mxu0
        %v7092 = vadd.f32 %v7007, %v7091
        %v7093 = vpop.f32.mrf.mxu0
        %v7094 = vpop.f32.mrf.mxu0
        %v7095 = vadd.f32 %v7007, %v7094
        %v7096 = vpop.f32.mrf.mxu0
        %7097 = vmatprep.mubr.bf16.mxu0 0
        %7098 = vmatmul.mubr.bf16.gmra.mxu0 %v6979
        %v7099 = vpop.f32.mrf.mxu0
        %v7100 = vadd.f32 %v7007, %v7099
        %v7101 = vpop.f32.mrf.mxu0
        %v7102 = vpop.f32.mrf.mxu0
        %v7103 = vadd.f32 %v7007, %v7102
        %v7104 = vpop.f32.mrf.mxu0
        %7105 = vmatprep.mubr.bf16.mxu0 0
        %7106 = vmatmul.mubr.bf16.gmra.mxu0 %v6980
        %v7107 = vpop.f32.mrf.mxu0
        %v7108 = vadd.f32 %v7007, %v7107
        %v7109 = vpop.f32.mrf.mxu0
        %v7110 = vpop.f32.mrf.mxu0
        %v7111 = vadd.f32 %v7007, %v7110
        %v7112 = vpop.f32.mrf.mxu0
        %7113 = vmatprep.mubr.bf16.mxu0 0
        %7114 = vmatmul.mubr.bf16.gmra.mxu0 %v6981
        %v7115 = vpop.f32.mrf.mxu0
        %v7116 = vadd.f32 %v7007, %v7115
        %v7117 = vpop.f32.mrf.mxu0
        %v7118 = vpop.f32.mrf.mxu0
        %v7119 = vadd.f32 %v7007, %v7118
        %v7120 = vpop.f32.mrf.mxu0
        %7121 = vmatprep.mubr.bf16.mxu0 0
        %7122 = vmatmul.mubr.bf16.gmra.mxu0 %v6982
        %v7123 = vpop.f32.mrf.mxu0
        %v7124 = vadd.f32 %v7007, %v7123
        %v7125 = vpop.f32.mrf.mxu0
        %v7126 = vpop.f32.mrf.mxu0
        %v7127 = vadd.f32 %v7007, %v7126
        %v7128 = vpop.f32.mrf.mxu0
        %7129 = vmatprep.mubr.bf16.mxu0 0
        %7130 = vmatmul.mubr.bf16.gmra.mxu0 %v6983
        %v7131 = vpop.f32.mrf.mxu0
        %v7132 = vadd.f32 %v7007, %v7131
        %v7133 = vpop.f32.mrf.mxu0
        %v7134 = vpop.f32.mrf.mxu0
        %v7135 = vadd.f32 %v7007, %v7134
        %v7136 = vpop.f32.mrf.mxu0
        %7137 = vmatprep.mubr.bf16.mxu0 0
        %7138 = vmatmul.mubr.bf16.gmra.mxu0 %v6984
        %v7139 = vpop.f32.mrf.mxu0
        %v7140 = vadd.f32 %v7007, %v7139
        %v7141 = vpop.f32.mrf.mxu0
        %v7142 = vpop.f32.mrf.mxu0
        %v7143 = vadd.f32 %v7007, %v7142
        %v7144 = vpop.f32.mrf.mxu0
        %7145 = vmatprep.mubr.bf16.mxu0 0
        %7146 = vmatmul.mubr.bf16.gmra.mxu0 %v6985
        %v7147 = vpop.f32.mrf.mxu0
        %v7148 = vadd.f32 %v7007, %v7147
        %v7149 = vpop.f32.mrf.mxu0
        %v7150 = vpop.f32.mrf.mxu0
        %v7151 = vadd.f32 %v7007, %v7150
        %v7152 = vpop.f32.mrf.mxu0
        %7153 = vdwg.mxu0
        %7154 = vst [vmem:[%s536] sm:$0xff] %v7092
        %7155 = vst [vmem:[%s536 + $0x8] sm:$0xff] %v7095
        %7156 = vst [vmem:[%s536 + $0x10] sm:$0xff] %v7100
        %7157 = vst [vmem:[%s536 + $0x18] sm:$0xff] %v7103
        %7158 = vst [vmem:[%s536 + $0x20] sm:$0xff] %v7108
        %7159 = vst [vmem:[%s536 + $0x28] sm:$0xff] %v7111
        %7160 = vst [vmem:[%s536 + $0x30] sm:$0xff] %v7116
        %7161 = vst [vmem:[%s536 + $0x38] sm:$0xff] %v7119
        %7162 = vst [vmem:[%s536 + $0x40] sm:$0xff] %v7124
        %7163 = vst [vmem:[%s536 + $0x48] sm:$0xff] %v7127
        %7164 = vst [vmem:[%s536 + $0x50] sm:$0xff] %v7132
        %7165 = vst [vmem:[%s536 + $0x58] sm:$0xff] %v7135
        %7166 = vst [vmem:[%s536 + $0x60] sm:$0xff] %v7140
        %7167 = vst [vmem:[%s536 + $0x68] sm:$0xff] %v7143
        %7168 = vst [vmem:[%s536 + $0x70] sm:$0xff] %v7148
        %7169 = vst [vmem:[%s536 + $0x78] sm:$0xff] %v7151
        %s7170 = sand.u32 %s277, 1
        %s7171 = scalar_lea.sflag [#allocation4], %s7170
        %s7172 = sand.u32 %s277, 1
        %s7173 = smul.addr %s7172, 128
        %s7174 = scalar_lea.vmem [#allocation20], %s7173
        // Predicated region
        $region109: #{tpu_custom_call.1} parent=63 // pred_check
          %p7175 = pneg %p287
        $region110: #{tpu_custom_call.1} parent=63 // pred_check_branch
          %7177 = sbr.rel (%p7175) target = $region112
        $region111: #{tpu_custom_call.1} parent=63 // pred_region
          %s7178 = smul.u32 16, %s33
          %s7180 = ssub.s32 2048, 2048
          %7181 = vsyncadd %s7171, %s7180
          %s7182 = smul.addr %s7178, 128
          %s7183 = scalar_lea.hbm %s11, %s7182
          %s7184 = sshll.u32 %s7174, 4
          %s7185 = int_to_ptr.vmem [resolvable:$true] %s7184
          %7190 = dma.vmem_to_hbm [thread:$0]  %s7185, 2048, %s7183, %s7171, 128, 128, 8
        $region112: #{tpu_custom_call.1} parent=63 // pred_fallthru
          _
      $region64: #{tpu_custom_call.1} parent=5 // pred_fallthru
        _
      %p7191 = scmp.le.s32.totalorder 2, %s28
      // Predicated region
      $region113: #{tpu_custom_call.1} parent=5 // pred_check
        %p7192 = pneg %p7191
      $region114: #{tpu_custom_call.1} parent=5 // pred_check_branch
        %7194 = sbr.rel (%p7192) target = $region116
      $region115: #{tpu_custom_call.1} parent=5 // pred_region
        %s7195 = ssub.s32 %s28, 2
        // Predicated region
        $region117: #{tpu_custom_call.1} parent=115 // pred_check
          %p7196 = pneg %p293
        $region118: #{tpu_custom_call.1} parent=115 // pred_check_branch
          %7198 = sbr.rel (%p7196) target = $region120
        $region119: #{tpu_custom_call.1} parent=115 // pred_region
          %s7199 = sand.u32 %s278, 1
          %s7200 = scalar_lea.sflag [#allocation4], %s7199
          %s7201 = sand.u32 %s278, 1
          %s7202 = smul.addr %s7201, 128
          %s7203 = scalar_lea.vmem [#allocation20], %s7202
          %7204 = dma.done %s7200, 2048
        $region120: #{tpu_custom_call.1} parent=115 // pred_fallthru
          _
      $region116: #{tpu_custom_call.1} parent=5 // pred_fallthru
        _
    $region6: #{tpu_custom_call.1} parent=1 // loop_footer
      %s32 = sadd.s32 1, %s28
    $region7: #{tpu_custom_call.1} parent=1 // loop_footer_branch
      %27 = sbr.rel target = $region3
    $region8: #{tpu_custom_call.1} parent=1 // loop_exit
      _
    %7205 = vsyncpa [#allocation3], 1
    %s7206 = scalar_lea.sflag [#allocation3], 1
    %7207 = vsyncpa %s7206, 1
    %7208 = vsyncpa [#allocation6], 1
    %7209 = vsyncpa [#allocation9], 1
    %7210 = vsyncpa [#allocation12], 1
    %7211 = vsyncpa [#allocation15], 1
    %7212 = vsyncpa [#allocation18], 1
    %7213 = vsyncpa [#allocation4], 1
    %s7214 = scalar_lea.sflag [#allocation4], 1
    %7215 = vsyncpa %s7214, 1

</llo_original>
